<compile_context>
chip_gen: v7x
topology: tpu7x:2x2x1
jax: 0.10.0
libtpu: 0.0.40
codegen_flags: <defaults>
</compile_context>

<pallas_src>
import functools

import jax
import jax.numpy as jnp
from jax import lax
from jax.experimental import pallas as pl
from jax.experimental.pallas import tpu as pltpu


# ---------------------------------------------------------------------------
# helpers (all evaluated at trace time with static Python ints)
# ---------------------------------------------------------------------------
def _round_up(x, m):
    return (x + m - 1) // m * m


def _largest_divisor_leq(n, cap):
    for d in range(min(n, cap), 0, -1):
        if n % d == 0:
            return d
    return 1


def _choose_time_block(t, cap=32):
    """Pick a time-block size; pad T only when it has no decent divisor."""
    d = _largest_divisor_leq(t, cap)
    if d >= min(t, 8):                       # good divisor -> no padding
        return d, t
    t_blk = min(cap, _round_up(t, 8))        # divisor cliff (e.g. prime T):
    return t_blk, _round_up(t, t_blk)        # pad + mask inside the kernel


def _num_tensorcores():
    """1 on v5e/v6e (single TC); 2 on v7x megacore. Conservative default 1."""
    try:
        kind = jax.devices()[0].device_kind.lower()
        if "v7" in kind:
            return 2
    except Exception:
        pass
    return 1


def _vmem_capacity_bytes():
    """Physical VMEM per TensorCore; conservative 64 MiB fallback (v7x)."""
    try:
        cap = getattr(pltpu.get_tpu_info(), "vmem_capacity_bytes", None)
        if cap:
            return int(cap)
    except Exception:
        pass
    return 64 * 1024 * 1024


def _choose_unroll(t_blk, b_blk, h_pad):
    """Scale unroll with per-step vreg footprint (stay under ~48 of 64 vregs)."""
    per_step_bytes = (4 * b_blk * h_pad * 4      # f32 gates
                      + 2 * b_blk * h_pad * 4    # c_new / tanh(c_new)
                      + b_blk * h_pad * 2)       # bf16 h
    per_step_vregs = max(1, per_step_bytes // 4096)
    u = max(1, min(8, 48 // per_step_vregs))
    return True if u >= t_blk else u


def _lstm_vmem_limit(t_blk, b_blk, e_pad, h_pad, collect_outputs):
    bf16 = 2
    x_tile = t_blk * b_blk * e_pad * bf16
    y_tile = (t_blk if collect_outputs else 1) * b_blk * h_pad * bf16
    weights = (e_pad + h_pad) * 4 * h_pad * bf16 + 4 * h_pad * 4
    finals = 2 * b_blk * h_pad * 4
    state = b_blk * h_pad * (bf16 + 4)
    # Pallas double-buffers every input/output block by default -- including
    # the constant weight blocks -- so count them twice (review item), then
    # add headroom and clamp generation-aware.
    est = 2 * (x_tile + y_tile + weights + finals) + state
    cap = _vmem_capacity_bytes()
    return int(min(max(2 * est, 32 * 1024 * 1024), int(cap * 0.85)))


# ---------------------------------------------------------------------------
# General path: one LSTM layer, (batch, time)-blocked grid
# ---------------------------------------------------------------------------
def lstm_layer_kernel(x_ref, w_ih_ref, w_hh_ref, b_ref,
                      y_ref, hN_ref, cN_ref, h_sc, c_sc,
                      *, unroll, t_real, mask_tail, collect_outputs):
    """
    x_ref:    (t_blk, b_blk, In_pad)  bf16 time-major input tile
    w_ih_ref: (In_pad, 4*H_pad)       bf16 (gate-padded, transposed)
    w_hh_ref: (H_pad, 4*H_pad)        bf16
    b_ref:    (1, 4*H_pad)            f32 combined bias (b_ih + b_hh)
    y_ref:    (t_blk|1, b_blk, H_pad) bf16 hidden states (degenerate for top)
    hN_ref:   (b_blk, H_pad)          f32 final hidden state
    cN_ref:   (b_blk, H_pad)          f32 final cell state
    h_sc:     (b_blk, H_pad)          bf16 persistent recurrent hidden
    c_sc:     (b_blk, H_pad)          f32  persistent recurrent cell
    """
    t_blk = x_ref.shape[0]
    h_pad = c_sc.shape[-1]
    tb = pl.program_id(1)

    @pl.when(tb == 0)
    def _():
        h_sc[...] = jnp.zeros_like(h_sc)
        c_sc[...] = jnp.zeros_like(c_sc)

    w_ih = w_ih_ref[...]
    w_hh = w_hh_ref[...]
    bias = b_ref[...]

    def project(ti):
        # (b_blk, In_pad) @ (In_pad, 4*H_pad) -> f32
        return jnp.dot(x_ref[ti], w_ih,
                       preferred_element_type=jnp.float32) + bias

    gx0 = project(0)

    def step(t, gx_t):
        # Prefetch the NEXT step's input projection: it has no dependency on
        # h/c, so the MXU can run it while the EUP/VPU gate chain below
        # executes (software-pipelined projection, review item).
        gx_next = project(jnp.minimum(t + 1, t_blk - 1))

        h = h_sc[...]                       # bf16
        c = c_sc[...]                       # f32
        gates = gx_t + jnp.dot(h, w_hh, preferred_element_type=jnp.float32)
        # PyTorch gate order: i, f, g, o (each slice is a full 128-lane tile)
        i_g = jax.nn.sigmoid(gates[:, 0 * h_pad:1 * h_pad])
        f_g = jax.nn.sigmoid(gates[:, 1 * h_pad:2 * h_pad])
        g_g = jnp.tanh(gates[:, 2 * h_pad:3 * h_pad])
        o_g = jax.nn.sigmoid(gates[:, 3 * h_pad:4 * h_pad])
        c_new = f_g * c + i_g * g_g
        h_new = o_g * jnp.tanh(c_new)

        if mask_tail:
            # Padded time steps must not evolve the state (review concern).
            keep = (tb * t_blk + t) < t_real
            c_new = jnp.where(keep, c_new, c)
            h_bf = jnp.where(keep, h_new.astype(h_sc.dtype), h)
        else:
            h_bf = h_new.astype(h_sc.dtype)

        h_sc[...] = h_bf
        c_sc[...] = c_new
        if collect_outputs:
            y_ref[t] = h_bf.astype(y_ref.dtype)
        return gx_next

    lax.fori_loop(0, t_blk, step, gx0, unroll=unroll)

    if not collect_outputs:
        # Top layer: only the final hidden state is consumed downstream; skip
        # the full (T, B, H) HBM writeback (review item).
        y_ref[0] = h_sc[...].astype(y_ref.dtype)

    @pl.when(tb == pl.num_programs(1) - 1)
    def _():
        hN_ref[...] = h_sc[...].astype(hN_ref.dtype)
        cN_ref[...] = c_sc[...]


def lstm_layer(x_tbe, w_ih, w_hh, b, *, t_blk, t_real, collect_outputs):
    """x_tbe: (T_pad, B_pad, In_pad) bf16 -> (y, h_N, c_N)."""
    t_pad, b_pad, e_pad = x_tbe.shape
    h_pad = w_hh.shape[0]
    assert t_pad % t_blk == 0

    # Split the batch only when a second TensorCore can actually pick it up
    # (v7x megacore); on v5e/v6e keep the full batch in one block (review).
    if _num_tensorcores() > 1 and b_pad >= 16 and b_pad % 16 == 0:
        b_blk = b_pad // 2
    else:
        b_blk = b_pad

    grid = (b_pad // b_blk, t_pad // t_blk)
    unroll = _choose_unroll(t_blk, b_blk, h_pad)
    mask_tail = t_pad != t_real

    y_t = t_pad if collect_outputs else 1
    y_blk = t_blk if collect_outputs else 1
    y_map = ((lambda bi, ti: (ti, bi, 0)) if collect_outputs
             else (lambda bi, ti: (0, bi, 0)))

    out_shapes = (
        jax.ShapeDtypeStruct((y_t, b_pad, h_pad), x_tbe.dtype),  # y
        jax.ShapeDtypeStruct((b_pad, h_pad), jnp.float32),       # h_N
        jax.ShapeDtypeStruct((b_pad, h_pad), jnp.float32),       # c_N
    )
    kernel = functools.partial(
        lstm_layer_kernel, unroll=unroll, t_real=t_real,
        mask_tail=mask_tail, collect_outputs=collect_outputs)

    return pl.pallas_call(
        kernel,
        out_shape=out_shapes,
        grid=grid,
        in_specs=[
            pl.BlockSpec((t_blk, b_blk, e_pad), lambda bi, ti: (ti, bi, 0)),
            pl.BlockSpec((e_pad, 4 * h_pad), lambda bi, ti: (0, 0)),
            pl.BlockSpec((h_pad, 4 * h_pad), lambda bi, ti: (0, 0)),
            pl.BlockSpec((1, 4 * h_pad), lambda bi, ti: (0, 0)),
        ],
        out_specs=(
            pl.BlockSpec((y_blk, b_blk, h_pad), y_map),
            pl.BlockSpec((b_blk, h_pad), lambda bi, ti: (bi, 0)),
            pl.BlockSpec((b_blk, h_pad), lambda bi, ti: (bi, 0)),
        ),
        scratch_shapes=[
            pltpu.VMEM((b_blk, h_pad), jnp.bfloat16),   # h (bf16: review item)
            pltpu.VMEM((b_blk, h_pad), jnp.float32),    # c (f32)
        ],
        compiler_params=pltpu.CompilerParams(
            dimension_semantics=("parallel", "arbitrary"),
            vmem_limit_bytes=_lstm_vmem_limit(t_blk, b_blk, e_pad, h_pad,
                                              collect_outputs),
        ),
    )(x_tbe, w_ih, w_hh, b)


def fc_logsoftmax_kernel(h_ref, w_ref, b_ref, out_ref):
    """Linear head + LogSoftmax(dim=1) on a lane-dense padded output slab.

    h_ref: (B_pad, H_pad) bf16, w_ref: (H_pad, O_pad) bf16,
    b_ref: (1, O_pad) f32 (padded cols = -1e30 so softmax ignores them).
    """
    logits = jnp.dot(h_ref[...], w_ref[...],
                     preferred_element_type=jnp.float32) + b_ref[...]
    m = jnp.max(logits, axis=1, keepdims=True)
    s = logits - m
    out_ref[...] = s - jnp.log(jnp.sum(jnp.exp(s), axis=1, keepdims=True))


def fc_logsoftmax(h, w, b):
    # TODO(synk): for vocab-scale output dims, tile the head over O instead of
    # whole-array VMEM residency.
    b_pad = h.shape[0]
    o_pad = w.shape[1]
    vmem = pl.BlockSpec(memory_space=pltpu.MemorySpace.VMEM)
    return pl.pallas_call(
        fc_logsoftmax_kernel,
        out_shape=jax.ShapeDtypeStruct((b_pad, o_pad), jnp.float32),
        in_specs=[vmem, vmem, vmem],
        out_specs=vmem,
    )(h, w, b)


# ---------------------------------------------------------------------------
# Fused path: whole network in one VMEM-resident kernel (small configs)
# ---------------------------------------------------------------------------
def fused_rnn_kernel(*refs, num_layers, t_real, h_pad):
    x_ref = refs[0]
    layer_refs = [refs[1 + 3 * l: 4 + 3 * l] for l in range(num_layers)]
    fc_w_ref = refs[1 + 3 * num_layers]
    fc_b_ref = refs[2 + 3 * num_layers]
    out_ref = refs[3 + 3 * num_layers]
    hN_ref = refs[4 + 3 * num_layers]
    cN_ref = refs[5 + 3 * num_layers]
    ybufs = (refs[6 + 3 * num_layers], refs[7 + 3 * num_layers])

    b_pad = x_ref.shape[1]
    h_last = None
    for l in range(num_layers):
        w_ih = layer_refs[l][0][...]
        w_hh = layer_refs[l][1][...]
        bias = layer_refs[l][2][...]
        in_ref = x_ref if l == 0 else ybufs[(l + 1) % 2]
        out_buf = ybufs[l % 2]

        def step(t, carry, in_ref=in_ref, out_buf=out_buf,
                 w_ih=w_ih, w_hh=w_hh, bias=bias):
            h, c = carry                                   # h bf16, c f32
            gates = (jnp.dot(in_ref[t], w_ih,
                             preferred_element_type=jnp.float32)
                     + bias
                     + jnp.dot(h, w_hh, preferred_element_type=jnp.float32))
            i_g = jax.nn.sigmoid(gates[:, 0 * h_pad:1 * h_pad])
            f_g = jax.nn.sigmoid(gates[:, 1 * h_pad:2 * h_pad])
            g_g = jnp.tanh(gates[:, 2 * h_pad:3 * h_pad])
            o_g = jax.nn.sigmoid(gates[:, 3 * h_pad:4 * h_pad])
            c_new = f_g * c + i_g * g_g
            h_new = (o_g * jnp.tanh(c_new)).astype(jnp.bfloat16)
            out_buf[t] = h_new
            return (h_new, c_new)

        h0 = jnp.zeros((b_pad, h_pad), jnp.bfloat16)
        c0 = jnp.zeros((b_pad, h_pad), jnp.float32)
        h_last, c_last = lax.fori_loop(0, t_real, step, (h0, c0), unroll=True)
        hN_ref[l] = h_last.astype(jnp.float32)
        cN_ref[l] = c_last

    logits = (jnp.dot(h_last, fc_w_ref[...],
                      preferred_element_type=jnp.float32) + fc_b_ref[...])
    m = jnp.max(logits, axis=1, keepdims=True)
    s = logits - m
    out_ref[...] = s - jnp.log(jnp.sum(jnp.exp(s), axis=1, keepdims=True))


def _fused_fits(t, b_pad, e_pad, h_pad, o_pad, num_layers):
    if t > 32 or b_pad > 64:
        return False
    bf16 = 2
    x = t * b_pad * e_pad * bf16
    ybufs = 2 * t * b_pad * h_pad * bf16
    in_dims = e_pad + (num_layers - 1) * h_pad
    weights = (in_dims + num_layers * h_pad) * 4 * h_pad * bf16
    biases = num_layers * 4 * h_pad * 4
    head = h_pad * o_pad * bf16 + o_pad * 4 + b_pad * o_pad * 4
    states = 2 * num_layers * b_pad * h_pad * 4
    return (x + ybufs + weights + biases + head + states) <= 4 * 1024 * 1024


def fused_forward(x_emb, lstm_params, fc_w, fc_b, *, t_real):
    t, b_pad, _ = x_emb.shape
    num_layers = len(lstm_params)
    h_pad = lstm_params[0][1].shape[0]
    o_pad = fc_w.shape[1]

    inputs = [x_emb]
    for (w_ih, w_hh, b) in lstm_params:
        inputs += [w_ih, w_hh, b]
    inputs += [fc_w, fc_b]

    vmem = pl.BlockSpec(memory_space=pltpu.MemorySpace.VMEM)
    kernel = functools.partial(fused_rnn_kernel, num_layers=num_layers,
                               t_real=t_real, h_pad=h_pad)
    return pl.pallas_call(
        kernel,
        out_shape=(
            jax.ShapeDtypeStruct((b_pad, o_pad), jnp.float32),
            jax.ShapeDtypeStruct((num_layers, b_pad, h_pad), jnp.float32),
            jax.ShapeDtypeStruct((num_layers, b_pad, h_pad), jnp.float32),
        ),
        in_specs=[vmem] * len(inputs),
        out_specs=(vmem, vmem, vmem),
        scratch_shapes=[pltpu.VMEM((t, b_pad, h_pad), jnp.bfloat16),
                        pltpu.VMEM((t, b_pad, h_pad), jnp.bfloat16)],
    )(*inputs)


# ---------------------------------------------------------------------------
# Parameters: PyTorch-layout init + lane-dense padded/transposed prepared set
# ---------------------------------------------------------------------------
def init_params(key, no_layers, vocab_size, hidden_dim, embedding_dim,
                output_dim):
    keys = jax.random.split(key, 3 + 4 * no_layers)
    kidx = 0

    def nxt():
        nonlocal kidx
        k = keys[kidx]
        kidx += 1
        return k

    params = {}
    params["embedding"] = jax.random.normal(
        nxt(), (vocab_size, embedding_dim), jnp.float32) * 0.1

    scale = 1.0 / jnp.sqrt(hidden_dim)
    lstm = []
    for l in range(no_layers):
        in_dim = embedding_dim if l == 0 else hidden_dim
        w_ih = jax.random.uniform(nxt(), (4 * hidden_dim, in_dim),
                                  jnp.float32, -scale, scale)
        w_hh = jax.random.uniform(nxt(), (4 * hidden_dim, hidden_dim),
                                  jnp.float32, -scale, scale)
        b_ih = jax.random.uniform(nxt(), (4 * hidden_dim,),
                                  jnp.float32, -scale, scale)
        b_hh = jax.random.uniform(nxt(), (4 * hidden_dim,),
                                  jnp.float32, -scale, scale)
        lstm.append((w_ih, w_hh, b_ih, b_hh))
    params["lstm"] = lstm

    params["fc_w"] = jax.random.uniform(
        nxt(), (output_dim, hidden_dim), jnp.float32, -scale, scale)
    params["fc_b"] = jax.random.uniform(
        nxt(), (output_dim,), jnp.float32, -scale, scale)
    return params


def prepare_params(params, hidden_dim, embedding_dim, output_dim,
                   storage_dtype=jnp.bfloat16):
    """Transpose to (In, 4H), zero-pad each gate block to H_pad=ceil128(H),
    pad E/O to lane-dense sizes, cast storage to bf16."""
    H, E, O = hidden_dim, embedding_dim, output_dim
    H_pad = _round_up(H, 128)
    E_pad = _round_up(E, 128)
    O_pad = _round_up(O, 128)

    emb = jnp.pad(params["embedding"], ((0, 0), (0, E_pad - E)))
    prepared = {"embedding": emb.astype(storage_dtype)}

    lstm_p = []
    for l, (w_ih, w_hh, b_ih, b_hh) in enumerate(params["lstm"]):
        in_dim = w_ih.shape[1]
        in_pad = E_pad if l == 0 else H_pad
        w_ih_t = w_ih.T            # (In, 4H)
        w_hh_t = w_hh.T            # (H, 4H)
        bias = b_ih + b_hh         # (4H,)
        w_ih_p = jnp.zeros((in_pad, 4 * H_pad), jnp.float32)
        w_hh_p = jnp.zeros((H_pad, 4 * H_pad), jnp.float32)
        b_p = jnp.zeros((1, 4 * H_pad), jnp.float32)
        for k in range(4):          # gate order i, f, g, o
            w_ih_p = w_ih_p.at[:in_dim, k * H_pad:k * H_pad + H].set(
                w_ih_t[:, k * H:(k + 1) * H])
            w_hh_p = w_hh_p.at[:H, k * H_pad:k * H_pad + H].set(
                w_hh_t[:, k * H:(k + 1) * H])
            b_p = b_p.at[0, k * H_pad:k * H_pad + H].set(
                bias[k * H:(k + 1) * H])
        lstm_p.append((w_ih_p.astype(storage_dtype),
                       w_hh_p.astype(storage_dtype),
                       b_p))
    prepared["lstm"] = tuple(lstm_p)

    # FC weights stored bf16 (review item); padded logit cols biased to -1e30.
    fc_w = jnp.zeros((H_pad, O_pad), jnp.float32).at[:H, :O].set(
        params["fc_w"].T)
    fc_b = jnp.full((1, O_pad), -1e30, jnp.float32).at[0, :O].set(
        params["fc_b"])
    prepared["fc_w"] = fc_w.astype(storage_dtype)
    prepared["fc_b"] = fc_b
    return prepared


# ---------------------------------------------------------------------------
# Forward pass (matches the PyTorch module in eval mode; the PyTorch forward
# ignores its `hidden` argument since self.lstm(x) zero-inits its state).
# ---------------------------------------------------------------------------
@functools.partial(jax.jit,
                   static_argnames=("hidden_dim", "output_dim",
                                    "force_layered"))
def rnn_forward(prepared, x_tokens, *, hidden_dim, output_dim,
                force_layered=False):
    b, t = x_tokens.shape
    b_pad = _round_up(b, 8)

    # Embedding gather (XLA glue): (B, T) -> time-major (T, B_pad, E_pad) bf16
    emb = jnp.take(prepared["embedding"], x_tokens, axis=0)
    x = jnp.transpose(emb, (1, 0, 2))
    if b_pad != b:
        x = jnp.pad(x, ((0, 0), (0, b_pad - b), (0, 0)))

    lstm_params = prepared["lstm"]
    num_layers = len(lstm_params)
    e_pad = x.shape[-1]
    h_pad = lstm_params[0][1].shape[0]
    o_pad = prepared["fc_w"].shape[1]

    # TODO(synk): nn.Dropout is identity here (inference / eval semantics).
    if not force_layered and _fused_fits(t, b_pad, e_pad, h_pad, o_pad,
                                         num_layers):
        out_pad, h_n, c_n = fused_forward(x, lstm_params, prepared["fc_w"],
                                          prepared["fc_b"], t_real=t)
        out = out_pad[:b, :output_dim]
        hidden = (h_n[:, :b, :hidden_dim], c_n[:, :b, :hidden_dim])
        return out, hidden

    # General tiled path.
    t_blk, t_pad = _choose_time_block(t)
    if t_pad != t:
        x = jnp.pad(x, ((0, t_pad - t), (0, 0), (0, 0)))

    h_finals, c_finals = [], []
    for l, (w_ih, w_hh, bias) in enumerate(lstm_params):
        collect = l < num_layers - 1
        x, h_n, c_n = lstm_layer(x, w_ih, w_hh, bias, t_blk=t_blk, t_real=t,
                                 collect_outputs=collect)
        h_finals.append(h_n[:b, :hidden_dim])
        c_finals.append(c_n[:b, :hidden_dim])

    # permute(1,0,2)[-1] in PyTorch == last time step of the top-layer output;
    # the top layer only emits that single step (degenerate y), so x[-1] is it.
    h_last = x[-1]                                    # (B_pad, H_pad) bf16
    out_pad = fc_logsoftmax(h_last, prepared["fc_w"], prepared["fc_b"])
    out = out_pad[:b, :output_dim]
    hidden = (jnp.stack(h_finals, axis=0), jnp.stack(c_finals, axis=0))
    return out, hidden


# ---------------------------------------------------------------------------
if __name__ == "__main__":
    no_layers = 2
    vocab_size = 50
    hidden_dim = 32
    embedding_dim = 32
    output_dim = 3
    batch = 2
    seq = 8

    key = jax.random.PRNGKey(0)
    pkey, xkey = jax.random.split(key)
    params = init_params(pkey, no_layers, vocab_size, hidden_dim,
                         embedding_dim, output_dim)
    prepared = prepare_params(params, hidden_dim, embedding_dim, output_dim)

    x_tokens = jax.random.randint(xkey, (batch, seq), 0, vocab_size,
                                  dtype=jnp.int32)

    # Fast path: fully fused single kernel (tiny config).
    out, hidden = rnn_forward(prepared, x_tokens,
                              hidden_dim=hidden_dim, output_dim=output_dim)
    jax.block_until_ready((out, hidden))

    # General tiled path (time-blocked grid, per-layer kernels) on the same
    # input, used to cross-validate the two implementations.
    out_l, hidden_l = rnn_forward(prepared, x_tokens,
                                  hidden_dim=hidden_dim,
                                  output_dim=output_dim,
                                  force_layered=True)
    jax.block_until_ready((out_l, hidden_l))

    assert out.shape == (batch, output_dim)
    assert hidden[0].shape == (no_layers, batch, hidden_dim)
    assert hidden[1].shape == (no_layers, batch, hidden_dim)
    assert bool(jnp.all(jnp.isfinite(out)))
    # log-softmax rows should sum (in prob space) to ~1
    assert bool(jnp.allclose(jnp.sum(jnp.exp(out.astype(jnp.float32)), axis=1),
                             1.0, atol=1e-4))
    # fused and tiled paths agree
    assert bool(jnp.allclose(out, out_l, atol=1e-2))
    assert bool(jnp.allclose(hidden[0], hidden_l[0], atol=1e-2))
    assert bool(jnp.allclose(hidden[1], hidden_l[1], atol=1e-2))

    print("KERNEL_OK")
</pallas_src>

<mosaic_0001>
module attributes {stable_mosaic.version = 11 : i64} {
  func.func @fused_rnn_kernel(%arg0: memref<8x8x128xbf16, #tpu.memory_space<vmem>>, %arg1: memref<128x512xbf16, #tpu.memory_space<vmem>>, %arg2: memref<128x512xbf16, #tpu.memory_space<vmem>>, %arg3: memref<1x512xf32, #tpu.memory_space<vmem>>, %arg4: memref<128x512xbf16, #tpu.memory_space<vmem>>, %arg5: memref<128x512xbf16, #tpu.memory_space<vmem>>, %arg6: memref<1x512xf32, #tpu.memory_space<vmem>>, %arg7: memref<128x128xbf16, #tpu.memory_space<vmem>>, %arg8: memref<1x128xf32, #tpu.memory_space<vmem>>, %arg9: memref<8x128xf32, #tpu.memory_space<vmem>>, %arg10: memref<2x8x128xf32, #tpu.memory_space<vmem>>, %arg11: memref<2x8x128xf32, #tpu.memory_space<vmem>>, %arg12: memref<8x8x128xbf16, #tpu.memory_space<vmem>>, %arg13: memref<8x8x128xbf16, #tpu.memory_space<vmem>>) attributes {dimension_semantics = [], scalar_prefetch = 0 : i64, scratch_operands = 2 : i64, tpu.core_type = #tpu.core_type<tc>} {
    %c0 = arith.constant 0 : index
    %c0_0 = arith.constant 0 : index
    %0 = vector.load %arg1[%c0, %c0_0] : memref<128x512xbf16, #tpu.memory_space<vmem>>, vector<128x512xbf16>
    %c0_1 = arith.constant 0 : index
    %c0_2 = arith.constant 0 : index
    %1 = vector.load %arg2[%c0_1, %c0_2] : memref<128x512xbf16, #tpu.memory_space<vmem>>, vector<128x512xbf16>
    %c0_3 = arith.constant 0 : index
    %c0_4 = arith.constant 0 : index
    %2 = vector.load %arg3[%c0_3, %c0_4] : memref<1x512xf32, #tpu.memory_space<vmem>>, vector<1x512xf32>
    %cst = arith.constant 0.000000e+00 : bf16
    %3 = vector.broadcast %cst : bf16 to vector<8x128xbf16>
    %cst_5 = arith.constant 0.000000e+00 : f32
    %4 = vector.broadcast %cst_5 : f32 to vector<8x128xf32>
    %c0_i32 = arith.constant 0 : i32
    %5 = arith.index_cast %c0_i32 : i32 to index
    %c0_6 = arith.constant 0 : index
    %c0_7 = arith.constant 0 : index
    %6 = vector.load %arg0[%5, %c0_6, %c0_7] : memref<8x8x128xbf16, #tpu.memory_space<vmem>>, vector<1x8x128xbf16>
    %7 = vector.shape_cast %6 : vector<1x8x128xbf16> to vector<8x128xbf16>
    %cst_8 = arith.constant dense<0.000000e+00> : vector<8x512xf32>
    %8 = tpu.matmul %7, %0, %cst_8 {dimension_numbers = #tpu.dot_dimension_numbers<[1], [0], [0], [1], [0, 0, 1, 1], [], []>} : vector<8x128xbf16>, vector<128x512xbf16>, vector<8x512xf32> -> vector<8x512xf32>
    %9 = vector.broadcast %2 : vector<1x512xf32> to vector<8x512xf32>
    %10 = arith.addf %8, %9 : vector<8x512xf32>
    %cst_9 = arith.constant dense<0.000000e+00> : vector<8x512xf32>
    %11 = tpu.matmul %3, %1, %cst_9 {dimension_numbers = #tpu.dot_dimension_numbers<[1], [0], [0], [1], [0, 0, 1, 1], [], []>} : vector<8x128xbf16>, vector<128x512xbf16>, vector<8x512xf32> -> vector<8x512xf32>
    %12 = arith.addf %10, %11 : vector<8x512xf32>
    %13 = vector.extract_strided_slice %12 {offsets = [0, 0], sizes = [8, 128], strides = [1, 1]} : vector<8x512xf32> to vector<8x128xf32>
    %14 = arith.negf %13 : vector<8x128xf32>
    %15 = math.exp %14 : vector<8x128xf32>
    %cst_10 = arith.constant 1.000000e+00 : f32
    %16 = vector.broadcast %cst_10 : f32 to vector<8x128xf32>
    %17 = arith.addf %16, %15 : vector<8x128xf32>
    %18 = arith.divf %16, %17 : vector<8x128xf32>
    %19 = vector.extract_strided_slice %12 {offsets = [0, 128], sizes = [8, 128], strides = [1, 1]} : vector<8x512xf32> to vector<8x128xf32>
    %20 = arith.negf %19 : vector<8x128xf32>
    %21 = math.exp %20 : vector<8x128xf32>
    %cst_11 = arith.constant 1.000000e+00 : f32
    %22 = vector.broadcast %cst_11 : f32 to vector<8x128xf32>
    %23 = arith.addf %22, %21 : vector<8x128xf32>
    %24 = arith.divf %22, %23 : vector<8x128xf32>
    %25 = vector.extract_strided_slice %12 {offsets = [0, 256], sizes = [8, 128], strides = [1, 1]} : vector<8x512xf32> to vector<8x128xf32>
    %26 = math.tanh %25 : vector<8x128xf32>
    %27 = vector.extract_strided_slice %12 {offsets = [0, 384], sizes = [8, 128], strides = [1, 1]} : vector<8x512xf32> to vector<8x128xf32>
    %28 = arith.negf %27 : vector<8x128xf32>
    %29 = math.exp %28 : vector<8x128xf32>
    %cst_12 = arith.constant 1.000000e+00 : f32
    %30 = vector.broadcast %cst_12 : f32 to vector<8x128xf32>
    %31 = arith.addf %30, %29 : vector<8x128xf32>
    %32 = arith.divf %30, %31 : vector<8x128xf32>
    %33 = arith.mulf %24, %4 : vector<8x128xf32>
    %34 = arith.mulf %18, %26 : vector<8x128xf32>
    %35 = arith.addf %33, %34 : vector<8x128xf32>
    %36 = math.tanh %35 : vector<8x128xf32>
    %37 = arith.mulf %32, %36 : vector<8x128xf32>
    %38 = arith.truncf %37 : vector<8x128xf32> to vector<8x128xbf16>
    %39 = arith.index_cast %c0_i32 : i32 to index
    %c0_13 = arith.constant 0 : index
    %c0_14 = arith.constant 0 : index
    %40 = vector.load %arg12[%39, %c0_13, %c0_14] : memref<8x8x128xbf16, #tpu.memory_space<vmem>>, vector<1x8x128xbf16>
    %41 = vector.shape_cast %40 : vector<1x8x128xbf16> to vector<8x128xbf16>
    %42 = vector.shape_cast %38 : vector<8x128xbf16> to vector<1x8x128xbf16>
    tpu.vector_store %arg12[%39, %c0_13, %c0_14], %42 {strides = array<i32>} : memref<8x8x128xbf16, #tpu.memory_space<vmem>>, vector<1x8x128xbf16>,
    %c1_i32 = arith.constant 1 : i32
    %43 = arith.index_cast %c1_i32 : i32 to index
    %c0_15 = arith.constant 0 : index
    %c0_16 = arith.constant 0 : index
    %44 = vector.load %arg0[%43, %c0_15, %c0_16] : memref<8x8x128xbf16, #tpu.memory_space<vmem>>, vector<1x8x128xbf16>
    %45 = vector.shape_cast %44 : vector<1x8x128xbf16> to vector<8x128xbf16>
    %cst_17 = arith.constant dense<0.000000e+00> : vector<8x512xf32>
    %46 = tpu.matmul %45, %0, %cst_17 {dimension_numbers = #tpu.dot_dimension_numbers<[1], [0], [0], [1], [0, 0, 1, 1], [], []>} : vector<8x128xbf16>, vector<128x512xbf16>, vector<8x512xf32> -> vector<8x512xf32>
    %47 = vector.broadcast %2 : vector<1x512xf32> to vector<8x512xf32>
    %48 = arith.addf %46, %47 : vector<8x512xf32>
    %cst_18 = arith.constant dense<0.000000e+00> : vector<8x512xf32>
    %49 = tpu.matmul %38, %1, %cst_18 {dimension_numbers = #tpu.dot_dimension_numbers<[1], [0], [0], [1], [0, 0, 1, 1], [], []>} : vector<8x128xbf16>, vector<128x512xbf16>, vector<8x512xf32> -> vector<8x512xf32>
    %50 = arith.addf %48, %49 : vector<8x512xf32>
    %51 = vector.extract_strided_slice %50 {offsets = [0, 0], sizes = [8, 128], strides = [1, 1]} : vector<8x512xf32> to vector<8x128xf32>
    %52 = arith.negf %51 : vector<8x128xf32>
    %53 = math.exp %52 : vector<8x128xf32>
    %cst_19 = arith.constant 1.000000e+00 : f32
    %54 = vector.broadcast %cst_19 : f32 to vector<8x128xf32>
    %55 = arith.addf %54, %53 : vector<8x128xf32>
    %56 = arith.divf %54, %55 : vector<8x128xf32>
    %57 = vector.extract_strided_slice %50 {offsets = [0, 128], sizes = [8, 128], strides = [1, 1]} : vector<8x512xf32> to vector<8x128xf32>
    %58 = arith.negf %57 : vector<8x128xf32>
    %59 = math.exp %58 : vector<8x128xf32>
    %cst_20 = arith.constant 1.000000e+00 : f32
    %60 = vector.broadcast %cst_20 : f32 to vector<8x128xf32>
    %61 = arith.addf %60, %59 : vector<8x128xf32>
    %62 = arith.divf %60, %61 : vector<8x128xf32>
    %63 = vector.extract_strided_slice %50 {offsets = [0, 256], sizes = [8, 128], strides = [1, 1]} : vector<8x512xf32> to vector<8x128xf32>
    %64 = math.tanh %63 : vector<8x128xf32>
    %65 = vector.extract_strided_slice %50 {offsets = [0, 384], sizes = [8, 128], strides = [1, 1]} : vector<8x512xf32> to vector<8x128xf32>
    %66 = arith.negf %65 : vector<8x128xf32>
    %67 = math.exp %66 : vector<8x128xf32>
    %cst_21 = arith.constant 1.000000e+00 : f32
    %68 = vector.broadcast %cst_21 : f32 to vector<8x128xf32>
    %69 = arith.addf %68, %67 : vector<8x128xf32>
    %70 = arith.divf %68, %69 : vector<8x128xf32>
    %71 = arith.mulf %62, %35 : vector<8x128xf32>
    %72 = arith.mulf %56, %64 : vector<8x128xf32>
    %73 = arith.addf %71, %72 : vector<8x128xf32>
    %74 = math.tanh %73 : vector<8x128xf32>
    %75 = arith.mulf %70, %74 : vector<8x128xf32>
    %76 = arith.truncf %75 : vector<8x128xf32> to vector<8x128xbf16>
    %77 = arith.index_cast %c1_i32 : i32 to index
    %c0_22 = arith.constant 0 : index
    %c0_23 = arith.constant 0 : index
    %78 = vector.load %arg12[%77, %c0_22, %c0_23] : memref<8x8x128xbf16, #tpu.memory_space<vmem>>, vector<1x8x128xbf16>
    %79 = vector.shape_cast %78 : vector<1x8x128xbf16> to vector<8x128xbf16>
    %80 = vector.shape_cast %76 : vector<8x128xbf16> to vector<1x8x128xbf16>
    tpu.vector_store %arg12[%77, %c0_22, %c0_23], %80 {strides = array<i32>} : memref<8x8x128xbf16, #tpu.memory_space<vmem>>, vector<1x8x128xbf16>,
    %c2_i32 = arith.constant 2 : i32
    %81 = arith.index_cast %c2_i32 : i32 to index
    %c0_24 = arith.constant 0 : index
    %c0_25 = arith.constant 0 : index
    %82 = vector.load %arg0[%81, %c0_24, %c0_25] : memref<8x8x128xbf16, #tpu.memory_space<vmem>>, vector<1x8x128xbf16>
    %83 = vector.shape_cast %82 : vector<1x8x128xbf16> to vector<8x128xbf16>
    %cst_26 = arith.constant dense<0.000000e+00> : vector<8x512xf32>
    %84 = tpu.matmul %83, %0, %cst_26 {dimension_numbers = #tpu.dot_dimension_numbers<[1], [0], [0], [1], [0, 0, 1, 1], [], []>} : vector<8x128xbf16>, vector<128x512xbf16>, vector<8x512xf32> -> vector<8x512xf32>
    %85 = vector.broadcast %2 : vector<1x512xf32> to vector<8x512xf32>
    %86 = arith.addf %84, %85 : vector<8x512xf32>
    %cst_27 = arith.constant dense<0.000000e+00> : vector<8x512xf32>
    %87 = tpu.matmul %76, %1, %cst_27 {dimension_numbers = #tpu.dot_dimension_numbers<[1], [0], [0], [1], [0, 0, 1, 1], [], []>} : vector<8x128xbf16>, vector<128x512xbf16>, vector<8x512xf32> -> vector<8x512xf32>
    %88 = arith.addf %86, %87 : vector<8x512xf32>
    %89 = vector.extract_strided_slice %88 {offsets = [0, 0], sizes = [8, 128], strides = [1, 1]} : vector<8x512xf32> to vector<8x128xf32>
    %90 = arith.negf %89 : vector<8x128xf32>
    %91 = math.exp %90 : vector<8x128xf32>
    %cst_28 = arith.constant 1.000000e+00 : f32
    %92 = vector.broadcast %cst_28 : f32 to vector<8x128xf32>
    %93 = arith.addf %92, %91 : vector<8x128xf32>
    %94 = arith.divf %92, %93 : vector<8x128xf32>
    %95 = vector.extract_strided_slice %88 {offsets = [0, 128], sizes = [8, 128], strides = [1, 1]} : vector<8x512xf32> to vector<8x128xf32>
    %96 = arith.negf %95 : vector<8x128xf32>
    %97 = math.exp %96 : vector<8x128xf32>
    %cst_29 = arith.constant 1.000000e+00 : f32
    %98 = vector.broadcast %cst_29 : f32 to vector<8x128xf32>
    %99 = arith.addf %98, %97 : vector<8x128xf32>
    %100 = arith.divf %98, %99 : vector<8x128xf32>
    %101 = vector.extract_strided_slice %88 {offsets = [0, 256], sizes = [8, 128], strides = [1, 1]} : vector<8x512xf32> to vector<8x128xf32>
    %102 = math.tanh %101 : vector<8x128xf32>
    %103 = vector.extract_strided_slice %88 {offsets = [0, 384], sizes = [8, 128], strides = [1, 1]} : vector<8x512xf32> to vector<8x128xf32>
    %104 = arith.negf %103 : vector<8x128xf32>
    %105 = math.exp %104 : vector<8x128xf32>
    %cst_30 = arith.constant 1.000000e+00 : f32
    %106 = vector.broadcast %cst_30 : f32 to vector<8x128xf32>
    %107 = arith.addf %106, %105 : vector<8x128xf32>
    %108 = arith.divf %106, %107 : vector<8x128xf32>
    %109 = arith.mulf %100, %73 : vector<8x128xf32>
    %110 = arith.mulf %94, %102 : vector<8x128xf32>
    %111 = arith.addf %109, %110 : vector<8x128xf32>
    %112 = math.tanh %111 : vector<8x128xf32>
    %113 = arith.mulf %108, %112 : vector<8x128xf32>
    %114 = arith.truncf %113 : vector<8x128xf32> to vector<8x128xbf16>
    %115 = arith.index_cast %c2_i32 : i32 to index
    %c0_31 = arith.constant 0 : index
    %c0_32 = arith.constant 0 : index
    %116 = vector.load %arg12[%115, %c0_31, %c0_32] : memref<8x8x128xbf16, #tpu.memory_space<vmem>>, vector<1x8x128xbf16>
    %117 = vector.shape_cast %116 : vector<1x8x128xbf16> to vector<8x128xbf16>
    %118 = vector.shape_cast %114 : vector<8x128xbf16> to vector<1x8x128xbf16>
    tpu.vector_store %arg12[%115, %c0_31, %c0_32], %118 {strides = array<i32>} : memref<8x8x128xbf16, #tpu.memory_space<vmem>>, vector<1x8x128xbf16>,
    %c3_i32 = arith.constant 3 : i32
    %119 = arith.index_cast %c3_i32 : i32 to index
    %c0_33 = arith.constant 0 : index
    %c0_34 = arith.constant 0 : index
    %120 = vector.load %arg0[%119, %c0_33, %c0_34] : memref<8x8x128xbf16, #tpu.memory_space<vmem>>, vector<1x8x128xbf16>
    %121 = vector.shape_cast %120 : vector<1x8x128xbf16> to vector<8x128xbf16>
    %cst_35 = arith.constant dense<0.000000e+00> : vector<8x512xf32>
    %122 = tpu.matmul %121, %0, %cst_35 {dimension_numbers = #tpu.dot_dimension_numbers<[1], [0], [0], [1], [0, 0, 1, 1], [], []>} : vector<8x128xbf16>, vector<128x512xbf16>, vector<8x512xf32> -> vector<8x512xf32>
    %123 = vector.broadcast %2 : vector<1x512xf32> to vector<8x512xf32>
    %124 = arith.addf %122, %123 : vector<8x512xf32>
    %cst_36 = arith.constant dense<0.000000e+00> : vector<8x512xf32>
    %125 = tpu.matmul %114, %1, %cst_36 {dimension_numbers = #tpu.dot_dimension_numbers<[1], [0], [0], [1], [0, 0, 1, 1], [], []>} : vector<8x128xbf16>, vector<128x512xbf16>, vector<8x512xf32> -> vector<8x512xf32>
    %126 = arith.addf %124, %125 : vector<8x512xf32>
    %127 = vector.extract_strided_slice %126 {offsets = [0, 0], sizes = [8, 128], strides = [1, 1]} : vector<8x512xf32> to vector<8x128xf32>
    %128 = arith.negf %127 : vector<8x128xf32>
    %129 = math.exp %128 : vector<8x128xf32>
    %cst_37 = arith.constant 1.000000e+00 : f32
    %130 = vector.broadcast %cst_37 : f32 to vector<8x128xf32>
    %131 = arith.addf %130, %129 : vector<8x128xf32>
    %132 = arith.divf %130, %131 : vector<8x128xf32>
    %133 = vector.extract_strided_slice %126 {offsets = [0, 128], sizes = [8, 128], strides = [1, 1]} : vector<8x512xf32> to vector<8x128xf32>
    %134 = arith.negf %133 : vector<8x128xf32>
    %135 = math.exp %134 : vector<8x128xf32>
    %cst_38 = arith.constant 1.000000e+00 : f32
    %136 = vector.broadcast %cst_38 : f32 to vector<8x128xf32>
    %137 = arith.addf %136, %135 : vector<8x128xf32>
    %138 = arith.divf %136, %137 : vector<8x128xf32>
    %139 = vector.extract_strided_slice %126 {offsets = [0, 256], sizes = [8, 128], strides = [1, 1]} : vector<8x512xf32> to vector<8x128xf32>
    %140 = math.tanh %139 : vector<8x128xf32>
    %141 = vector.extract_strided_slice %126 {offsets = [0, 384], sizes = [8, 128], strides = [1, 1]} : vector<8x512xf32> to vector<8x128xf32>
    %142 = arith.negf %141 : vector<8x128xf32>
    %143 = math.exp %142 : vector<8x128xf32>
    %cst_39 = arith.constant 1.000000e+00 : f32
    %144 = vector.broadcast %cst_39 : f32 to vector<8x128xf32>
    %145 = arith.addf %144, %143 : vector<8x128xf32>
    %146 = arith.divf %144, %145 : vector<8x128xf32>
    %147 = arith.mulf %138, %111 : vector<8x128xf32>
    %148 = arith.mulf %132, %140 : vector<8x128xf32>
    %149 = arith.addf %147, %148 : vector<8x128xf32>
    %150 = math.tanh %149 : vector<8x128xf32>
    %151 = arith.mulf %146, %150 : vector<8x128xf32>
    %152 = arith.truncf %151 : vector<8x128xf32> to vector<8x128xbf16>
    %153 = arith.index_cast %c3_i32 : i32 to index
    %c0_40 = arith.constant 0 : index
    %c0_41 = arith.constant 0 : index
    %154 = vector.load %arg12[%153, %c0_40, %c0_41] : memref<8x8x128xbf16, #tpu.memory_space<vmem>>, vector<1x8x128xbf16>
    %155 = vector.shape_cast %154 : vector<1x8x128xbf16> to vector<8x128xbf16>
    %156 = vector.shape_cast %152 : vector<8x128xbf16> to vector<1x8x128xbf16>
    tpu.vector_store %arg12[%153, %c0_40, %c0_41], %156 {strides = array<i32>} : memref<8x8x128xbf16, #tpu.memory_space<vmem>>, vector<1x8x128xbf16>,
    %c4_i32 = arith.constant 4 : i32
    %157 = arith.index_cast %c4_i32 : i32 to index
    %c0_42 = arith.constant 0 : index
    %c0_43 = arith.constant 0 : index
    %158 = vector.load %arg0[%157, %c0_42, %c0_43] : memref<8x8x128xbf16, #tpu.memory_space<vmem>>, vector<1x8x128xbf16>
    %159 = vector.shape_cast %158 : vector<1x8x128xbf16> to vector<8x128xbf16>
    %cst_44 = arith.constant dense<0.000000e+00> : vector<8x512xf32>
    %160 = tpu.matmul %159, %0, %cst_44 {dimension_numbers = #tpu.dot_dimension_numbers<[1], [0], [0], [1], [0, 0, 1, 1], [], []>} : vector<8x128xbf16>, vector<128x512xbf16>, vector<8x512xf32> -> vector<8x512xf32>
    %161 = vector.broadcast %2 : vector<1x512xf32> to vector<8x512xf32>
    %162 = arith.addf %160, %161 : vector<8x512xf32>
    %cst_45 = arith.constant dense<0.000000e+00> : vector<8x512xf32>
    %163 = tpu.matmul %152, %1, %cst_45 {dimension_numbers = #tpu.dot_dimension_numbers<[1], [0], [0], [1], [0, 0, 1, 1], [], []>} : vector<8x128xbf16>, vector<128x512xbf16>, vector<8x512xf32> -> vector<8x512xf32>
    %164 = arith.addf %162, %163 : vector<8x512xf32>
    %165 = vector.extract_strided_slice %164 {offsets = [0, 0], sizes = [8, 128], strides = [1, 1]} : vector<8x512xf32> to vector<8x128xf32>
    %166 = arith.negf %165 : vector<8x128xf32>
    %167 = math.exp %166 : vector<8x128xf32>
    %cst_46 = arith.constant 1.000000e+00 : f32
    %168 = vector.broadcast %cst_46 : f32 to vector<8x128xf32>
    %169 = arith.addf %168, %167 : vector<8x128xf32>
    %170 = arith.divf %168, %169 : vector<8x128xf32>
    %171 = vector.extract_strided_slice %164 {offsets = [0, 128], sizes = [8, 128], strides = [1, 1]} : vector<8x512xf32> to vector<8x128xf32>
    %172 = arith.negf %171 : vector<8x128xf32>
    %173 = math.exp %172 : vector<8x128xf32>
    %cst_47 = arith.constant 1.000000e+00 : f32
    %174 = vector.broadcast %cst_47 : f32 to vector<8x128xf32>
    %175 = arith.addf %174, %173 : vector<8x128xf32>
    %176 = arith.divf %174, %175 : vector<8x128xf32>
    %177 = vector.extract_strided_slice %164 {offsets = [0, 256], sizes = [8, 128], strides = [1, 1]} : vector<8x512xf32> to vector<8x128xf32>
    %178 = math.tanh %177 : vector<8x128xf32>
    %179 = vector.extract_strided_slice %164 {offsets = [0, 384], sizes = [8, 128], strides = [1, 1]} : vector<8x512xf32> to vector<8x128xf32>
    %180 = arith.negf %179 : vector<8x128xf32>
    %181 = math.exp %180 : vector<8x128xf32>
    %cst_48 = arith.constant 1.000000e+00 : f32
    %182 = vector.broadcast %cst_48 : f32 to vector<8x128xf32>
    %183 = arith.addf %182, %181 : vector<8x128xf32>
    %184 = arith.divf %182, %183 : vector<8x128xf32>
    %185 = arith.mulf %176, %149 : vector<8x128xf32>
    %186 = arith.mulf %170, %178 : vector<8x128xf32>
    %187 = arith.addf %185, %186 : vector<8x128xf32>
    %188 = math.tanh %187 : vector<8x128xf32>
    %189 = arith.mulf %184, %188 : vector<8x128xf32>
    %190 = arith.truncf %189 : vector<8x128xf32> to vector<8x128xbf16>
    %191 = arith.index_cast %c4_i32 : i32 to index
    %c0_49 = arith.constant 0 : index
    %c0_50 = arith.constant 0 : index
    %192 = vector.load %arg12[%191, %c0_49, %c0_50] : memref<8x8x128xbf16, #tpu.memory_space<vmem>>, vector<1x8x128xbf16>
    %193 = vector.shape_cast %192 : vector<1x8x128xbf16> to vector<8x128xbf16>
    %194 = vector.shape_cast %190 : vector<8x128xbf16> to vector<1x8x128xbf16>
    tpu.vector_store %arg12[%191, %c0_49, %c0_50], %194 {strides = array<i32>} : memref<8x8x128xbf16, #tpu.memory_space<vmem>>, vector<1x8x128xbf16>,
    %c5_i32 = arith.constant 5 : i32
    %195 = arith.index_cast %c5_i32 : i32 to index
    %c0_51 = arith.constant 0 : index
    %c0_52 = arith.constant 0 : index
    %196 = vector.load %arg0[%195, %c0_51, %c0_52] : memref<8x8x128xbf16, #tpu.memory_space<vmem>>, vector<1x8x128xbf16>
    %197 = vector.shape_cast %196 : vector<1x8x128xbf16> to vector<8x128xbf16>
    %cst_53 = arith.constant dense<0.000000e+00> : vector<8x512xf32>
    %198 = tpu.matmul %197, %0, %cst_53 {dimension_numbers = #tpu.dot_dimension_numbers<[1], [0], [0], [1], [0, 0, 1, 1], [], []>} : vector<8x128xbf16>, vector<128x512xbf16>, vector<8x512xf32> -> vector<8x512xf32>
    %199 = vector.broadcast %2 : vector<1x512xf32> to vector<8x512xf32>
    %200 = arith.addf %198, %199 : vector<8x512xf32>
    %cst_54 = arith.constant dense<0.000000e+00> : vector<8x512xf32>
    %201 = tpu.matmul %190, %1, %cst_54 {dimension_numbers = #tpu.dot_dimension_numbers<[1], [0], [0], [1], [0, 0, 1, 1], [], []>} : vector<8x128xbf16>, vector<128x512xbf16>, vector<8x512xf32> -> vector<8x512xf32>
    %202 = arith.addf %200, %201 : vector<8x512xf32>
    %203 = vector.extract_strided_slice %202 {offsets = [0, 0], sizes = [8, 128], strides = [1, 1]} : vector<8x512xf32> to vector<8x128xf32>
    %204 = arith.negf %203 : vector<8x128xf32>
    %205 = math.exp %204 : vector<8x128xf32>
    %cst_55 = arith.constant 1.000000e+00 : f32
    %206 = vector.broadcast %cst_55 : f32 to vector<8x128xf32>
    %207 = arith.addf %206, %205 : vector<8x128xf32>
    %208 = arith.divf %206, %207 : vector<8x128xf32>
    %209 = vector.extract_strided_slice %202 {offsets = [0, 128], sizes = [8, 128], strides = [1, 1]} : vector<8x512xf32> to vector<8x128xf32>
    %210 = arith.negf %209 : vector<8x128xf32>
    %211 = math.exp %210 : vector<8x128xf32>
    %cst_56 = arith.constant 1.000000e+00 : f32
    %212 = vector.broadcast %cst_56 : f32 to vector<8x128xf32>
    %213 = arith.addf %212, %211 : vector<8x128xf32>
    %214 = arith.divf %212, %213 : vector<8x128xf32>
    %215 = vector.extract_strided_slice %202 {offsets = [0, 256], sizes = [8, 128], strides = [1, 1]} : vector<8x512xf32> to vector<8x128xf32>
    %216 = math.tanh %215 : vector<8x128xf32>
    %217 = vector.extract_strided_slice %202 {offsets = [0, 384], sizes = [8, 128], strides = [1, 1]} : vector<8x512xf32> to vector<8x128xf32>
    %218 = arith.negf %217 : vector<8x128xf32>
    %219 = math.exp %218 : vector<8x128xf32>
    %cst_57 = arith.constant 1.000000e+00 : f32
    %220 = vector.broadcast %cst_57 : f32 to vector<8x128xf32>
    %221 = arith.addf %220, %219 : vector<8x128xf32>
    %222 = arith.divf %220, %221 : vector<8x128xf32>
    %223 = arith.mulf %214, %187 : vector<8x128xf32>
    %224 = arith.mulf %208, %216 : vector<8x128xf32>
    %225 = arith.addf %223, %224 : vector<8x128xf32>
    %226 = math.tanh %225 : vector<8x128xf32>
    %227 = arith.mulf %222, %226 : vector<8x128xf32>
    %228 = arith.truncf %227 : vector<8x128xf32> to vector<8x128xbf16>
    %229 = arith.index_cast %c5_i32 : i32 to index
    %c0_58 = arith.constant 0 : index
    %c0_59 = arith.constant 0 : index
    %230 = vector.load %arg12[%229, %c0_58, %c0_59] : memref<8x8x128xbf16, #tpu.memory_space<vmem>>, vector<1x8x128xbf16>
    %231 = vector.shape_cast %230 : vector<1x8x128xbf16> to vector<8x128xbf16>
    %232 = vector.shape_cast %228 : vector<8x128xbf16> to vector<1x8x128xbf16>
    tpu.vector_store %arg12[%229, %c0_58, %c0_59], %232 {strides = array<i32>} : memref<8x8x128xbf16, #tpu.memory_space<vmem>>, vector<1x8x128xbf16>,
    %c6_i32 = arith.constant 6 : i32
    %233 = arith.index_cast %c6_i32 : i32 to index
    %c0_60 = arith.constant 0 : index
    %c0_61 = arith.constant 0 : index
    %234 = vector.load %arg0[%233, %c0_60, %c0_61] : memref<8x8x128xbf16, #tpu.memory_space<vmem>>, vector<1x8x128xbf16>
    %235 = vector.shape_cast %234 : vector<1x8x128xbf16> to vector<8x128xbf16>
    %cst_62 = arith.constant dense<0.000000e+00> : vector<8x512xf32>
    %236 = tpu.matmul %235, %0, %cst_62 {dimension_numbers = #tpu.dot_dimension_numbers<[1], [0], [0], [1], [0, 0, 1, 1], [], []>} : vector<8x128xbf16>, vector<128x512xbf16>, vector<8x512xf32> -> vector<8x512xf32>
    %237 = vector.broadcast %2 : vector<1x512xf32> to vector<8x512xf32>
    %238 = arith.addf %236, %237 : vector<8x512xf32>
    %cst_63 = arith.constant dense<0.000000e+00> : vector<8x512xf32>
    %239 = tpu.matmul %228, %1, %cst_63 {dimension_numbers = #tpu.dot_dimension_numbers<[1], [0], [0], [1], [0, 0, 1, 1], [], []>} : vector<8x128xbf16>, vector<128x512xbf16>, vector<8x512xf32> -> vector<8x512xf32>
    %240 = arith.addf %238, %239 : vector<8x512xf32>
    %241 = vector.extract_strided_slice %240 {offsets = [0, 0], sizes = [8, 128], strides = [1, 1]} : vector<8x512xf32> to vector<8x128xf32>
    %242 = arith.negf %241 : vector<8x128xf32>
    %243 = math.exp %242 : vector<8x128xf32>
    %cst_64 = arith.constant 1.000000e+00 : f32
    %244 = vector.broadcast %cst_64 : f32 to vector<8x128xf32>
    %245 = arith.addf %244, %243 : vector<8x128xf32>
    %246 = arith.divf %244, %245 : vector<8x128xf32>
    %247 = vector.extract_strided_slice %240 {offsets = [0, 128], sizes = [8, 128], strides = [1, 1]} : vector<8x512xf32> to vector<8x128xf32>
    %248 = arith.negf %247 : vector<8x128xf32>
    %249 = math.exp %248 : vector<8x128xf32>
    %cst_65 = arith.constant 1.000000e+00 : f32
    %250 = vector.broadcast %cst_65 : f32 to vector<8x128xf32>
    %251 = arith.addf %250, %249 : vector<8x128xf32>
    %252 = arith.divf %250, %251 : vector<8x128xf32>
    %253 = vector.extract_strided_slice %240 {offsets = [0, 256], sizes = [8, 128], strides = [1, 1]} : vector<8x512xf32> to vector<8x128xf32>
    %254 = math.tanh %253 : vector<8x128xf32>
    %255 = vector.extract_strided_slice %240 {offsets = [0, 384], sizes = [8, 128], strides = [1, 1]} : vector<8x512xf32> to vector<8x128xf32>
    %256 = arith.negf %255 : vector<8x128xf32>
    %257 = math.exp %256 : vector<8x128xf32>
    %cst_66 = arith.constant 1.000000e+00 : f32
    %258 = vector.broadcast %cst_66 : f32 to vector<8x128xf32>
    %259 = arith.addf %258, %257 : vector<8x128xf32>
    %260 = arith.divf %258, %259 : vector<8x128xf32>
    %261 = arith.mulf %252, %225 : vector<8x128xf32>
    %262 = arith.mulf %246, %254 : vector<8x128xf32>
    %263 = arith.addf %261, %262 : vector<8x128xf32>
    %264 = math.tanh %263 : vector<8x128xf32>
    %265 = arith.mulf %260, %264 : vector<8x128xf32>
    %266 = arith.truncf %265 : vector<8x128xf32> to vector<8x128xbf16>
    %267 = arith.index_cast %c6_i32 : i32 to index
    %c0_67 = arith.constant 0 : index
    %c0_68 = arith.constant 0 : index
    %268 = vector.load %arg12[%267, %c0_67, %c0_68] : memref<8x8x128xbf16, #tpu.memory_space<vmem>>, vector<1x8x128xbf16>
    %269 = vector.shape_cast %268 : vector<1x8x128xbf16> to vector<8x128xbf16>
    %270 = vector.shape_cast %266 : vector<8x128xbf16> to vector<1x8x128xbf16>
    tpu.vector_store %arg12[%267, %c0_67, %c0_68], %270 {strides = array<i32>} : memref<8x8x128xbf16, #tpu.memory_space<vmem>>, vector<1x8x128xbf16>,
    %c7_i32 = arith.constant 7 : i32
    %271 = arith.index_cast %c7_i32 : i32 to index
    %c0_69 = arith.constant 0 : index
    %c0_70 = arith.constant 0 : index
    %272 = vector.load %arg0[%271, %c0_69, %c0_70] : memref<8x8x128xbf16, #tpu.memory_space<vmem>>, vector<1x8x128xbf16>
    %273 = vector.shape_cast %272 : vector<1x8x128xbf16> to vector<8x128xbf16>
    %cst_71 = arith.constant dense<0.000000e+00> : vector<8x512xf32>
    %274 = tpu.matmul %273, %0, %cst_71 {dimension_numbers = #tpu.dot_dimension_numbers<[1], [0], [0], [1], [0, 0, 1, 1], [], []>} : vector<8x128xbf16>, vector<128x512xbf16>, vector<8x512xf32> -> vector<8x512xf32>
    %275 = vector.broadcast %2 : vector<1x512xf32> to vector<8x512xf32>
    %276 = arith.addf %274, %275 : vector<8x512xf32>
    %cst_72 = arith.constant dense<0.000000e+00> : vector<8x512xf32>
    %277 = tpu.matmul %266, %1, %cst_72 {dimension_numbers = #tpu.dot_dimension_numbers<[1], [0], [0], [1], [0, 0, 1, 1], [], []>} : vector<8x128xbf16>, vector<128x512xbf16>, vector<8x512xf32> -> vector<8x512xf32>
    %278 = arith.addf %276, %277 : vector<8x512xf32>
    %279 = vector.extract_strided_slice %278 {offsets = [0, 0], sizes = [8, 128], strides = [1, 1]} : vector<8x512xf32> to vector<8x128xf32>
    %280 = arith.negf %279 : vector<8x128xf32>
    %281 = math.exp %280 : vector<8x128xf32>
    %cst_73 = arith.constant 1.000000e+00 : f32
    %282 = vector.broadcast %cst_73 : f32 to vector<8x128xf32>
    %283 = arith.addf %282, %281 : vector<8x128xf32>
    %284 = arith.divf %282, %283 : vector<8x128xf32>
    %285 = vector.extract_strided_slice %278 {offsets = [0, 128], sizes = [8, 128], strides = [1, 1]} : vector<8x512xf32> to vector<8x128xf32>
    %286 = arith.negf %285 : vector<8x128xf32>
    %287 = math.exp %286 : vector<8x128xf32>
    %cst_74 = arith.constant 1.000000e+00 : f32
    %288 = vector.broadcast %cst_74 : f32 to vector<8x128xf32>
    %289 = arith.addf %288, %287 : vector<8x128xf32>
    %290 = arith.divf %288, %289 : vector<8x128xf32>
    %291 = vector.extract_strided_slice %278 {offsets = [0, 256], sizes = [8, 128], strides = [1, 1]} : vector<8x512xf32> to vector<8x128xf32>
    %292 = math.tanh %291 : vector<8x128xf32>
    %293 = vector.extract_strided_slice %278 {offsets = [0, 384], sizes = [8, 128], strides = [1, 1]} : vector<8x512xf32> to vector<8x128xf32>
    %294 = arith.negf %293 : vector<8x128xf32>
    %295 = math.exp %294 : vector<8x128xf32>
    %cst_75 = arith.constant 1.000000e+00 : f32
    %296 = vector.broadcast %cst_75 : f32 to vector<8x128xf32>
    %297 = arith.addf %296, %295 : vector<8x128xf32>
    %298 = arith.divf %296, %297 : vector<8x128xf32>
    %299 = arith.mulf %290, %263 : vector<8x128xf32>
    %300 = arith.mulf %284, %292 : vector<8x128xf32>
    %301 = arith.addf %299, %300 : vector<8x128xf32>
    %302 = math.tanh %301 : vector<8x128xf32>
    %303 = arith.mulf %298, %302 : vector<8x128xf32>
    %304 = arith.truncf %303 : vector<8x128xf32> to vector<8x128xbf16>
    %305 = arith.index_cast %c7_i32 : i32 to index
    %c0_76 = arith.constant 0 : index
    %c0_77 = arith.constant 0 : index
    %306 = vector.load %arg12[%305, %c0_76, %c0_77] : memref<8x8x128xbf16, #tpu.memory_space<vmem>>, vector<1x8x128xbf16>
    %307 = vector.shape_cast %306 : vector<1x8x128xbf16> to vector<8x128xbf16>
    %308 = vector.shape_cast %304 : vector<8x128xbf16> to vector<1x8x128xbf16>
    tpu.vector_store %arg12[%305, %c0_76, %c0_77], %308 {strides = array<i32>} : memref<8x8x128xbf16, #tpu.memory_space<vmem>>, vector<1x8x128xbf16>,
    %c8_i32 = arith.constant 8 : i32
    %309 = arith.extf %304 : vector<8x128xbf16> to vector<8x128xf32>
    %c0_78 = arith.constant 0 : index
    %c0_79 = arith.constant 0 : index
    %c0_80 = arith.constant 0 : index
    %310 = vector.load %arg10[%c0_78, %c0_79, %c0_80] : memref<2x8x128xf32, #tpu.memory_space<vmem>>, vector<1x8x128xf32>
    %311 = vector.shape_cast %310 : vector<1x8x128xf32> to vector<8x128xf32>
    %312 = vector.shape_cast %309 : vector<8x128xf32> to vector<1x8x128xf32>
    tpu.vector_store %arg10[%c0_78, %c0_79, %c0_80], %312 {strides = array<i32>} : memref<2x8x128xf32, #tpu.memory_space<vmem>>, vector<1x8x128xf32>,
    %c0_81 = arith.constant 0 : index
    %c0_82 = arith.constant 0 : index
    %c0_83 = arith.constant 0 : index
    %313 = vector.load %arg11[%c0_81, %c0_82, %c0_83] : memref<2x8x128xf32, #tpu.memory_space<vmem>>, vector<1x8x128xf32>
    %314 = vector.shape_cast %313 : vector<1x8x128xf32> to vector<8x128xf32>
    %315 = vector.shape_cast %301 : vector<8x128xf32> to vector<1x8x128xf32>
    tpu.vector_store %arg11[%c0_81, %c0_82, %c0_83], %315 {strides = array<i32>} : memref<2x8x128xf32, #tpu.memory_space<vmem>>, vector<1x8x128xf32>,
    %c0_84 = arith.constant 0 : index
    %c0_85 = arith.constant 0 : index
    %316 = vector.load %arg4[%c0_84, %c0_85] : memref<128x512xbf16, #tpu.memory_space<vmem>>, vector<128x512xbf16>
    %c0_86 = arith.constant 0 : index
    %c0_87 = arith.constant 0 : index
    %317 = vector.load %arg5[%c0_86, %c0_87] : memref<128x512xbf16, #tpu.memory_space<vmem>>, vector<128x512xbf16>
    %c0_88 = arith.constant 0 : index
    %c0_89 = arith.constant 0 : index
    %318 = vector.load %arg6[%c0_88, %c0_89] : memref<1x512xf32, #tpu.memory_space<vmem>>, vector<1x512xf32>
    %cst_90 = arith.constant 0.000000e+00 : bf16
    %319 = vector.broadcast %cst_90 : bf16 to vector<8x128xbf16>
    %cst_91 = arith.constant 0.000000e+00 : f32
    %320 = vector.broadcast %cst_91 : f32 to vector<8x128xf32>
    %c0_i32_92 = arith.constant 0 : i32
    %321 = arith.index_cast %c0_i32_92 : i32 to index
    %c0_93 = arith.constant 0 : index
    %c0_94 = arith.constant 0 : index
    %322 = vector.load %arg12[%321, %c0_93, %c0_94] : memref<8x8x128xbf16, #tpu.memory_space<vmem>>, vector<1x8x128xbf16>
    %323 = vector.shape_cast %322 : vector<1x8x128xbf16> to vector<8x128xbf16>
    %cst_95 = arith.constant dense<0.000000e+00> : vector<8x512xf32>
    %324 = tpu.matmul %323, %316, %cst_95 {dimension_numbers = #tpu.dot_dimension_numbers<[1], [0], [0], [1], [0, 0, 1, 1], [], []>} : vector<8x128xbf16>, vector<128x512xbf16>, vector<8x512xf32> -> vector<8x512xf32>
    %325 = vector.broadcast %318 : vector<1x512xf32> to vector<8x512xf32>
    %326 = arith.addf %324, %325 : vector<8x512xf32>
    %cst_96 = arith.constant dense<0.000000e+00> : vector<8x512xf32>
    %327 = tpu.matmul %319, %317, %cst_96 {dimension_numbers = #tpu.dot_dimension_numbers<[1], [0], [0], [1], [0, 0, 1, 1], [], []>} : vector<8x128xbf16>, vector<128x512xbf16>, vector<8x512xf32> -> vector<8x512xf32>
    %328 = arith.addf %326, %327 : vector<8x512xf32>
    %329 = vector.extract_strided_slice %328 {offsets = [0, 0], sizes = [8, 128], strides = [1, 1]} : vector<8x512xf32> to vector<8x128xf32>
    %330 = arith.negf %329 : vector<8x128xf32>
    %331 = math.exp %330 : vector<8x128xf32>
    %cst_97 = arith.constant 1.000000e+00 : f32
    %332 = vector.broadcast %cst_97 : f32 to vector<8x128xf32>
    %333 = arith.addf %332, %331 : vector<8x128xf32>
    %334 = arith.divf %332, %333 : vector<8x128xf32>
    %335 = vector.extract_strided_slice %328 {offsets = [0, 128], sizes = [8, 128], strides = [1, 1]} : vector<8x512xf32> to vector<8x128xf32>
    %336 = arith.negf %335 : vector<8x128xf32>
    %337 = math.exp %336 : vector<8x128xf32>
    %cst_98 = arith.constant 1.000000e+00 : f32
    %338 = vector.broadcast %cst_98 : f32 to vector<8x128xf32>
    %339 = arith.addf %338, %337 : vector<8x128xf32>
    %340 = arith.divf %338, %339 : vector<8x128xf32>
    %341 = vector.extract_strided_slice %328 {offsets = [0, 256], sizes = [8, 128], strides = [1, 1]} : vector<8x512xf32> to vector<8x128xf32>
    %342 = math.tanh %341 : vector<8x128xf32>
    %343 = vector.extract_strided_slice %328 {offsets = [0, 384], sizes = [8, 128], strides = [1, 1]} : vector<8x512xf32> to vector<8x128xf32>
    %344 = arith.negf %343 : vector<8x128xf32>
    %345 = math.exp %344 : vector<8x128xf32>
    %cst_99 = arith.constant 1.000000e+00 : f32
    %346 = vector.broadcast %cst_99 : f32 to vector<8x128xf32>
    %347 = arith.addf %346, %345 : vector<8x128xf32>
    %348 = arith.divf %346, %347 : vector<8x128xf32>
    %349 = arith.mulf %340, %320 : vector<8x128xf32>
    %350 = arith.mulf %334, %342 : vector<8x128xf32>
    %351 = arith.addf %349, %350 : vector<8x128xf32>
    %352 = math.tanh %351 : vector<8x128xf32>
    %353 = arith.mulf %348, %352 : vector<8x128xf32>
    %354 = arith.truncf %353 : vector<8x128xf32> to vector<8x128xbf16>
    %355 = arith.index_cast %c0_i32_92 : i32 to index
    %c0_100 = arith.constant 0 : index
    %c0_101 = arith.constant 0 : index
    %356 = vector.load %arg13[%355, %c0_100, %c0_101] : memref<8x8x128xbf16, #tpu.memory_space<vmem>>, vector<1x8x128xbf16>
    %357 = vector.shape_cast %356 : vector<1x8x128xbf16> to vector<8x128xbf16>
    %358 = vector.shape_cast %354 : vector<8x128xbf16> to vector<1x8x128xbf16>
    tpu.vector_store %arg13[%355, %c0_100, %c0_101], %358 {strides = array<i32>} : memref<8x8x128xbf16, #tpu.memory_space<vmem>>, vector<1x8x128xbf16>,
    %c1_i32_102 = arith.constant 1 : i32
    %359 = arith.index_cast %c1_i32_102 : i32 to index
    %c0_103 = arith.constant 0 : index
    %c0_104 = arith.constant 0 : index
    %360 = vector.load %arg12[%359, %c0_103, %c0_104] : memref<8x8x128xbf16, #tpu.memory_space<vmem>>, vector<1x8x128xbf16>
    %361 = vector.shape_cast %360 : vector<1x8x128xbf16> to vector<8x128xbf16>
    %cst_105 = arith.constant dense<0.000000e+00> : vector<8x512xf32>
    %362 = tpu.matmul %361, %316, %cst_105 {dimension_numbers = #tpu.dot_dimension_numbers<[1], [0], [0], [1], [0, 0, 1, 1], [], []>} : vector<8x128xbf16>, vector<128x512xbf16>, vector<8x512xf32> -> vector<8x512xf32>
    %363 = vector.broadcast %318 : vector<1x512xf32> to vector<8x512xf32>
    %364 = arith.addf %362, %363 : vector<8x512xf32>
    %cst_106 = arith.constant dense<0.000000e+00> : vector<8x512xf32>
    %365 = tpu.matmul %354, %317, %cst_106 {dimension_numbers = #tpu.dot_dimension_numbers<[1], [0], [0], [1], [0, 0, 1, 1], [], []>} : vector<8x128xbf16>, vector<128x512xbf16>, vector<8x512xf32> -> vector<8x512xf32>
    %366 = arith.addf %364, %365 : vector<8x512xf32>
    %367 = vector.extract_strided_slice %366 {offsets = [0, 0], sizes = [8, 128], strides = [1, 1]} : vector<8x512xf32> to vector<8x128xf32>
    %368 = arith.negf %367 : vector<8x128xf32>
    %369 = math.exp %368 : vector<8x128xf32>
    %cst_107 = arith.constant 1.000000e+00 : f32
    %370 = vector.broadcast %cst_107 : f32 to vector<8x128xf32>
    %371 = arith.addf %370, %369 : vector<8x128xf32>
    %372 = arith.divf %370, %371 : vector<8x128xf32>
    %373 = vector.extract_strided_slice %366 {offsets = [0, 128], sizes = [8, 128], strides = [1, 1]} : vector<8x512xf32> to vector<8x128xf32>
    %374 = arith.negf %373 : vector<8x128xf32>
    %375 = math.exp %374 : vector<8x128xf32>
    %cst_108 = arith.constant 1.000000e+00 : f32
    %376 = vector.broadcast %cst_108 : f32 to vector<8x128xf32>
    %377 = arith.addf %376, %375 : vector<8x128xf32>
    %378 = arith.divf %376, %377 : vector<8x128xf32>
    %379 = vector.extract_strided_slice %366 {offsets = [0, 256], sizes = [8, 128], strides = [1, 1]} : vector<8x512xf32> to vector<8x128xf32>
    %380 = math.tanh %379 : vector<8x128xf32>
    %381 = vector.extract_strided_slice %366 {offsets = [0, 384], sizes = [8, 128], strides = [1, 1]} : vector<8x512xf32> to vector<8x128xf32>
    %382 = arith.negf %381 : vector<8x128xf32>
    %383 = math.exp %382 : vector<8x128xf32>
    %cst_109 = arith.constant 1.000000e+00 : f32
    %384 = vector.broadcast %cst_109 : f32 to vector<8x128xf32>
    %385 = arith.addf %384, %383 : vector<8x128xf32>
    %386 = arith.divf %384, %385 : vector<8x128xf32>
    %387 = arith.mulf %378, %351 : vector<8x128xf32>
    %388 = arith.mulf %372, %380 : vector<8x128xf32>
    %389 = arith.addf %387, %388 : vector<8x128xf32>
    %390 = math.tanh %389 : vector<8x128xf32>
    %391 = arith.mulf %386, %390 : vector<8x128xf32>
    %392 = arith.truncf %391 : vector<8x128xf32> to vector<8x128xbf16>
    %393 = arith.index_cast %c1_i32_102 : i32 to index
    %c0_110 = arith.constant 0 : index
    %c0_111 = arith.constant 0 : index
    %394 = vector.load %arg13[%393, %c0_110, %c0_111] : memref<8x8x128xbf16, #tpu.memory_space<vmem>>, vector<1x8x128xbf16>
    %395 = vector.shape_cast %394 : vector<1x8x128xbf16> to vector<8x128xbf16>
    %396 = vector.shape_cast %392 : vector<8x128xbf16> to vector<1x8x128xbf16>
    tpu.vector_store %arg13[%393, %c0_110, %c0_111], %396 {strides = array<i32>} : memref<8x8x128xbf16, #tpu.memory_space<vmem>>, vector<1x8x128xbf16>,
    %c2_i32_112 = arith.constant 2 : i32
    %397 = arith.index_cast %c2_i32_112 : i32 to index
    %c0_113 = arith.constant 0 : index
    %c0_114 = arith.constant 0 : index
    %398 = vector.load %arg12[%397, %c0_113, %c0_114] : memref<8x8x128xbf16, #tpu.memory_space<vmem>>, vector<1x8x128xbf16>
    %399 = vector.shape_cast %398 : vector<1x8x128xbf16> to vector<8x128xbf16>
    %cst_115 = arith.constant dense<0.000000e+00> : vector<8x512xf32>
    %400 = tpu.matmul %399, %316, %cst_115 {dimension_numbers = #tpu.dot_dimension_numbers<[1], [0], [0], [1], [0, 0, 1, 1], [], []>} : vector<8x128xbf16>, vector<128x512xbf16>, vector<8x512xf32> -> vector<8x512xf32>
    %401 = vector.broadcast %318 : vector<1x512xf32> to vector<8x512xf32>
    %402 = arith.addf %400, %401 : vector<8x512xf32>
    %cst_116 = arith.constant dense<0.000000e+00> : vector<8x512xf32>
    %403 = tpu.matmul %392, %317, %cst_116 {dimension_numbers = #tpu.dot_dimension_numbers<[1], [0], [0], [1], [0, 0, 1, 1], [], []>} : vector<8x128xbf16>, vector<128x512xbf16>, vector<8x512xf32> -> vector<8x512xf32>
    %404 = arith.addf %402, %403 : vector<8x512xf32>
    %405 = vector.extract_strided_slice %404 {offsets = [0, 0], sizes = [8, 128], strides = [1, 1]} : vector<8x512xf32> to vector<8x128xf32>
    %406 = arith.negf %405 : vector<8x128xf32>
    %407 = math.exp %406 : vector<8x128xf32>
    %cst_117 = arith.constant 1.000000e+00 : f32
    %408 = vector.broadcast %cst_117 : f32 to vector<8x128xf32>
    %409 = arith.addf %408, %407 : vector<8x128xf32>
    %410 = arith.divf %408, %409 : vector<8x128xf32>
    %411 = vector.extract_strided_slice %404 {offsets = [0, 128], sizes = [8, 128], strides = [1, 1]} : vector<8x512xf32> to vector<8x128xf32>
    %412 = arith.negf %411 : vector<8x128xf32>
    %413 = math.exp %412 : vector<8x128xf32>
    %cst_118 = arith.constant 1.000000e+00 : f32
    %414 = vector.broadcast %cst_118 : f32 to vector<8x128xf32>
    %415 = arith.addf %414, %413 : vector<8x128xf32>
    %416 = arith.divf %414, %415 : vector<8x128xf32>
    %417 = vector.extract_strided_slice %404 {offsets = [0, 256], sizes = [8, 128], strides = [1, 1]} : vector<8x512xf32> to vector<8x128xf32>
    %418 = math.tanh %417 : vector<8x128xf32>
    %419 = vector.extract_strided_slice %404 {offsets = [0, 384], sizes = [8, 128], strides = [1, 1]} : vector<8x512xf32> to vector<8x128xf32>
    %420 = arith.negf %419 : vector<8x128xf32>
    %421 = math.exp %420 : vector<8x128xf32>
    %cst_119 = arith.constant 1.000000e+00 : f32
    %422 = vector.broadcast %cst_119 : f32 to vector<8x128xf32>
    %423 = arith.addf %422, %421 : vector<8x128xf32>
    %424 = arith.divf %422, %423 : vector<8x128xf32>
    %425 = arith.mulf %416, %389 : vector<8x128xf32>
    %426 = arith.mulf %410, %418 : vector<8x128xf32>
    %427 = arith.addf %425, %426 : vector<8x128xf32>
    %428 = math.tanh %427 : vector<8x128xf32>
    %429 = arith.mulf %424, %428 : vector<8x128xf32>
    %430 = arith.truncf %429 : vector<8x128xf32> to vector<8x128xbf16>
    %431 = arith.index_cast %c2_i32_112 : i32 to index
    %c0_120 = arith.constant 0 : index
    %c0_121 = arith.constant 0 : index
    %432 = vector.load %arg13[%431, %c0_120, %c0_121] : memref<8x8x128xbf16, #tpu.memory_space<vmem>>, vector<1x8x128xbf16>
    %433 = vector.shape_cast %432 : vector<1x8x128xbf16> to vector<8x128xbf16>
    %434 = vector.shape_cast %430 : vector<8x128xbf16> to vector<1x8x128xbf16>
    tpu.vector_store %arg13[%431, %c0_120, %c0_121], %434 {strides = array<i32>} : memref<8x8x128xbf16, #tpu.memory_space<vmem>>, vector<1x8x128xbf16>,
    %c3_i32_122 = arith.constant 3 : i32
    %435 = arith.index_cast %c3_i32_122 : i32 to index
    %c0_123 = arith.constant 0 : index
    %c0_124 = arith.constant 0 : index
    %436 = vector.load %arg12[%435, %c0_123, %c0_124] : memref<8x8x128xbf16, #tpu.memory_space<vmem>>, vector<1x8x128xbf16>
    %437 = vector.shape_cast %436 : vector<1x8x128xbf16> to vector<8x128xbf16>
    %cst_125 = arith.constant dense<0.000000e+00> : vector<8x512xf32>
    %438 = tpu.matmul %437, %316, %cst_125 {dimension_numbers = #tpu.dot_dimension_numbers<[1], [0], [0], [1], [0, 0, 1, 1], [], []>} : vector<8x128xbf16>, vector<128x512xbf16>, vector<8x512xf32> -> vector<8x512xf32>
    %439 = vector.broadcast %318 : vector<1x512xf32> to vector<8x512xf32>
    %440 = arith.addf %438, %439 : vector<8x512xf32>
    %cst_126 = arith.constant dense<0.000000e+00> : vector<8x512xf32>
    %441 = tpu.matmul %430, %317, %cst_126 {dimension_numbers = #tpu.dot_dimension_numbers<[1], [0], [0], [1], [0, 0, 1, 1], [], []>} : vector<8x128xbf16>, vector<128x512xbf16>, vector<8x512xf32> -> vector<8x512xf32>
    %442 = arith.addf %440, %441 : vector<8x512xf32>
    %443 = vector.extract_strided_slice %442 {offsets = [0, 0], sizes = [8, 128], strides = [1, 1]} : vector<8x512xf32> to vector<8x128xf32>
    %444 = arith.negf %443 : vector<8x128xf32>
    %445 = math.exp %444 : vector<8x128xf32>
    %cst_127 = arith.constant 1.000000e+00 : f32
    %446 = vector.broadcast %cst_127 : f32 to vector<8x128xf32>
    %447 = arith.addf %446, %445 : vector<8x128xf32>
    %448 = arith.divf %446, %447 : vector<8x128xf32>
    %449 = vector.extract_strided_slice %442 {offsets = [0, 128], sizes = [8, 128], strides = [1, 1]} : vector<8x512xf32> to vector<8x128xf32>
    %450 = arith.negf %449 : vector<8x128xf32>
    %451 = math.exp %450 : vector<8x128xf32>
    %cst_128 = arith.constant 1.000000e+00 : f32
    %452 = vector.broadcast %cst_128 : f32 to vector<8x128xf32>
    %453 = arith.addf %452, %451 : vector<8x128xf32>
    %454 = arith.divf %452, %453 : vector<8x128xf32>
    %455 = vector.extract_strided_slice %442 {offsets = [0, 256], sizes = [8, 128], strides = [1, 1]} : vector<8x512xf32> to vector<8x128xf32>
    %456 = math.tanh %455 : vector<8x128xf32>
    %457 = vector.extract_strided_slice %442 {offsets = [0, 384], sizes = [8, 128], strides = [1, 1]} : vector<8x512xf32> to vector<8x128xf32>
    %458 = arith.negf %457 : vector<8x128xf32>
    %459 = math.exp %458 : vector<8x128xf32>
    %cst_129 = arith.constant 1.000000e+00 : f32
    %460 = vector.broadcast %cst_129 : f32 to vector<8x128xf32>
    %461 = arith.addf %460, %459 : vector<8x128xf32>
    %462 = arith.divf %460, %461 : vector<8x128xf32>
    %463 = arith.mulf %454, %427 : vector<8x128xf32>
    %464 = arith.mulf %448, %456 : vector<8x128xf32>
    %465 = arith.addf %463, %464 : vector<8x128xf32>
    %466 = math.tanh %465 : vector<8x128xf32>
    %467 = arith.mulf %462, %466 : vector<8x128xf32>
    %468 = arith.truncf %467 : vector<8x128xf32> to vector<8x128xbf16>
    %469 = arith.index_cast %c3_i32_122 : i32 to index
    %c0_130 = arith.constant 0 : index
    %c0_131 = arith.constant 0 : index
    %470 = vector.load %arg13[%469, %c0_130, %c0_131] : memref<8x8x128xbf16, #tpu.memory_space<vmem>>, vector<1x8x128xbf16>
    %471 = vector.shape_cast %470 : vector<1x8x128xbf16> to vector<8x128xbf16>
    %472 = vector.shape_cast %468 : vector<8x128xbf16> to vector<1x8x128xbf16>
    tpu.vector_store %arg13[%469, %c0_130, %c0_131], %472 {strides = array<i32>} : memref<8x8x128xbf16, #tpu.memory_space<vmem>>, vector<1x8x128xbf16>,
    %c4_i32_132 = arith.constant 4 : i32
    %473 = arith.index_cast %c4_i32_132 : i32 to index
    %c0_133 = arith.constant 0 : index
    %c0_134 = arith.constant 0 : index
    %474 = vector.load %arg12[%473, %c0_133, %c0_134] : memref<8x8x128xbf16, #tpu.memory_space<vmem>>, vector<1x8x128xbf16>
    %475 = vector.shape_cast %474 : vector<1x8x128xbf16> to vector<8x128xbf16>
    %cst_135 = arith.constant dense<0.000000e+00> : vector<8x512xf32>
    %476 = tpu.matmul %475, %316, %cst_135 {dimension_numbers = #tpu.dot_dimension_numbers<[1], [0], [0], [1], [0, 0, 1, 1], [], []>} : vector<8x128xbf16>, vector<128x512xbf16>, vector<8x512xf32> -> vector<8x512xf32>
    %477 = vector.broadcast %318 : vector<1x512xf32> to vector<8x512xf32>
    %478 = arith.addf %476, %477 : vector<8x512xf32>
    %cst_136 = arith.constant dense<0.000000e+00> : vector<8x512xf32>
    %479 = tpu.matmul %468, %317, %cst_136 {dimension_numbers = #tpu.dot_dimension_numbers<[1], [0], [0], [1], [0, 0, 1, 1], [], []>} : vector<8x128xbf16>, vector<128x512xbf16>, vector<8x512xf32> -> vector<8x512xf32>
    %480 = arith.addf %478, %479 : vector<8x512xf32>
    %481 = vector.extract_strided_slice %480 {offsets = [0, 0], sizes = [8, 128], strides = [1, 1]} : vector<8x512xf32> to vector<8x128xf32>
    %482 = arith.negf %481 : vector<8x128xf32>
    %483 = math.exp %482 : vector<8x128xf32>
    %cst_137 = arith.constant 1.000000e+00 : f32
    %484 = vector.broadcast %cst_137 : f32 to vector<8x128xf32>
    %485 = arith.addf %484, %483 : vector<8x128xf32>
    %486 = arith.divf %484, %485 : vector<8x128xf32>
    %487 = vector.extract_strided_slice %480 {offsets = [0, 128], sizes = [8, 128], strides = [1, 1]} : vector<8x512xf32> to vector<8x128xf32>
    %488 = arith.negf %487 : vector<8x128xf32>
    %489 = math.exp %488 : vector<8x128xf32>
    %cst_138 = arith.constant 1.000000e+00 : f32
    %490 = vector.broadcast %cst_138 : f32 to vector<8x128xf32>
    %491 = arith.addf %490, %489 : vector<8x128xf32>
    %492 = arith.divf %490, %491 : vector<8x128xf32>
    %493 = vector.extract_strided_slice %480 {offsets = [0, 256], sizes = [8, 128], strides = [1, 1]} : vector<8x512xf32> to vector<8x128xf32>
    %494 = math.tanh %493 : vector<8x128xf32>
    %495 = vector.extract_strided_slice %480 {offsets = [0, 384], sizes = [8, 128], strides = [1, 1]} : vector<8x512xf32> to vector<8x128xf32>
    %496 = arith.negf %495 : vector<8x128xf32>
    %497 = math.exp %496 : vector<8x128xf32>
    %cst_139 = arith.constant 1.000000e+00 : f32
    %498 = vector.broadcast %cst_139 : f32 to vector<8x128xf32>
    %499 = arith.addf %498, %497 : vector<8x128xf32>
    %500 = arith.divf %498, %499 : vector<8x128xf32>
    %501 = arith.mulf %492, %465 : vector<8x128xf32>
    %502 = arith.mulf %486, %494 : vector<8x128xf32>
    %503 = arith.addf %501, %502 : vector<8x128xf32>
    %504 = math.tanh %503 : vector<8x128xf32>
    %505 = arith.mulf %500, %504 : vector<8x128xf32>
    %506 = arith.truncf %505 : vector<8x128xf32> to vector<8x128xbf16>
    %507 = arith.index_cast %c4_i32_132 : i32 to index
    %c0_140 = arith.constant 0 : index
    %c0_141 = arith.constant 0 : index
    %508 = vector.load %arg13[%507, %c0_140, %c0_141] : memref<8x8x128xbf16, #tpu.memory_space<vmem>>, vector<1x8x128xbf16>
    %509 = vector.shape_cast %508 : vector<1x8x128xbf16> to vector<8x128xbf16>
    %510 = vector.shape_cast %506 : vector<8x128xbf16> to vector<1x8x128xbf16>
    tpu.vector_store %arg13[%507, %c0_140, %c0_141], %510 {strides = array<i32>} : memref<8x8x128xbf16, #tpu.memory_space<vmem>>, vector<1x8x128xbf16>,
    %c5_i32_142 = arith.constant 5 : i32
    %511 = arith.index_cast %c5_i32_142 : i32 to index
    %c0_143 = arith.constant 0 : index
    %c0_144 = arith.constant 0 : index
    %512 = vector.load %arg12[%511, %c0_143, %c0_144] : memref<8x8x128xbf16, #tpu.memory_space<vmem>>, vector<1x8x128xbf16>
    %513 = vector.shape_cast %512 : vector<1x8x128xbf16> to vector<8x128xbf16>
    %cst_145 = arith.constant dense<0.000000e+00> : vector<8x512xf32>
    %514 = tpu.matmul %513, %316, %cst_145 {dimension_numbers = #tpu.dot_dimension_numbers<[1], [0], [0], [1], [0, 0, 1, 1], [], []>} : vector<8x128xbf16>, vector<128x512xbf16>, vector<8x512xf32> -> vector<8x512xf32>
    %515 = vector.broadcast %318 : vector<1x512xf32> to vector<8x512xf32>
    %516 = arith.addf %514, %515 : vector<8x512xf32>
    %cst_146 = arith.constant dense<0.000000e+00> : vector<8x512xf32>
    %517 = tpu.matmul %506, %317, %cst_146 {dimension_numbers = #tpu.dot_dimension_numbers<[1], [0], [0], [1], [0, 0, 1, 1], [], []>} : vector<8x128xbf16>, vector<128x512xbf16>, vector<8x512xf32> -> vector<8x512xf32>
    %518 = arith.addf %516, %517 : vector<8x512xf32>
    %519 = vector.extract_strided_slice %518 {offsets = [0, 0], sizes = [8, 128], strides = [1, 1]} : vector<8x512xf32> to vector<8x128xf32>
    %520 = arith.negf %519 : vector<8x128xf32>
    %521 = math.exp %520 : vector<8x128xf32>
    %cst_147 = arith.constant 1.000000e+00 : f32
    %522 = vector.broadcast %cst_147 : f32 to vector<8x128xf32>
    %523 = arith.addf %522, %521 : vector<8x128xf32>
    %524 = arith.divf %522, %523 : vector<8x128xf32>
    %525 = vector.extract_strided_slice %518 {offsets = [0, 128], sizes = [8, 128], strides = [1, 1]} : vector<8x512xf32> to vector<8x128xf32>
    %526 = arith.negf %525 : vector<8x128xf32>
    %527 = math.exp %526 : vector<8x128xf32>
    %cst_148 = arith.constant 1.000000e+00 : f32
    %528 = vector.broadcast %cst_148 : f32 to vector<8x128xf32>
    %529 = arith.addf %528, %527 : vector<8x128xf32>
    %530 = arith.divf %528, %529 : vector<8x128xf32>
    %531 = vector.extract_strided_slice %518 {offsets = [0, 256], sizes = [8, 128], strides = [1, 1]} : vector<8x512xf32> to vector<8x128xf32>
    %532 = math.tanh %531 : vector<8x128xf32>
    %533 = vector.extract_strided_slice %518 {offsets = [0, 384], sizes = [8, 128], strides = [1, 1]} : vector<8x512xf32> to vector<8x128xf32>
    %534 = arith.negf %533 : vector<8x128xf32>
    %535 = math.exp %534 : vector<8x128xf32>
    %cst_149 = arith.constant 1.000000e+00 : f32
    %536 = vector.broadcast %cst_149 : f32 to vector<8x128xf32>
    %537 = arith.addf %536, %535 : vector<8x128xf32>
    %538 = arith.divf %536, %537 : vector<8x128xf32>
    %539 = arith.mulf %530, %503 : vector<8x128xf32>
    %540 = arith.mulf %524, %532 : vector<8x128xf32>
    %541 = arith.addf %539, %540 : vector<8x128xf32>
    %542 = math.tanh %541 : vector<8x128xf32>
    %543 = arith.mulf %538, %542 : vector<8x128xf32>
    %544 = arith.truncf %543 : vector<8x128xf32> to vector<8x128xbf16>
    %545 = arith.index_cast %c5_i32_142 : i32 to index
    %c0_150 = arith.constant 0 : index
    %c0_151 = arith.constant 0 : index
    %546 = vector.load %arg13[%545, %c0_150, %c0_151] : memref<8x8x128xbf16, #tpu.memory_space<vmem>>, vector<1x8x128xbf16>
    %547 = vector.shape_cast %546 : vector<1x8x128xbf16> to vector<8x128xbf16>
    %548 = vector.shape_cast %544 : vector<8x128xbf16> to vector<1x8x128xbf16>
    tpu.vector_store %arg13[%545, %c0_150, %c0_151], %548 {strides = array<i32>} : memref<8x8x128xbf16, #tpu.memory_space<vmem>>, vector<1x8x128xbf16>,
    %c6_i32_152 = arith.constant 6 : i32
    %549 = arith.index_cast %c6_i32_152 : i32 to index
    %c0_153 = arith.constant 0 : index
    %c0_154 = arith.constant 0 : index
    %550 = vector.load %arg12[%549, %c0_153, %c0_154] : memref<8x8x128xbf16, #tpu.memory_space<vmem>>, vector<1x8x128xbf16>
    %551 = vector.shape_cast %550 : vector<1x8x128xbf16> to vector<8x128xbf16>
    %cst_155 = arith.constant dense<0.000000e+00> : vector<8x512xf32>
    %552 = tpu.matmul %551, %316, %cst_155 {dimension_numbers = #tpu.dot_dimension_numbers<[1], [0], [0], [1], [0, 0, 1, 1], [], []>} : vector<8x128xbf16>, vector<128x512xbf16>, vector<8x512xf32> -> vector<8x512xf32>
    %553 = vector.broadcast %318 : vector<1x512xf32> to vector<8x512xf32>
    %554 = arith.addf %552, %553 : vector<8x512xf32>
    %cst_156 = arith.constant dense<0.000000e+00> : vector<8x512xf32>
    %555 = tpu.matmul %544, %317, %cst_156 {dimension_numbers = #tpu.dot_dimension_numbers<[1], [0], [0], [1], [0, 0, 1, 1], [], []>} : vector<8x128xbf16>, vector<128x512xbf16>, vector<8x512xf32> -> vector<8x512xf32>
    %556 = arith.addf %554, %555 : vector<8x512xf32>
    %557 = vector.extract_strided_slice %556 {offsets = [0, 0], sizes = [8, 128], strides = [1, 1]} : vector<8x512xf32> to vector<8x128xf32>
    %558 = arith.negf %557 : vector<8x128xf32>
    %559 = math.exp %558 : vector<8x128xf32>
    %cst_157 = arith.constant 1.000000e+00 : f32
    %560 = vector.broadcast %cst_157 : f32 to vector<8x128xf32>
    %561 = arith.addf %560, %559 : vector<8x128xf32>
    %562 = arith.divf %560, %561 : vector<8x128xf32>
    %563 = vector.extract_strided_slice %556 {offsets = [0, 128], sizes = [8, 128], strides = [1, 1]} : vector<8x512xf32> to vector<8x128xf32>
    %564 = arith.negf %563 : vector<8x128xf32>
    %565 = math.exp %564 : vector<8x128xf32>
    %cst_158 = arith.constant 1.000000e+00 : f32
    %566 = vector.broadcast %cst_158 : f32 to vector<8x128xf32>
    %567 = arith.addf %566, %565 : vector<8x128xf32>
    %568 = arith.divf %566, %567 : vector<8x128xf32>
    %569 = vector.extract_strided_slice %556 {offsets = [0, 256], sizes = [8, 128], strides = [1, 1]} : vector<8x512xf32> to vector<8x128xf32>
    %570 = math.tanh %569 : vector<8x128xf32>
    %571 = vector.extract_strided_slice %556 {offsets = [0, 384], sizes = [8, 128], strides = [1, 1]} : vector<8x512xf32> to vector<8x128xf32>
    %572 = arith.negf %571 : vector<8x128xf32>
    %573 = math.exp %572 : vector<8x128xf32>
    %cst_159 = arith.constant 1.000000e+00 : f32
    %574 = vector.broadcast %cst_159 : f32 to vector<8x128xf32>
    %575 = arith.addf %574, %573 : vector<8x128xf32>
    %576 = arith.divf %574, %575 : vector<8x128xf32>
    %577 = arith.mulf %568, %541 : vector<8x128xf32>
    %578 = arith.mulf %562, %570 : vector<8x128xf32>
    %579 = arith.addf %577, %578 : vector<8x128xf32>
    %580 = math.tanh %579 : vector<8x128xf32>
    %581 = arith.mulf %576, %580 : vector<8x128xf32>
    %582 = arith.truncf %581 : vector<8x128xf32> to vector<8x128xbf16>
    %583 = arith.index_cast %c6_i32_152 : i32 to index
    %c0_160 = arith.constant 0 : index
    %c0_161 = arith.constant 0 : index
    %584 = vector.load %arg13[%583, %c0_160, %c0_161] : memref<8x8x128xbf16, #tpu.memory_space<vmem>>, vector<1x8x128xbf16>
    %585 = vector.shape_cast %584 : vector<1x8x128xbf16> to vector<8x128xbf16>
    %586 = vector.shape_cast %582 : vector<8x128xbf16> to vector<1x8x128xbf16>
    tpu.vector_store %arg13[%583, %c0_160, %c0_161], %586 {strides = array<i32>} : memref<8x8x128xbf16, #tpu.memory_space<vmem>>, vector<1x8x128xbf16>,
    %c7_i32_162 = arith.constant 7 : i32
    %587 = arith.index_cast %c7_i32_162 : i32 to index
    %c0_163 = arith.constant 0 : index
    %c0_164 = arith.constant 0 : index
    %588 = vector.load %arg12[%587, %c0_163, %c0_164] : memref<8x8x128xbf16, #tpu.memory_space<vmem>>, vector<1x8x128xbf16>
    %589 = vector.shape_cast %588 : vector<1x8x128xbf16> to vector<8x128xbf16>
    %cst_165 = arith.constant dense<0.000000e+00> : vector<8x512xf32>
    %590 = tpu.matmul %589, %316, %cst_165 {dimension_numbers = #tpu.dot_dimension_numbers<[1], [0], [0], [1], [0, 0, 1, 1], [], []>} : vector<8x128xbf16>, vector<128x512xbf16>, vector<8x512xf32> -> vector<8x512xf32>
    %591 = vector.broadcast %318 : vector<1x512xf32> to vector<8x512xf32>
    %592 = arith.addf %590, %591 : vector<8x512xf32>
    %cst_166 = arith.constant dense<0.000000e+00> : vector<8x512xf32>
    %593 = tpu.matmul %582, %317, %cst_166 {dimension_numbers = #tpu.dot_dimension_numbers<[1], [0], [0], [1], [0, 0, 1, 1], [], []>} : vector<8x128xbf16>, vector<128x512xbf16>, vector<8x512xf32> -> vector<8x512xf32>
    %594 = arith.addf %592, %593 : vector<8x512xf32>
    %595 = vector.extract_strided_slice %594 {offsets = [0, 0], sizes = [8, 128], strides = [1, 1]} : vector<8x512xf32> to vector<8x128xf32>
    %596 = arith.negf %595 : vector<8x128xf32>
    %597 = math.exp %596 : vector<8x128xf32>
    %cst_167 = arith.constant 1.000000e+00 : f32
    %598 = vector.broadcast %cst_167 : f32 to vector<8x128xf32>
    %599 = arith.addf %598, %597 : vector<8x128xf32>
    %600 = arith.divf %598, %599 : vector<8x128xf32>
    %601 = vector.extract_strided_slice %594 {offsets = [0, 128], sizes = [8, 128], strides = [1, 1]} : vector<8x512xf32> to vector<8x128xf32>
    %602 = arith.negf %601 : vector<8x128xf32>
    %603 = math.exp %602 : vector<8x128xf32>
    %cst_168 = arith.constant 1.000000e+00 : f32
    %604 = vector.broadcast %cst_168 : f32 to vector<8x128xf32>
    %605 = arith.addf %604, %603 : vector<8x128xf32>
    %606 = arith.divf %604, %605 : vector<8x128xf32>
    %607 = vector.extract_strided_slice %594 {offsets = [0, 256], sizes = [8, 128], strides = [1, 1]} : vector<8x512xf32> to vector<8x128xf32>
    %608 = math.tanh %607 : vector<8x128xf32>
    %609 = vector.extract_strided_slice %594 {offsets = [0, 384], sizes = [8, 128], strides = [1, 1]} : vector<8x512xf32> to vector<8x128xf32>
    %610 = arith.negf %609 : vector<8x128xf32>
    %611 = math.exp %610 : vector<8x128xf32>
    %cst_169 = arith.constant 1.000000e+00 : f32
    %612 = vector.broadcast %cst_169 : f32 to vector<8x128xf32>
    %613 = arith.addf %612, %611 : vector<8x128xf32>
    %614 = arith.divf %612, %613 : vector<8x128xf32>
    %615 = arith.mulf %606, %579 : vector<8x128xf32>
    %616 = arith.mulf %600, %608 : vector<8x128xf32>
    %617 = arith.addf %615, %616 : vector<8x128xf32>
    %618 = math.tanh %617 : vector<8x128xf32>
    %619 = arith.mulf %614, %618 : vector<8x128xf32>
    %620 = arith.truncf %619 : vector<8x128xf32> to vector<8x128xbf16>
    %621 = arith.index_cast %c7_i32_162 : i32 to index
    %c0_170 = arith.constant 0 : index
    %c0_171 = arith.constant 0 : index
    %622 = vector.load %arg13[%621, %c0_170, %c0_171] : memref<8x8x128xbf16, #tpu.memory_space<vmem>>, vector<1x8x128xbf16>
    %623 = vector.shape_cast %622 : vector<1x8x128xbf16> to vector<8x128xbf16>
    %624 = vector.shape_cast %620 : vector<8x128xbf16> to vector<1x8x128xbf16>
    tpu.vector_store %arg13[%621, %c0_170, %c0_171], %624 {strides = array<i32>} : memref<8x8x128xbf16, #tpu.memory_space<vmem>>, vector<1x8x128xbf16>,
    %c8_i32_172 = arith.constant 8 : i32
    %625 = arith.extf %620 : vector<8x128xbf16> to vector<8x128xf32>
    %c1 = arith.constant 1 : index
    %c0_173 = arith.constant 0 : index
    %c0_174 = arith.constant 0 : index
    %626 = vector.load %arg10[%c1, %c0_173, %c0_174] : memref<2x8x128xf32, #tpu.memory_space<vmem>>, vector<1x8x128xf32>
    %627 = vector.shape_cast %626 : vector<1x8x128xf32> to vector<8x128xf32>
    %628 = vector.shape_cast %625 : vector<8x128xf32> to vector<1x8x128xf32>
    tpu.vector_store %arg10[%c1, %c0_173, %c0_174], %628 {strides = array<i32>} : memref<2x8x128xf32, #tpu.memory_space<vmem>>, vector<1x8x128xf32>,
    %c1_175 = arith.constant 1 : index
    %c0_176 = arith.constant 0 : index
    %c0_177 = arith.constant 0 : index
    %629 = vector.load %arg11[%c1_175, %c0_176, %c0_177] : memref<2x8x128xf32, #tpu.memory_space<vmem>>, vector<1x8x128xf32>
    %630 = vector.shape_cast %629 : vector<1x8x128xf32> to vector<8x128xf32>
    %631 = vector.shape_cast %617 : vector<8x128xf32> to vector<1x8x128xf32>
    tpu.vector_store %arg11[%c1_175, %c0_176, %c0_177], %631 {strides = array<i32>} : memref<2x8x128xf32, #tpu.memory_space<vmem>>, vector<1x8x128xf32>,
    %c0_178 = arith.constant 0 : index
    %c0_179 = arith.constant 0 : index
    %632 = vector.load %arg7[%c0_178, %c0_179] : memref<128x128xbf16, #tpu.memory_space<vmem>>, vector<128x128xbf16>
    %cst_180 = arith.constant dense<0.000000e+00> : vector<8x128xf32>
    %633 = tpu.matmul %620, %632, %cst_180 {dimension_numbers = #tpu.dot_dimension_numbers<[1], [0], [0], [1], [0, 0, 1, 1], [], []>} : vector<8x128xbf16>, vector<128x128xbf16>, vector<8x128xf32> -> vector<8x128xf32>
    %c0_181 = arith.constant 0 : index
    %c0_182 = arith.constant 0 : index
    %634 = vector.load %arg8[%c0_181, %c0_182] : memref<1x128xf32, #tpu.memory_space<vmem>>, vector<1x128xf32>
    %635 = vector.broadcast %634 : vector<1x128xf32> to vector<8x128xf32>
    %636 = arith.addf %633, %635 : vector<8x128xf32>
    %cst_183 = arith.constant dense<0xFF800000> : vector<8xf32>
    %637 = vector.multi_reduction <maximumf>, %636, %cst_183 [1] : vector<8x128xf32> to vector<8xf32>
    %638 = vector.shape_cast %637 : vector<8xf32> to vector<8x1xf32>
    %639 = vector.broadcast %638 : vector<8x1xf32> to vector<8x128xf32>
    %640 = arith.subf %636, %639 : vector<8x128xf32>
    %641 = math.exp %640 : vector<8x128xf32>
    %cst_184 = arith.constant dense<0.000000e+00> : vector<8xf32>
    %642 = vector.multi_reduction <add>, %641, %cst_184 [1] : vector<8x128xf32> to vector<8xf32>
    %643 = vector.shape_cast %642 : vector<8xf32> to vector<8x1xf32>
    %644 = math.log %643 : vector<8x1xf32>
    %645 = vector.broadcast %644 : vector<8x1xf32> to vector<8x128xf32>
    %646 = arith.subf %640, %645 : vector<8x128xf32>
    %c0_185 = arith.constant 0 : index
    %c0_186 = arith.constant 0 : index
    %647 = vector.load %arg9[%c0_185, %c0_186] : memref<8x128xf32, #tpu.memory_space<vmem>>, vector<8x128xf32>
    tpu.vector_store %arg9[%c0_185, %c0_186], %646 {strides = array<i32>} : memref<8x128xf32, #tpu.memory_space<vmem>>, vector<8x128xf32>,
    return
  }
}

</mosaic_0001>

<llo_original>
// kernel: rnn_forward.1
$region0: #{rnn_forward.1}
  #allocation0 [shape = 'u32[]', space=smem, size = 0x4, offset = 0x4, fixed_abs, tag = 'smem constant byte address 0x4 - core index']
  #allocation1 [shape = 'u32[144,128]{1,0:T(1,128)}', space=vmem, size = 0x12000, scoped, tag = 'internal scratch']
  #allocation2 [shape = 'bf16[8,8,128]{2,1,0:T(8,128)(2,1)}', space=vmem, size = 0x4000, scoped, tag = 'scratch operand']
  #allocation3 [shape = 'bf16[8,8,128]{2,1,0:T(8,128)(2,1)}', space=vmem, size = 0x4000, scoped, tag = 'scratch operand']
  %s0 = inlined_call_operand.vmem [shape: bf16[8,8,128], index: 0, kind: input, shape index: {}]
  %s1 = inlined_call_operand.hbm [shape: bf16[128,512], index: 1, kind: input, shape index: {}]
  %s2 = inlined_call_operand.hbm [shape: bf16[128,512], index: 2, kind: input, shape index: {}]
  %s3 = inlined_call_operand.vmem [shape: f32[1,512], index: 3, kind: input, shape index: {}]
  %s4 = inlined_call_operand.hbm [shape: bf16[128,512], index: 4, kind: input, shape index: {}]
  %s5 = inlined_call_operand.hbm [shape: bf16[128,512], index: 5, kind: input, shape index: {}]
  %s6 = inlined_call_operand.vmem [shape: f32[1,512], index: 6, kind: input, shape index: {}]
  %s7 = inlined_call_operand.vmem [shape: bf16[128,128], index: 7, kind: input, shape index: {}]
  %s8 = inlined_call_operand.vmem [shape: f32[1,128], index: 8, kind: input, shape index: {}]
  %s9 = inlined_call_operand.vmem [shape: f32[8,128], index: 9, kind: output, shape index: {0}]
  %s10 = inlined_call_operand.vmem [shape: f32[2,8,128], index: 10, kind: output, shape index: {1}]
  %s11 = inlined_call_operand.vmem [shape: f32[2,8,128], index: 11, kind: output, shape index: {2}]
  %12 = xla_tuple %s9, %s10, %s11
  %s13 = sld [smem:[#allocation0]]
  $region78: #{rnn_forward.1} parent=0
    _
  %s15 = ssub.s32 1, %s13
  %s16 = scalar_select 0, %s15, %s13
  $region1: #{rnn_forward.1} parent=0
    #allocation4 [shape = 'u8[131072]{0}', space=vmem, size = 0x20000, scoped, tag = 'input window, operand 1, single buffered']
    #allocation5 [shape = 's32[1]{0}', space=sflag, size = 0x4, scoped, tag = 'scoped memory for rnn_forward.1']
    #allocation6 [shape = 'u8[131072]{0}', space=vmem, size = 0x20000, scoped, tag = 'input window, operand 2, single buffered']
    #allocation7 [shape = 's32[1]{0}', space=sflag, size = 0x4, scoped, tag = 'scoped memory for rnn_forward.1']
    #allocation8 [shape = 'u8[131072]{0}', space=vmem, size = 0x20000, scoped, tag = 'input window, operand 4, single buffered']
    #allocation9 [shape = 'u8[131072]{0}', space=vmem, size = 0x20000, scoped, tag = 'input window, operand 5, single buffered']
    #allocation10 [shape = 's32[1]{0}', space=sflag, size = 0x4, scoped, tag = 'scoped memory for rnn_forward.1']
    %17 = vsyncpa [#allocation5], 0
    %18 = vsyncpa [#allocation7], 0
    %19 = vsyncpa [#allocation10], 0
    // Predicated region
    $region2: #{rnn_forward.1} parent=1 // pred_check
      _
    $region3: #{rnn_forward.1} parent=1 // pred_check_branch
      %21 = sbr.rel (0) target = $region5
    $region4: #{rnn_forward.1} parent=1 // pred_region
      _
    $region5: #{rnn_forward.1} parent=1 // pred_fallthru
      _
    // Predicated region
    $region6: #{rnn_forward.1} parent=1 // pred_check
      _
    $region7: #{rnn_forward.1} parent=1 // pred_check_branch
      %23 = sbr.rel (0) target = $region9
    $region8: #{rnn_forward.1} parent=1 // pred_region
      %s25 = ssub.s32 4096, 4096
      %26 = vsyncadd [#allocation5], %s25
      %s27 = sshll.u32 [#allocation4], 4
      %s28 = int_to_ptr.vmem [resolvable:$true] %s27
      %33 = dma.hbm_to_vmem [thread:$0]  %s1, 4096, %s28, [#allocation5], 256, 256, 16
    $region9: #{rnn_forward.1} parent=1 // pred_fallthru
      _
    // Predicated region
    $region10: #{rnn_forward.1} parent=1 // pred_check
      _
    $region11: #{rnn_forward.1} parent=1 // pred_check_branch
      %35 = sbr.rel (0) target = $region13
    $region12: #{rnn_forward.1} parent=1 // pred_region
      %s37 = ssub.s32 4096, 4096
      %38 = vsyncadd [#allocation7], %s37
      %s39 = sshll.u32 [#allocation6], 4
      %s40 = int_to_ptr.vmem [resolvable:$true] %s39
      %45 = dma.hbm_to_vmem [thread:$0]  %s2, 4096, %s40, [#allocation7], 256, 256, 16
    $region13: #{rnn_forward.1} parent=1 // pred_fallthru
      _
    // Predicated region
    $region14: #{rnn_forward.1} parent=1 // pred_check
      _
    $region15: #{rnn_forward.1} parent=1 // pred_check_branch
      %47 = sbr.rel (0) target = $region17
    $region16: #{rnn_forward.1} parent=1 // pred_region
      _
    $region17: #{rnn_forward.1} parent=1 // pred_fallthru
      _
    // Predicated region
    $region18: #{rnn_forward.1} parent=1 // pred_check
      _
    $region19: #{rnn_forward.1} parent=1 // pred_check_branch
      %49 = sbr.rel (0) target = $region21
    $region20: #{rnn_forward.1} parent=1 // pred_region
      %s51 = ssub.s32 4096, 4096
      %52 = vsyncadd [#allocation7], %s51
      %s53 = sshll.u32 [#allocation8], 4
      %s54 = int_to_ptr.vmem [resolvable:$true] %s53
      %59 = dma.hbm_to_vmem [thread:$0]  %s4, 4096, %s54, [#allocation7], 256, 256, 16
    $region21: #{rnn_forward.1} parent=1 // pred_fallthru
      _
    // Predicated region
    $region22: #{rnn_forward.1} parent=1 // pred_check
      _
    $region23: #{rnn_forward.1} parent=1 // pred_check_branch
      %61 = sbr.rel (0) target = $region25
    $region24: #{rnn_forward.1} parent=1 // pred_region
      %s63 = ssub.s32 4096, 4096
      %64 = vsyncadd [#allocation10], %s63
      %s65 = sshll.u32 [#allocation9], 4
      %s66 = int_to_ptr.vmem [resolvable:$true] %s65
      %71 = dma.hbm_to_vmem [thread:$0]  %s5, 4096, %s66, [#allocation10], 256, 256, 16
    $region25: #{rnn_forward.1} parent=1 // pred_fallthru
      _
    // Predicated region
    $region26: #{rnn_forward.1} parent=1 // pred_check
      _
    $region27: #{rnn_forward.1} parent=1 // pred_check_branch
      %73 = sbr.rel (0) target = $region29
    $region28: #{rnn_forward.1} parent=1 // pred_region
      _
    $region29: #{rnn_forward.1} parent=1 // pred_fallthru
      _
    // Predicated region
    $region30: #{rnn_forward.1} parent=1 // pred_check
      _
    $region31: #{rnn_forward.1} parent=1 // pred_check_branch
      %75 = sbr.rel (0) target = $region33
    $region32: #{rnn_forward.1} parent=1 // pred_region
      _
    $region33: #{rnn_forward.1} parent=1 // pred_fallthru
      _
    // Predicated region
    $region34: #{rnn_forward.1} parent=1 // pred_check
      _
    $region35: #{rnn_forward.1} parent=1 // pred_check_branch
      %77 = sbr.rel (0) target = $region37
    $region36: #{rnn_forward.1} parent=1 // pred_region
      _
    $region37: #{rnn_forward.1} parent=1 // pred_fallthru
      _
    // Predicated region
    $region38: #{rnn_forward.1} parent=1 // pred_check
      _
    $region39: #{rnn_forward.1} parent=1 // pred_check_branch
      %79 = sbr.rel (0) target = $region41
    $region40: #{rnn_forward.1} parent=1 // pred_region
      %80 = dma.done [#allocation5], 4096
    $region41: #{rnn_forward.1} parent=1 // pred_fallthru
      _
    // Predicated region
    $region42: #{rnn_forward.1} parent=1 // pred_check
      _
    $region43: #{rnn_forward.1} parent=1 // pred_check_branch
      %82 = sbr.rel (0) target = $region45
    $region44: #{rnn_forward.1} parent=1 // pred_region
      %83 = dma.done [#allocation7], 4096
    $region45: #{rnn_forward.1} parent=1 // pred_fallthru
      _
    // Predicated region
    $region46: #{rnn_forward.1} parent=1 // pred_check
      _
    $region47: #{rnn_forward.1} parent=1 // pred_check_branch
      %85 = sbr.rel (0) target = $region49
    $region48: #{rnn_forward.1} parent=1 // pred_region
      %86 = dma.done [#allocation7], 4096
    $region49: #{rnn_forward.1} parent=1 // pred_fallthru
      _
    // Predicated region
    $region50: #{rnn_forward.1} parent=1 // pred_check
      _
    $region51: #{rnn_forward.1} parent=1 // pred_check_branch
      %88 = sbr.rel (0) target = $region53
    $region52: #{rnn_forward.1} parent=1 // pred_region
      %89 = dma.done [#allocation10], 4096
    $region53: #{rnn_forward.1} parent=1 // pred_fallthru
      _
    %v91 = vld [vmem:[#allocation4] sm:$0xff]
    %v92 = vld [vmem:[#allocation4 + $0x8] sm:$0xff]
    %v93 = vld [vmem:[#allocation4 + $0x10] sm:$0xff]
    %v94 = vld [vmem:[#allocation4 + $0x18] sm:$0xff]
    %v95 = vld [vmem:[#allocation4 + $0x20] sm:$0xff]
    %v96 = vld [vmem:[#allocation4 + $0x28] sm:$0xff]
    %v97 = vld [vmem:[#allocation4 + $0x30] sm:$0xff]
    %v98 = vld [vmem:[#allocation4 + $0x38] sm:$0xff]
    %v99 = vld [vmem:[#allocation4 + $0x40] sm:$0xff]
    %v100 = vld [vmem:[#allocation4 + $0x48] sm:$0xff]
    %v101 = vld [vmem:[#allocation4 + $0x50] sm:$0xff]
    %v102 = vld [vmem:[#allocation4 + $0x58] sm:$0xff]
    %v103 = vld [vmem:[#allocation4 + $0x60] sm:$0xff]
    %v104 = vld [vmem:[#allocation4 + $0x68] sm:$0xff]
    %v105 = vld [vmem:[#allocation4 + $0x70] sm:$0xff]
    %v106 = vld [vmem:[#allocation4 + $0x78] sm:$0xff]
    %v107 = vld [vmem:[#allocation4 + $0x80] sm:$0xff]
    %v108 = vld [vmem:[#allocation4 + $0x88] sm:$0xff]
    %v109 = vld [vmem:[#allocation4 + $0x90] sm:$0xff]
    %v110 = vld [vmem:[#allocation4 + $0x98] sm:$0xff]
    %v111 = vld [vmem:[#allocation4 + $0xa0] sm:$0xff]
    %v112 = vld [vmem:[#allocation4 + $0xa8] sm:$0xff]
    %v113 = vld [vmem:[#allocation4 + $0xb0] sm:$0xff]
    %v114 = vld [vmem:[#allocation4 + $0xb8] sm:$0xff]
    %v115 = vld [vmem:[#allocation4 + $0xc0] sm:$0xff]
    %v116 = vld [vmem:[#allocation4 + $0xc8] sm:$0xff]
    %v117 = vld [vmem:[#allocation4 + $0xd0] sm:$0xff]
    %v118 = vld [vmem:[#allocation4 + $0xd8] sm:$0xff]
    %v119 = vld [vmem:[#allocation4 + $0xe0] sm:$0xff]
    %v120 = vld [vmem:[#allocation4 + $0xe8] sm:$0xff]
    %v121 = vld [vmem:[#allocation4 + $0xf0] sm:$0xff]
    %v122 = vld [vmem:[#allocation4 + $0xf8] sm:$0xff]
    %v123 = vld [vmem:[#allocation6] sm:$0xff]
    %v124 = vld [vmem:[#allocation6 + $0x8] sm:$0xff]
    %v125 = vld [vmem:[#allocation6 + $0x10] sm:$0xff]
    %v126 = vld [vmem:[#allocation6 + $0x18] sm:$0xff]
    %v127 = vld [vmem:[#allocation6 + $0x20] sm:$0xff]
    %v128 = vld [vmem:[#allocation6 + $0x28] sm:$0xff]
    %v129 = vld [vmem:[#allocation6 + $0x30] sm:$0xff]
    %v130 = vld [vmem:[#allocation6 + $0x38] sm:$0xff]
    %v131 = vld [vmem:[#allocation6 + $0x40] sm:$0xff]
    %v132 = vld [vmem:[#allocation6 + $0x48] sm:$0xff]
    %v133 = vld [vmem:[#allocation6 + $0x50] sm:$0xff]
    %v134 = vld [vmem:[#allocation6 + $0x58] sm:$0xff]
    %v135 = vld [vmem:[#allocation6 + $0x60] sm:$0xff]
    %v136 = vld [vmem:[#allocation6 + $0x68] sm:$0xff]
    %v137 = vld [vmem:[#allocation6 + $0x70] sm:$0xff]
    %v138 = vld [vmem:[#allocation6 + $0x78] sm:$0xff]
    %v139 = vld [vmem:[#allocation6 + $0x80] sm:$0xff]
    %v140 = vld [vmem:[#allocation6 + $0x88] sm:$0xff]
    %v141 = vld [vmem:[#allocation6 + $0x90] sm:$0xff]
    %v142 = vld [vmem:[#allocation6 + $0x98] sm:$0xff]
    %v143 = vld [vmem:[#allocation6 + $0xa0] sm:$0xff]
    %v144 = vld [vmem:[#allocation6 + $0xa8] sm:$0xff]
    %v145 = vld [vmem:[#allocation6 + $0xb0] sm:$0xff]
    %v146 = vld [vmem:[#allocation6 + $0xb8] sm:$0xff]
    %v147 = vld [vmem:[#allocation6 + $0xc0] sm:$0xff]
    %v148 = vld [vmem:[#allocation6 + $0xc8] sm:$0xff]
    %v149 = vld [vmem:[#allocation6 + $0xd0] sm:$0xff]
    %v150 = vld [vmem:[#allocation6 + $0xd8] sm:$0xff]
    %v151 = vld [vmem:[#allocation6 + $0xe0] sm:$0xff]
    %v152 = vld [vmem:[#allocation6 + $0xe8] sm:$0xff]
    %v153 = vld [vmem:[#allocation6 + $0xf0] sm:$0xff]
    %v154 = vld [vmem:[#allocation6 + $0xf8] sm:$0xff]
    %v155 = vld [vmem:[%s3] sm:$0xf]
    %v156 = vld [vmem:[%s0] sm:$0xf]
    %v158 = vlaneseq
    %v159 = vshrl.u32 %v158, 7
    %v160 = vsub.s32 0, %v159
    %v161 = vrot.slane %v155, %v160
    %v162 = vlaneseq
    %v163 = vshrl.u32 %v162, 7
    %v164 = vsub.s32 1, %v163
    %v165 = vrot.slane %v155, %v164
    %v166 = vlaneseq
    %v167 = vshrl.u32 %v166, 7
    %v168 = vsub.s32 2, %v167
    %v169 = vrot.slane %v155, %v168
    %v170 = vlaneseq
    %v171 = vshrl.u32 %v170, 7
    %v172 = vsub.s32 3, %v171
    %v173 = vrot.slane %v155, %v172
    %v210 = vunpack.c.l.b16 %v91
    %v211 = vunpack.c.h.b16 %v91
    %v212 = vunpack.c.l.b16 %v92
    %v213 = vunpack.c.h.b16 %v92
    %v214 = vunpack.c.l.b16 %v93
    %v215 = vunpack.c.h.b16 %v93
    %v216 = vunpack.c.l.b16 %v94
    %v217 = vunpack.c.h.b16 %v94
    %v218 = vunpack.c.l.b16 %v95
    %v219 = vunpack.c.h.b16 %v95
    %v220 = vunpack.c.l.b16 %v96
    %v221 = vunpack.c.h.b16 %v96
    %v222 = vunpack.c.l.b16 %v97
    %v223 = vunpack.c.h.b16 %v97
    %v224 = vunpack.c.l.b16 %v98
    %v225 = vunpack.c.h.b16 %v98
    %v226 = vunpack.c.l.b16 %v99
    %v227 = vunpack.c.h.b16 %v99
    %v228 = vunpack.c.l.b16 %v100
    %v229 = vunpack.c.h.b16 %v100
    %v230 = vunpack.c.l.b16 %v101
    %v231 = vunpack.c.h.b16 %v101
    %v232 = vunpack.c.l.b16 %v102
    %v233 = vunpack.c.h.b16 %v102
    %v234 = vunpack.c.l.b16 %v103
    %v235 = vunpack.c.h.b16 %v103
    %v236 = vunpack.c.l.b16 %v104
    %v237 = vunpack.c.h.b16 %v104
    %v238 = vunpack.c.l.b16 %v105
    %v239 = vunpack.c.h.b16 %v105
    %v240 = vunpack.c.l.b16 %v106
    %v241 = vunpack.c.h.b16 %v106
    %v242 = vunpack.c.l.b16 %v107
    %v243 = vunpack.c.h.b16 %v107
    %v244 = vunpack.c.l.b16 %v108
    %v245 = vunpack.c.h.b16 %v108
    %v246 = vunpack.c.l.b16 %v109
    %v247 = vunpack.c.h.b16 %v109
    %v248 = vunpack.c.l.b16 %v110
    %v249 = vunpack.c.h.b16 %v110
    %v250 = vunpack.c.l.b16 %v111
    %v251 = vunpack.c.h.b16 %v111
    %v252 = vunpack.c.l.b16 %v112
    %v253 = vunpack.c.h.b16 %v112
    %v254 = vunpack.c.l.b16 %v113
    %v255 = vunpack.c.h.b16 %v113
    %v256 = vunpack.c.l.b16 %v114
    %v257 = vunpack.c.h.b16 %v114
    %v258 = vunpack.c.l.b16 %v115
    %v259 = vunpack.c.h.b16 %v115
    %v260 = vunpack.c.l.b16 %v116
    %v261 = vunpack.c.h.b16 %v116
    %v262 = vunpack.c.l.b16 %v117
    %v263 = vunpack.c.h.b16 %v117
    %v264 = vunpack.c.l.b16 %v118
    %v265 = vunpack.c.h.b16 %v118
    %v266 = vunpack.c.l.b16 %v119
    %v267 = vunpack.c.h.b16 %v119
    %v268 = vunpack.c.l.b16 %v120
    %v269 = vunpack.c.h.b16 %v120
    %v270 = vunpack.c.l.b16 %v121
    %v271 = vunpack.c.h.b16 %v121
    %v272 = vunpack.c.l.b16 %v122
    %v273 = vunpack.c.h.b16 %v122
    %v274 = vpack.c.b16 %v214, %v210
    %v275 = vpack.c.b16 %v215, %v211
    %v276 = vpack.c.b16 %v216, %v212
    %v277 = vpack.c.b16 %v217, %v213
    %v278 = vpack.c.b16 %v222, %v218
    %v279 = vpack.c.b16 %v223, %v219
    %v280 = vpack.c.b16 %v224, %v220
    %v281 = vpack.c.b16 %v225, %v221
    %v282 = vpack.c.b16 %v230, %v226
    %v283 = vpack.c.b16 %v231, %v227
    %v284 = vpack.c.b16 %v232, %v228
    %v285 = vpack.c.b16 %v233, %v229
    %v286 = vpack.c.b16 %v238, %v234
    %v287 = vpack.c.b16 %v239, %v235
    %v288 = vpack.c.b16 %v240, %v236
    %v289 = vpack.c.b16 %v241, %v237
    %v290 = vpack.c.b16 %v246, %v242
    %v291 = vpack.c.b16 %v247, %v243
    %v292 = vpack.c.b16 %v248, %v244
    %v293 = vpack.c.b16 %v249, %v245
    %v294 = vpack.c.b16 %v254, %v250
    %v295 = vpack.c.b16 %v255, %v251
    %v296 = vpack.c.b16 %v256, %v252
    %v297 = vpack.c.b16 %v257, %v253
    %v298 = vpack.c.b16 %v262, %v258
    %v299 = vpack.c.b16 %v263, %v259
    %v300 = vpack.c.b16 %v264, %v260
    %v301 = vpack.c.b16 %v265, %v261
    %v302 = vpack.c.b16 %v270, %v266
    %v303 = vpack.c.b16 %v271, %v267
    %v304 = vpack.c.b16 %v272, %v268
    %v305 = vpack.c.b16 %v273, %v269
    %338 = vmatprep.subr.bf16.mxu0 %v275
    %339 = vmatpush1.bf16.msra.mxu0 %v274
    %340 = vmatprep.subr.bf16.mxu0 %v279
    %341 = vmatpush1.bf16.msra.mxu0 %v278
    %342 = vmatprep.subr.bf16.mxu0 %v283
    %343 = vmatpush1.bf16.msra.mxu0 %v282
    %344 = vmatprep.subr.bf16.mxu0 %v287
    %345 = vmatpush1.bf16.msra.mxu0 %v286
    %346 = vmatprep.subr.bf16.mxu0 %v291
    %347 = vmatpush1.bf16.msra.mxu0 %v290
    %348 = vmatprep.subr.bf16.mxu0 %v295
    %349 = vmatpush1.bf16.msra.mxu0 %v294
    %350 = vmatprep.subr.bf16.mxu0 %v299
    %351 = vmatpush1.bf16.msra.mxu0 %v298
    %352 = vmatprep.subr.bf16.mxu0 %v303
    %353 = vmatpush1.bf16.msra.mxu0 %v302
    %354 = vmatprep.subr.bf16.mxu0 0
    %355 = vmatpush1.bf16.msra.mxu0 0
    %356 = vmatprep.subr.bf16.mxu0 0
    %357 = vmatpush1.bf16.msra.mxu0 0
    %358 = vmatprep.subr.bf16.mxu0 0
    %359 = vmatpush1.bf16.msra.mxu0 0
    %360 = vmatprep.subr.bf16.mxu0 0
    %361 = vmatpush1.bf16.msra.mxu0 0
    %362 = vmatprep.subr.bf16.mxu0 0
    %363 = vmatpush1.bf16.msra.mxu0 0
    %364 = vmatprep.subr.bf16.mxu0 0
    %365 = vmatpush1.bf16.msra.mxu0 0
    %366 = vmatprep.subr.bf16.mxu0 0
    %367 = vmatpush1.bf16.msra.mxu0 0
    %368 = vmatprep.subr.bf16.mxu0 0
    %369 = vmatpush1.bf16.msra.mxu0 0
    %370 = vmatprep.mubr.bf16.mxu0 0
    %371 = vmatmul.mubr.bf16.gmra.mrb[0].mxu0 %v156
    %v372 = vpop.f32.mrb[0].mxu0
    %v373 = vadd.f32 %v161, %v372
    %v374 = vpop.f32.mrb[0].mxu0
    %v375 = vadd.f32 %v165, %v374
    %v376 = vpop.f32.mrb[0].mxu0
    %v377 = vpop.f32.mrb[0].mxu0
    %378 = vdwg.mxu0
    %379 = vmatprep.subr.bf16.mxu0 %v277
    %380 = vmatpush1.bf16.msra.mxu0 %v276
    %381 = vmatprep.subr.bf16.mxu0 %v281
    %382 = vmatpush1.bf16.msra.mxu0 %v280
    %383 = vmatprep.subr.bf16.mxu0 %v285
    %384 = vmatpush1.bf16.msra.mxu0 %v284
    %385 = vmatprep.subr.bf16.mxu0 %v289
    %386 = vmatpush1.bf16.msra.mxu0 %v288
    %387 = vmatprep.subr.bf16.mxu0 %v293
    %388 = vmatpush1.bf16.msra.mxu0 %v292
    %389 = vmatprep.subr.bf16.mxu0 %v297
    %390 = vmatpush1.bf16.msra.mxu0 %v296
    %391 = vmatprep.subr.bf16.mxu0 %v301
    %392 = vmatpush1.bf16.msra.mxu0 %v300
    %393 = vmatprep.subr.bf16.mxu0 %v305
    %394 = vmatpush1.bf16.msra.mxu0 %v304
    %395 = vmatprep.subr.bf16.mxu0 0
    %396 = vmatpush1.bf16.msra.mxu0 0
    %397 = vmatprep.subr.bf16.mxu0 0
    %398 = vmatpush1.bf16.msra.mxu0 0
    %399 = vmatprep.subr.bf16.mxu0 0
    %400 = vmatpush1.bf16.msra.mxu0 0
    %401 = vmatprep.subr.bf16.mxu0 0
    %402 = vmatpush1.bf16.msra.mxu0 0
    %403 = vmatprep.subr.bf16.mxu0 0
    %404 = vmatpush1.bf16.msra.mxu0 0
    %405 = vmatprep.subr.bf16.mxu0 0
    %406 = vmatpush1.bf16.msra.mxu0 0
    %407 = vmatprep.subr.bf16.mxu0 0
    %408 = vmatpush1.bf16.msra.mxu0 0
    %409 = vmatprep.subr.bf16.mxu0 0
    %410 = vmatpush1.bf16.msra.mxu0 0
    %411 = vmatprep.mubr.bf16.mxu0 0
    %412 = vmatmul.mubr.bf16.gmra.mrb[0].mxu0 %v156
    %v413 = vpop.f32.mrb[0].mxu0
    %v414 = vadd.f32 %v169, %v413
    %v415 = vpop.f32.mrb[0].mxu0
    %v416 = vadd.f32 %v173, %v415
    %v417 = vpop.f32.mrb[0].mxu0
    %v418 = vpop.f32.mrb[0].mxu0
    %419 = vdwg.mxu0
    %v452 = vunpack.c.l.b16 %v123
    %v453 = vunpack.c.h.b16 %v123
    %v454 = vunpack.c.l.b16 %v124
    %v455 = vunpack.c.h.b16 %v124
    %v456 = vunpack.c.l.b16 %v125
    %v457 = vunpack.c.h.b16 %v125
    %v458 = vunpack.c.l.b16 %v126
    %v459 = vunpack.c.h.b16 %v126
    %v460 = vunpack.c.l.b16 %v127
    %v461 = vunpack.c.h.b16 %v127
    %v462 = vunpack.c.l.b16 %v128
    %v463 = vunpack.c.h.b16 %v128
    %v464 = vunpack.c.l.b16 %v129
    %v465 = vunpack.c.h.b16 %v129
    %v466 = vunpack.c.l.b16 %v130
    %v467 = vunpack.c.h.b16 %v130
    %v468 = vunpack.c.l.b16 %v131
    %v469 = vunpack.c.h.b16 %v131
    %v470 = vunpack.c.l.b16 %v132
    %v471 = vunpack.c.h.b16 %v132
    %v472 = vunpack.c.l.b16 %v133
    %v473 = vunpack.c.h.b16 %v133
    %v474 = vunpack.c.l.b16 %v134
    %v475 = vunpack.c.h.b16 %v134
    %v476 = vunpack.c.l.b16 %v135
    %v477 = vunpack.c.h.b16 %v135
    %v478 = vunpack.c.l.b16 %v136
    %v479 = vunpack.c.h.b16 %v136
    %v480 = vunpack.c.l.b16 %v137
    %v481 = vunpack.c.h.b16 %v137
    %v482 = vunpack.c.l.b16 %v138
    %v483 = vunpack.c.h.b16 %v138
    %v484 = vunpack.c.l.b16 %v139
    %v485 = vunpack.c.h.b16 %v139
    %v486 = vunpack.c.l.b16 %v140
    %v487 = vunpack.c.h.b16 %v140
    %v488 = vunpack.c.l.b16 %v141
    %v489 = vunpack.c.h.b16 %v141
    %v490 = vunpack.c.l.b16 %v142
    %v491 = vunpack.c.h.b16 %v142
    %v492 = vunpack.c.l.b16 %v143
    %v493 = vunpack.c.h.b16 %v143
    %v494 = vunpack.c.l.b16 %v144
    %v495 = vunpack.c.h.b16 %v144
    %v496 = vunpack.c.l.b16 %v145
    %v497 = vunpack.c.h.b16 %v145
    %v498 = vunpack.c.l.b16 %v146
    %v499 = vunpack.c.h.b16 %v146
    %v500 = vunpack.c.l.b16 %v147
    %v501 = vunpack.c.h.b16 %v147
    %v502 = vunpack.c.l.b16 %v148
    %v503 = vunpack.c.h.b16 %v148
    %v504 = vunpack.c.l.b16 %v149
    %v505 = vunpack.c.h.b16 %v149
    %v506 = vunpack.c.l.b16 %v150
    %v507 = vunpack.c.h.b16 %v150
    %v508 = vunpack.c.l.b16 %v151
    %v509 = vunpack.c.h.b16 %v151
    %v510 = vunpack.c.l.b16 %v152
    %v511 = vunpack.c.h.b16 %v152
    %v512 = vunpack.c.l.b16 %v153
    %v513 = vunpack.c.h.b16 %v153
    %v514 = vunpack.c.l.b16 %v154
    %v515 = vunpack.c.h.b16 %v154
    %v516 = vpack.c.b16 %v456, %v452
    %v517 = vpack.c.b16 %v457, %v453
    %v518 = vpack.c.b16 %v458, %v454
    %v519 = vpack.c.b16 %v459, %v455
    %v520 = vpack.c.b16 %v464, %v460
    %v521 = vpack.c.b16 %v465, %v461
    %v522 = vpack.c.b16 %v466, %v462
    %v523 = vpack.c.b16 %v467, %v463
    %v524 = vpack.c.b16 %v472, %v468
    %v525 = vpack.c.b16 %v473, %v469
    %v526 = vpack.c.b16 %v474, %v470
    %v527 = vpack.c.b16 %v475, %v471
    %v528 = vpack.c.b16 %v480, %v476
    %v529 = vpack.c.b16 %v481, %v477
    %v530 = vpack.c.b16 %v482, %v478
    %v531 = vpack.c.b16 %v483, %v479
    %v532 = vpack.c.b16 %v488, %v484
    %v533 = vpack.c.b16 %v489, %v485
    %v534 = vpack.c.b16 %v490, %v486
    %v535 = vpack.c.b16 %v491, %v487
    %v536 = vpack.c.b16 %v496, %v492
    %v537 = vpack.c.b16 %v497, %v493
    %v538 = vpack.c.b16 %v498, %v494
    %v539 = vpack.c.b16 %v499, %v495
    %v540 = vpack.c.b16 %v504, %v500
    %v541 = vpack.c.b16 %v505, %v501
    %v542 = vpack.c.b16 %v506, %v502
    %v543 = vpack.c.b16 %v507, %v503
    %v544 = vpack.c.b16 %v512, %v508
    %v545 = vpack.c.b16 %v513, %v509
    %v546 = vpack.c.b16 %v514, %v510
    %v547 = vpack.c.b16 %v515, %v511
    %580 = vmatprep.subr.bf16.mxu0 %v517
    %581 = vmatpush1.bf16.msra.mxu0 %v516
    %582 = vmatprep.subr.bf16.mxu0 %v521
    %583 = vmatpush1.bf16.msra.mxu0 %v520
    %584 = vmatprep.subr.bf16.mxu0 %v525
    %585 = vmatpush1.bf16.msra.mxu0 %v524
    %586 = vmatprep.subr.bf16.mxu0 %v529
    %587 = vmatpush1.bf16.msra.mxu0 %v528
    %588 = vmatprep.subr.bf16.mxu0 %v533
    %589 = vmatpush1.bf16.msra.mxu0 %v532
    %590 = vmatprep.subr.bf16.mxu0 %v537
    %591 = vmatpush1.bf16.msra.mxu0 %v536
    %592 = vmatprep.subr.bf16.mxu0 %v541
    %593 = vmatpush1.bf16.msra.mxu0 %v540
    %594 = vmatprep.subr.bf16.mxu0 %v545
    %595 = vmatpush1.bf16.msra.mxu0 %v544
    %596 = vmatprep.subr.bf16.mxu0 0
    %597 = vmatpush1.bf16.msra.mxu0 0
    %598 = vmatprep.subr.bf16.mxu0 0
    %599 = vmatpush1.bf16.msra.mxu0 0
    %600 = vmatprep.subr.bf16.mxu0 0
    %601 = vmatpush1.bf16.msra.mxu0 0
    %602 = vmatprep.subr.bf16.mxu0 0
    %603 = vmatpush1.bf16.msra.mxu0 0
    %604 = vmatprep.subr.bf16.mxu0 0
    %605 = vmatpush1.bf16.msra.mxu0 0
    %606 = vmatprep.subr.bf16.mxu0 0
    %607 = vmatpush1.bf16.msra.mxu0 0
    %608 = vmatprep.subr.bf16.mxu0 0
    %609 = vmatpush1.bf16.msra.mxu0 0
    %610 = vmatprep.subr.bf16.mxu0 0
    %611 = vmatpush1.bf16.msra.mxu0 0
    %612 = vmatprep.mubr.bf16.mxu0 0
    %613 = vmatmul.mubr.bf16.gmra.mrb[0].mxu0 0
    %v614 = vpop.f32.mrb[0].mxu0
    %v615 = vadd.f32 0.0, %v614
    %v616 = vpop.f32.mrb[0].mxu0
    %v617 = vadd.f32 0.0, %v616
    %v618 = vpop.f32.mrb[0].mxu0
    %v619 = vpop.f32.mrb[0].mxu0
    %620 = vdwg.mxu0
    %621 = vmatprep.subr.bf16.mxu0 %v519
    %622 = vmatpush1.bf16.msra.mxu0 %v518
    %623 = vmatprep.subr.bf16.mxu0 %v523
    %624 = vmatpush1.bf16.msra.mxu0 %v522
    %625 = vmatprep.subr.bf16.mxu0 %v527
    %626 = vmatpush1.bf16.msra.mxu0 %v526
    %627 = vmatprep.subr.bf16.mxu0 %v531
    %628 = vmatpush1.bf16.msra.mxu0 %v530
    %629 = vmatprep.subr.bf16.mxu0 %v535
    %630 = vmatpush1.bf16.msra.mxu0 %v534
    %631 = vmatprep.subr.bf16.mxu0 %v539
    %632 = vmatpush1.bf16.msra.mxu0 %v538
    %633 = vmatprep.subr.bf16.mxu0 %v543
    %634 = vmatpush1.bf16.msra.mxu0 %v542
    %635 = vmatprep.subr.bf16.mxu0 %v547
    %636 = vmatpush1.bf16.msra.mxu0 %v546
    %637 = vmatprep.subr.bf16.mxu0 0
    %638 = vmatpush1.bf16.msra.mxu0 0
    %639 = vmatprep.subr.bf16.mxu0 0
    %640 = vmatpush1.bf16.msra.mxu0 0
    %641 = vmatprep.subr.bf16.mxu0 0
    %642 = vmatpush1.bf16.msra.mxu0 0
    %643 = vmatprep.subr.bf16.mxu0 0
    %644 = vmatpush1.bf16.msra.mxu0 0
    %645 = vmatprep.subr.bf16.mxu0 0
    %646 = vmatpush1.bf16.msra.mxu0 0
    %647 = vmatprep.subr.bf16.mxu0 0
    %648 = vmatpush1.bf16.msra.mxu0 0
    %649 = vmatprep.subr.bf16.mxu0 0
    %650 = vmatpush1.bf16.msra.mxu0 0
    %651 = vmatprep.subr.bf16.mxu0 0
    %652 = vmatpush1.bf16.msra.mxu0 0
    %653 = vmatprep.mubr.bf16.mxu0 0
    %654 = vmatmul.mubr.bf16.gmra.mrb[0].mxu0 0
    %v655 = vpop.f32.mrb[0].mxu0
    %v656 = vadd.f32 0.0, %v655
    %v657 = vpop.f32.mrb[0].mxu0
    %v658 = vadd.f32 0.0, %v657
    %v659 = vpop.f32.mrb[0].mxu0
    %v660 = vpop.f32.mrb[0].mxu0
    %661 = vdwg.mxu0
    %v662 = vadd.f32 %v373, %v615
    %v663 = vadd.f32 %v375, %v617
    %v664 = vadd.f32 %v414, %v656
    %v665 = vadd.f32 %v416, %v658
    %v666 = vxor.u32 %v662, 2147483648
    %v667 = vmul.f32 %v666, 1.442695
    %v668 = vpow.pop %v667
    %v669 = vadd.f32 %v668, 1.0
    %v670 = vrcp.pop %v669
    %v671 = vmul.f32 1.0, %v670
    %v672 = vxor.u32 %v663, 2147483648
    %v673 = vmul.f32 %v672, 1.442695
    %v674 = vpow.pop %v673
    %v675 = vadd.f32 %v674, 1.0
    %v676 = vrcp.pop %v675
    %v677 = vmul.f32 1.0, %v676
    %v678 = vtanh.pop %v664
    %v679 = vxor.u32 %v665, 2147483648
    %v680 = vmul.f32 %v679, 1.442695
    %v681 = vpow.pop %v680
    %v682 = vadd.f32 %v681, 1.0
    %v683 = vrcp.pop %v682
    %v684 = vmul.f32 1.0, %v683
    %v685 = vmul.f32 %v677, 0.0
    %v686 = vmul.f32 %v671, %v678
    %v687 = vadd.f32 %v685, %v686
    %v688 = vtanh.pop %v687
    %v689 = vmul.f32 %v684, %v688
    %v690 = vpack.c.bf16 %v689, %v689
    %691 = vst [vmem:[#allocation2] sm:$0xf] %v690
    %s692 = scalar_lea.vmem %s0, 4
    %v693 = vld [vmem:[%s692] sm:$0xf]
    %694 = vmatprep.subr.bf16.mxu0 %v275
    %695 = vmatpush1.bf16.msra.mxu0 %v274
    %696 = vmatprep.subr.bf16.mxu0 %v279
    %697 = vmatpush1.bf16.msra.mxu0 %v278
    %698 = vmatprep.subr.bf16.mxu0 %v283
    %699 = vmatpush1.bf16.msra.mxu0 %v282
    %700 = vmatprep.subr.bf16.mxu0 %v287
    %701 = vmatpush1.bf16.msra.mxu0 %v286
    %702 = vmatprep.subr.bf16.mxu0 %v291
    %703 = vmatpush1.bf16.msra.mxu0 %v290
    %704 = vmatprep.subr.bf16.mxu0 %v295
    %705 = vmatpush1.bf16.msra.mxu0 %v294
    %706 = vmatprep.subr.bf16.mxu0 %v299
    %707 = vmatpush1.bf16.msra.mxu0 %v298
    %708 = vmatprep.subr.bf16.mxu0 %v303
    %709 = vmatpush1.bf16.msra.mxu0 %v302
    %710 = vmatprep.subr.bf16.mxu0 0
    %711 = vmatpush1.bf16.msra.mxu0 0
    %712 = vmatprep.subr.bf16.mxu0 0
    %713 = vmatpush1.bf16.msra.mxu0 0
    %714 = vmatprep.subr.bf16.mxu0 0
    %715 = vmatpush1.bf16.msra.mxu0 0
    %716 = vmatprep.subr.bf16.mxu0 0
    %717 = vmatpush1.bf16.msra.mxu0 0
    %718 = vmatprep.subr.bf16.mxu0 0
    %719 = vmatpush1.bf16.msra.mxu0 0
    %720 = vmatprep.subr.bf16.mxu0 0
    %721 = vmatpush1.bf16.msra.mxu0 0
    %722 = vmatprep.subr.bf16.mxu0 0
    %723 = vmatpush1.bf16.msra.mxu0 0
    %724 = vmatprep.subr.bf16.mxu0 0
    %725 = vmatpush1.bf16.msra.mxu0 0
    %726 = vmatprep.mubr.bf16.mxu0 0
    %727 = vmatmul.mubr.bf16.gmra.mrb[0].mxu0 %v693
    %v728 = vpop.f32.mrb[0].mxu0
    %v729 = vadd.f32 %v161, %v728
    %v730 = vpop.f32.mrb[0].mxu0
    %v731 = vadd.f32 %v165, %v730
    %v732 = vpop.f32.mrb[0].mxu0
    %v733 = vpop.f32.mrb[0].mxu0
    %734 = vdwg.mxu0
    %735 = vmatprep.subr.bf16.mxu0 %v277
    %736 = vmatpush1.bf16.msra.mxu0 %v276
    %737 = vmatprep.subr.bf16.mxu0 %v281
    %738 = vmatpush1.bf16.msra.mxu0 %v280
    %739 = vmatprep.subr.bf16.mxu0 %v285
    %740 = vmatpush1.bf16.msra.mxu0 %v284
    %741 = vmatprep.subr.bf16.mxu0 %v289
    %742 = vmatpush1.bf16.msra.mxu0 %v288
    %743 = vmatprep.subr.bf16.mxu0 %v293
    %744 = vmatpush1.bf16.msra.mxu0 %v292
    %745 = vmatprep.subr.bf16.mxu0 %v297
    %746 = vmatpush1.bf16.msra.mxu0 %v296
    %747 = vmatprep.subr.bf16.mxu0 %v301
    %748 = vmatpush1.bf16.msra.mxu0 %v300
    %749 = vmatprep.subr.bf16.mxu0 %v305
    %750 = vmatpush1.bf16.msra.mxu0 %v304
    %751 = vmatprep.subr.bf16.mxu0 0
    %752 = vmatpush1.bf16.msra.mxu0 0
    %753 = vmatprep.subr.bf16.mxu0 0
    %754 = vmatpush1.bf16.msra.mxu0 0
    %755 = vmatprep.subr.bf16.mxu0 0
    %756 = vmatpush1.bf16.msra.mxu0 0
    %757 = vmatprep.subr.bf16.mxu0 0
    %758 = vmatpush1.bf16.msra.mxu0 0
    %759 = vmatprep.subr.bf16.mxu0 0
    %760 = vmatpush1.bf16.msra.mxu0 0
    %761 = vmatprep.subr.bf16.mxu0 0
    %762 = vmatpush1.bf16.msra.mxu0 0
    %763 = vmatprep.subr.bf16.mxu0 0
    %764 = vmatpush1.bf16.msra.mxu0 0
    %765 = vmatprep.subr.bf16.mxu0 0
    %766 = vmatpush1.bf16.msra.mxu0 0
    %767 = vmatprep.mubr.bf16.mxu0 0
    %768 = vmatmul.mubr.bf16.gmra.mrb[0].mxu0 %v693
    %v769 = vpop.f32.mrb[0].mxu0
    %v770 = vadd.f32 %v169, %v769
    %v771 = vpop.f32.mrb[0].mxu0
    %v772 = vadd.f32 %v173, %v771
    %v773 = vpop.f32.mrb[0].mxu0
    %v774 = vpop.f32.mrb[0].mxu0
    %775 = vdwg.mxu0
    %776 = vmatprep.subr.bf16.mxu0 %v517
    %777 = vmatpush1.bf16.msra.mxu0 %v516
    %778 = vmatprep.subr.bf16.mxu0 %v521
    %779 = vmatpush1.bf16.msra.mxu0 %v520
    %780 = vmatprep.subr.bf16.mxu0 %v525
    %781 = vmatpush1.bf16.msra.mxu0 %v524
    %782 = vmatprep.subr.bf16.mxu0 %v529
    %783 = vmatpush1.bf16.msra.mxu0 %v528
    %784 = vmatprep.subr.bf16.mxu0 %v533
    %785 = vmatpush1.bf16.msra.mxu0 %v532
    %786 = vmatprep.subr.bf16.mxu0 %v537
    %787 = vmatpush1.bf16.msra.mxu0 %v536
    %788 = vmatprep.subr.bf16.mxu0 %v541
    %789 = vmatpush1.bf16.msra.mxu0 %v540
    %790 = vmatprep.subr.bf16.mxu0 %v545
    %791 = vmatpush1.bf16.msra.mxu0 %v544
    %792 = vmatprep.subr.bf16.mxu0 0
    %793 = vmatpush1.bf16.msra.mxu0 0
    %794 = vmatprep.subr.bf16.mxu0 0
    %795 = vmatpush1.bf16.msra.mxu0 0
    %796 = vmatprep.subr.bf16.mxu0 0
    %797 = vmatpush1.bf16.msra.mxu0 0
    %798 = vmatprep.subr.bf16.mxu0 0
    %799 = vmatpush1.bf16.msra.mxu0 0
    %800 = vmatprep.subr.bf16.mxu0 0
    %801 = vmatpush1.bf16.msra.mxu0 0
    %802 = vmatprep.subr.bf16.mxu0 0
    %803 = vmatpush1.bf16.msra.mxu0 0
    %804 = vmatprep.subr.bf16.mxu0 0
    %805 = vmatpush1.bf16.msra.mxu0 0
    %806 = vmatprep.subr.bf16.mxu0 0
    %807 = vmatpush1.bf16.msra.mxu0 0
    %808 = vmatprep.mubr.bf16.mxu0 0
    %809 = vmatmul.mubr.bf16.gmra.mrb[0].mxu0 %v690
    %v810 = vpop.f32.mrb[0].mxu0
    %v811 = vadd.f32 0.0, %v810
    %v812 = vpop.f32.mrb[0].mxu0
    %v813 = vadd.f32 0.0, %v812
    %v814 = vpop.f32.mrb[0].mxu0
    %v815 = vpop.f32.mrb[0].mxu0
    %816 = vdwg.mxu0
    %817 = vmatprep.subr.bf16.mxu0 %v519
    %818 = vmatpush1.bf16.msra.mxu0 %v518
    %819 = vmatprep.subr.bf16.mxu0 %v523
    %820 = vmatpush1.bf16.msra.mxu0 %v522
    %821 = vmatprep.subr.bf16.mxu0 %v527
    %822 = vmatpush1.bf16.msra.mxu0 %v526
    %823 = vmatprep.subr.bf16.mxu0 %v531
    %824 = vmatpush1.bf16.msra.mxu0 %v530
    %825 = vmatprep.subr.bf16.mxu0 %v535
    %826 = vmatpush1.bf16.msra.mxu0 %v534
    %827 = vmatprep.subr.bf16.mxu0 %v539
    %828 = vmatpush1.bf16.msra.mxu0 %v538
    %829 = vmatprep.subr.bf16.mxu0 %v543
    %830 = vmatpush1.bf16.msra.mxu0 %v542
    %831 = vmatprep.subr.bf16.mxu0 %v547
    %832 = vmatpush1.bf16.msra.mxu0 %v546
    %833 = vmatprep.subr.bf16.mxu0 0
    %834 = vmatpush1.bf16.msra.mxu0 0
    %835 = vmatprep.subr.bf16.mxu0 0
    %836 = vmatpush1.bf16.msra.mxu0 0
    %837 = vmatprep.subr.bf16.mxu0 0
    %838 = vmatpush1.bf16.msra.mxu0 0
    %839 = vmatprep.subr.bf16.mxu0 0
    %840 = vmatpush1.bf16.msra.mxu0 0
    %841 = vmatprep.subr.bf16.mxu0 0
    %842 = vmatpush1.bf16.msra.mxu0 0
    %843 = vmatprep.subr.bf16.mxu0 0
    %844 = vmatpush1.bf16.msra.mxu0 0
    %845 = vmatprep.subr.bf16.mxu0 0
    %846 = vmatpush1.bf16.msra.mxu0 0
    %847 = vmatprep.subr.bf16.mxu0 0
    %848 = vmatpush1.bf16.msra.mxu0 0
    %849 = vmatprep.mubr.bf16.mxu0 0
    %850 = vmatmul.mubr.bf16.gmra.mrb[0].mxu0 %v690
    %v851 = vpop.f32.mrb[0].mxu0
    %v852 = vadd.f32 0.0, %v851
    %v853 = vpop.f32.mrb[0].mxu0
    %v854 = vadd.f32 0.0, %v853
    %v855 = vpop.f32.mrb[0].mxu0
    %v856 = vpop.f32.mrb[0].mxu0
    %857 = vdwg.mxu0
    %v858 = vadd.f32 %v729, %v811
    %v859 = vadd.f32 %v731, %v813
    %v860 = vadd.f32 %v770, %v852
    %v861 = vadd.f32 %v772, %v854
    %v862 = vxor.u32 %v858, 2147483648
    %v863 = vmul.f32 %v862, 1.442695
    %v864 = vpow.pop %v863
    %v865 = vadd.f32 %v864, 1.0
    %v866 = vrcp.pop %v865
    %v867 = vmul.f32 1.0, %v866
    %v868 = vxor.u32 %v859, 2147483648
    %v869 = vmul.f32 %v868, 1.442695
    %v870 = vpow.pop %v869
    %v871 = vadd.f32 %v870, 1.0
    %v872 = vrcp.pop %v871
    %v873 = vmul.f32 1.0, %v872
    %v874 = vtanh.pop %v860
    %v875 = vxor.u32 %v861, 2147483648
    %v876 = vmul.f32 %v875, 1.442695
    %v877 = vpow.pop %v876
    %v878 = vadd.f32 %v877, 1.0
    %v879 = vrcp.pop %v878
    %v880 = vmul.f32 1.0, %v879
    %v881 = vmul.f32 %v873, %v687
    %v882 = vmul.f32 %v867, %v874
    %v883 = vadd.f32 %v881, %v882
    %v884 = vtanh.pop %v883
    %v885 = vmul.f32 %v880, %v884
    %v886 = vpack.c.bf16 %v885, %v885
    %s887 = scalar_lea.vmem [#allocation2], 4
    %888 = vst [vmem:[%s887] sm:$0xf] %v886
    %s889 = scalar_lea.vmem %s0, 8
    %v890 = vld [vmem:[%s889] sm:$0xf]
    %891 = vmatprep.subr.bf16.mxu0 %v275
    %892 = vmatpush1.bf16.msra.mxu0 %v274
    %893 = vmatprep.subr.bf16.mxu0 %v279
    %894 = vmatpush1.bf16.msra.mxu0 %v278
    %895 = vmatprep.subr.bf16.mxu0 %v283
    %896 = vmatpush1.bf16.msra.mxu0 %v282
    %897 = vmatprep.subr.bf16.mxu0 %v287
    %898 = vmatpush1.bf16.msra.mxu0 %v286
    %899 = vmatprep.subr.bf16.mxu0 %v291
    %900 = vmatpush1.bf16.msra.mxu0 %v290
    %901 = vmatprep.subr.bf16.mxu0 %v295
    %902 = vmatpush1.bf16.msra.mxu0 %v294
    %903 = vmatprep.subr.bf16.mxu0 %v299
    %904 = vmatpush1.bf16.msra.mxu0 %v298
    %905 = vmatprep.subr.bf16.mxu0 %v303
    %906 = vmatpush1.bf16.msra.mxu0 %v302
    %907 = vmatprep.subr.bf16.mxu0 0
    %908 = vmatpush1.bf16.msra.mxu0 0
    %909 = vmatprep.subr.bf16.mxu0 0
    %910 = vmatpush1.bf16.msra.mxu0 0
    %911 = vmatprep.subr.bf16.mxu0 0
    %912 = vmatpush1.bf16.msra.mxu0 0
    %913 = vmatprep.subr.bf16.mxu0 0
    %914 = vmatpush1.bf16.msra.mxu0 0
    %915 = vmatprep.subr.bf16.mxu0 0
    %916 = vmatpush1.bf16.msra.mxu0 0
    %917 = vmatprep.subr.bf16.mxu0 0
    %918 = vmatpush1.bf16.msra.mxu0 0
    %919 = vmatprep.subr.bf16.mxu0 0
    %920 = vmatpush1.bf16.msra.mxu0 0
    %921 = vmatprep.subr.bf16.mxu0 0
    %922 = vmatpush1.bf16.msra.mxu0 0
    %923 = vmatprep.mubr.bf16.mxu0 0
    %924 = vmatmul.mubr.bf16.gmra.mrb[0].mxu0 %v890
    %v925 = vpop.f32.mrb[0].mxu0
    %v926 = vadd.f32 %v161, %v925
    %v927 = vpop.f32.mrb[0].mxu0
    %v928 = vadd.f32 %v165, %v927
    %v929 = vpop.f32.mrb[0].mxu0
    %v930 = vpop.f32.mrb[0].mxu0
    %931 = vdwg.mxu0
    %932 = vmatprep.subr.bf16.mxu0 %v277
    %933 = vmatpush1.bf16.msra.mxu0 %v276
    %934 = vmatprep.subr.bf16.mxu0 %v281
    %935 = vmatpush1.bf16.msra.mxu0 %v280
    %936 = vmatprep.subr.bf16.mxu0 %v285
    %937 = vmatpush1.bf16.msra.mxu0 %v284
    %938 = vmatprep.subr.bf16.mxu0 %v289
    %939 = vmatpush1.bf16.msra.mxu0 %v288
    %940 = vmatprep.subr.bf16.mxu0 %v293
    %941 = vmatpush1.bf16.msra.mxu0 %v292
    %942 = vmatprep.subr.bf16.mxu0 %v297
    %943 = vmatpush1.bf16.msra.mxu0 %v296
    %944 = vmatprep.subr.bf16.mxu0 %v301
    %945 = vmatpush1.bf16.msra.mxu0 %v300
    %946 = vmatprep.subr.bf16.mxu0 %v305
    %947 = vmatpush1.bf16.msra.mxu0 %v304
    %948 = vmatprep.subr.bf16.mxu0 0
    %949 = vmatpush1.bf16.msra.mxu0 0
    %950 = vmatprep.subr.bf16.mxu0 0
    %951 = vmatpush1.bf16.msra.mxu0 0
    %952 = vmatprep.subr.bf16.mxu0 0
    %953 = vmatpush1.bf16.msra.mxu0 0
    %954 = vmatprep.subr.bf16.mxu0 0
    %955 = vmatpush1.bf16.msra.mxu0 0
    %956 = vmatprep.subr.bf16.mxu0 0
    %957 = vmatpush1.bf16.msra.mxu0 0
    %958 = vmatprep.subr.bf16.mxu0 0
    %959 = vmatpush1.bf16.msra.mxu0 0
    %960 = vmatprep.subr.bf16.mxu0 0
    %961 = vmatpush1.bf16.msra.mxu0 0
    %962 = vmatprep.subr.bf16.mxu0 0
    %963 = vmatpush1.bf16.msra.mxu0 0
    %964 = vmatprep.mubr.bf16.mxu0 0
    %965 = vmatmul.mubr.bf16.gmra.mrb[0].mxu0 %v890
    %v966 = vpop.f32.mrb[0].mxu0
    %v967 = vadd.f32 %v169, %v966
    %v968 = vpop.f32.mrb[0].mxu0
    %v969 = vadd.f32 %v173, %v968
    %v970 = vpop.f32.mrb[0].mxu0
    %v971 = vpop.f32.mrb[0].mxu0
    %972 = vdwg.mxu0
    %973 = vmatprep.subr.bf16.mxu0 %v517
    %974 = vmatpush1.bf16.msra.mxu0 %v516
    %975 = vmatprep.subr.bf16.mxu0 %v521
    %976 = vmatpush1.bf16.msra.mxu0 %v520
    %977 = vmatprep.subr.bf16.mxu0 %v525
    %978 = vmatpush1.bf16.msra.mxu0 %v524
    %979 = vmatprep.subr.bf16.mxu0 %v529
    %980 = vmatpush1.bf16.msra.mxu0 %v528
    %981 = vmatprep.subr.bf16.mxu0 %v533
    %982 = vmatpush1.bf16.msra.mxu0 %v532
    %983 = vmatprep.subr.bf16.mxu0 %v537
    %984 = vmatpush1.bf16.msra.mxu0 %v536
    %985 = vmatprep.subr.bf16.mxu0 %v541
    %986 = vmatpush1.bf16.msra.mxu0 %v540
    %987 = vmatprep.subr.bf16.mxu0 %v545
    %988 = vmatpush1.bf16.msra.mxu0 %v544
    %989 = vmatprep.subr.bf16.mxu0 0
    %990 = vmatpush1.bf16.msra.mxu0 0
    %991 = vmatprep.subr.bf16.mxu0 0
    %992 = vmatpush1.bf16.msra.mxu0 0
    %993 = vmatprep.subr.bf16.mxu0 0
    %994 = vmatpush1.bf16.msra.mxu0 0
    %995 = vmatprep.subr.bf16.mxu0 0
    %996 = vmatpush1.bf16.msra.mxu0 0
    %997 = vmatprep.subr.bf16.mxu0 0
    %998 = vmatpush1.bf16.msra.mxu0 0
    %999 = vmatprep.subr.bf16.mxu0 0
    %1000 = vmatpush1.bf16.msra.mxu0 0
    %1001 = vmatprep.subr.bf16.mxu0 0
    %1002 = vmatpush1.bf16.msra.mxu0 0
    %1003 = vmatprep.subr.bf16.mxu0 0
    %1004 = vmatpush1.bf16.msra.mxu0 0
    %1005 = vmatprep.mubr.bf16.mxu0 0
    %1006 = vmatmul.mubr.bf16.gmra.mrb[0].mxu0 %v886
    %v1007 = vpop.f32.mrb[0].mxu0
    %v1008 = vadd.f32 0.0, %v1007
    %v1009 = vpop.f32.mrb[0].mxu0
    %v1010 = vadd.f32 0.0, %v1009
    %v1011 = vpop.f32.mrb[0].mxu0
    %v1012 = vpop.f32.mrb[0].mxu0
    %1013 = vdwg.mxu0
    %1014 = vmatprep.subr.bf16.mxu0 %v519
    %1015 = vmatpush1.bf16.msra.mxu0 %v518
    %1016 = vmatprep.subr.bf16.mxu0 %v523
    %1017 = vmatpush1.bf16.msra.mxu0 %v522
    %1018 = vmatprep.subr.bf16.mxu0 %v527
    %1019 = vmatpush1.bf16.msra.mxu0 %v526
    %1020 = vmatprep.subr.bf16.mxu0 %v531
    %1021 = vmatpush1.bf16.msra.mxu0 %v530
    %1022 = vmatprep.subr.bf16.mxu0 %v535
    %1023 = vmatpush1.bf16.msra.mxu0 %v534
    %1024 = vmatprep.subr.bf16.mxu0 %v539
    %1025 = vmatpush1.bf16.msra.mxu0 %v538
    %1026 = vmatprep.subr.bf16.mxu0 %v543
    %1027 = vmatpush1.bf16.msra.mxu0 %v542
    %1028 = vmatprep.subr.bf16.mxu0 %v547
    %1029 = vmatpush1.bf16.msra.mxu0 %v546
    %1030 = vmatprep.subr.bf16.mxu0 0
    %1031 = vmatpush1.bf16.msra.mxu0 0
    %1032 = vmatprep.subr.bf16.mxu0 0
    %1033 = vmatpush1.bf16.msra.mxu0 0
    %1034 = vmatprep.subr.bf16.mxu0 0
    %1035 = vmatpush1.bf16.msra.mxu0 0
    %1036 = vmatprep.subr.bf16.mxu0 0
    %1037 = vmatpush1.bf16.msra.mxu0 0
    %1038 = vmatprep.subr.bf16.mxu0 0
    %1039 = vmatpush1.bf16.msra.mxu0 0
    %1040 = vmatprep.subr.bf16.mxu0 0
    %1041 = vmatpush1.bf16.msra.mxu0 0
    %1042 = vmatprep.subr.bf16.mxu0 0
    %1043 = vmatpush1.bf16.msra.mxu0 0
    %1044 = vmatprep.subr.bf16.mxu0 0
    %1045 = vmatpush1.bf16.msra.mxu0 0
    %1046 = vmatprep.mubr.bf16.mxu0 0
    %1047 = vmatmul.mubr.bf16.gmra.mrb[0].mxu0 %v886
    %v1048 = vpop.f32.mrb[0].mxu0
    %v1049 = vadd.f32 0.0, %v1048
    %v1050 = vpop.f32.mrb[0].mxu0
    %v1051 = vadd.f32 0.0, %v1050
    %v1052 = vpop.f32.mrb[0].mxu0
    %v1053 = vpop.f32.mrb[0].mxu0
    %1054 = vdwg.mxu0
    %v1055 = vadd.f32 %v926, %v1008
    %v1056 = vadd.f32 %v928, %v1010
    %v1057 = vadd.f32 %v967, %v1049
    %v1058 = vadd.f32 %v969, %v1051
    %v1059 = vxor.u32 %v1055, 2147483648
    %v1060 = vmul.f32 %v1059, 1.442695
    %v1061 = vpow.pop %v1060
    %v1062 = vadd.f32 %v1061, 1.0
    %v1063 = vrcp.pop %v1062
    %v1064 = vmul.f32 1.0, %v1063
    %v1065 = vxor.u32 %v1056, 2147483648
    %v1066 = vmul.f32 %v1065, 1.442695
    %v1067 = vpow.pop %v1066
    %v1068 = vadd.f32 %v1067, 1.0
    %v1069 = vrcp.pop %v1068
    %v1070 = vmul.f32 1.0, %v1069
    %v1071 = vtanh.pop %v1057
    %v1072 = vxor.u32 %v1058, 2147483648
    %v1073 = vmul.f32 %v1072, 1.442695
    %v1074 = vpow.pop %v1073
    %v1075 = vadd.f32 %v1074, 1.0
    %v1076 = vrcp.pop %v1075
    %v1077 = vmul.f32 1.0, %v1076
    %v1078 = vmul.f32 %v1070, %v883
    %v1079 = vmul.f32 %v1064, %v1071
    %v1080 = vadd.f32 %v1078, %v1079
    %v1081 = vtanh.pop %v1080
    %v1082 = vmul.f32 %v1077, %v1081
    %v1083 = vpack.c.bf16 %v1082, %v1082
    %s1084 = scalar_lea.vmem [#allocation2], 8
    %1085 = vst [vmem:[%s1084] sm:$0xf] %v1083
    %s1086 = scalar_lea.vmem %s0, 12
    %v1087 = vld [vmem:[%s1086] sm:$0xf]
    %1088 = vmatprep.subr.bf16.mxu0 %v275
    %1089 = vmatpush1.bf16.msra.mxu0 %v274
    %1090 = vmatprep.subr.bf16.mxu0 %v279
    %1091 = vmatpush1.bf16.msra.mxu0 %v278
    %1092 = vmatprep.subr.bf16.mxu0 %v283
    %1093 = vmatpush1.bf16.msra.mxu0 %v282
    %1094 = vmatprep.subr.bf16.mxu0 %v287
    %1095 = vmatpush1.bf16.msra.mxu0 %v286
    %1096 = vmatprep.subr.bf16.mxu0 %v291
    %1097 = vmatpush1.bf16.msra.mxu0 %v290
    %1098 = vmatprep.subr.bf16.mxu0 %v295
    %1099 = vmatpush1.bf16.msra.mxu0 %v294
    %1100 = vmatprep.subr.bf16.mxu0 %v299
    %1101 = vmatpush1.bf16.msra.mxu0 %v298
    %1102 = vmatprep.subr.bf16.mxu0 %v303
    %1103 = vmatpush1.bf16.msra.mxu0 %v302
    %1104 = vmatprep.subr.bf16.mxu0 0
    %1105 = vmatpush1.bf16.msra.mxu0 0
    %1106 = vmatprep.subr.bf16.mxu0 0
    %1107 = vmatpush1.bf16.msra.mxu0 0
    %1108 = vmatprep.subr.bf16.mxu0 0
    %1109 = vmatpush1.bf16.msra.mxu0 0
    %1110 = vmatprep.subr.bf16.mxu0 0
    %1111 = vmatpush1.bf16.msra.mxu0 0
    %1112 = vmatprep.subr.bf16.mxu0 0
    %1113 = vmatpush1.bf16.msra.mxu0 0
    %1114 = vmatprep.subr.bf16.mxu0 0
    %1115 = vmatpush1.bf16.msra.mxu0 0
    %1116 = vmatprep.subr.bf16.mxu0 0
    %1117 = vmatpush1.bf16.msra.mxu0 0
    %1118 = vmatprep.subr.bf16.mxu0 0
    %1119 = vmatpush1.bf16.msra.mxu0 0
    %1120 = vmatprep.mubr.bf16.mxu0 0
    %1121 = vmatmul.mubr.bf16.gmra.mrb[0].mxu0 %v1087
    %v1122 = vpop.f32.mrb[0].mxu0
    %v1123 = vadd.f32 %v161, %v1122
    %v1124 = vpop.f32.mrb[0].mxu0
    %v1125 = vadd.f32 %v165, %v1124
    %v1126 = vpop.f32.mrb[0].mxu0
    %v1127 = vpop.f32.mrb[0].mxu0
    %1128 = vdwg.mxu0
    %1129 = vmatprep.subr.bf16.mxu0 %v277
    %1130 = vmatpush1.bf16.msra.mxu0 %v276
    %1131 = vmatprep.subr.bf16.mxu0 %v281
    %1132 = vmatpush1.bf16.msra.mxu0 %v280
    %1133 = vmatprep.subr.bf16.mxu0 %v285
    %1134 = vmatpush1.bf16.msra.mxu0 %v284
    %1135 = vmatprep.subr.bf16.mxu0 %v289
    %1136 = vmatpush1.bf16.msra.mxu0 %v288
    %1137 = vmatprep.subr.bf16.mxu0 %v293
    %1138 = vmatpush1.bf16.msra.mxu0 %v292
    %1139 = vmatprep.subr.bf16.mxu0 %v297
    %1140 = vmatpush1.bf16.msra.mxu0 %v296
    %1141 = vmatprep.subr.bf16.mxu0 %v301
    %1142 = vmatpush1.bf16.msra.mxu0 %v300
    %1143 = vmatprep.subr.bf16.mxu0 %v305
    %1144 = vmatpush1.bf16.msra.mxu0 %v304
    %1145 = vmatprep.subr.bf16.mxu0 0
    %1146 = vmatpush1.bf16.msra.mxu0 0
    %1147 = vmatprep.subr.bf16.mxu0 0
    %1148 = vmatpush1.bf16.msra.mxu0 0
    %1149 = vmatprep.subr.bf16.mxu0 0
    %1150 = vmatpush1.bf16.msra.mxu0 0
    %1151 = vmatprep.subr.bf16.mxu0 0
    %1152 = vmatpush1.bf16.msra.mxu0 0
    %1153 = vmatprep.subr.bf16.mxu0 0
    %1154 = vmatpush1.bf16.msra.mxu0 0
    %1155 = vmatprep.subr.bf16.mxu0 0
    %1156 = vmatpush1.bf16.msra.mxu0 0
    %1157 = vmatprep.subr.bf16.mxu0 0
    %1158 = vmatpush1.bf16.msra.mxu0 0
    %1159 = vmatprep.subr.bf16.mxu0 0
    %1160 = vmatpush1.bf16.msra.mxu0 0
    %1161 = vmatprep.mubr.bf16.mxu0 0
    %1162 = vmatmul.mubr.bf16.gmra.mrb[0].mxu0 %v1087
    %v1163 = vpop.f32.mrb[0].mxu0
    %v1164 = vadd.f32 %v169, %v1163
    %v1165 = vpop.f32.mrb[0].mxu0
    %v1166 = vadd.f32 %v173, %v1165
    %v1167 = vpop.f32.mrb[0].mxu0
    %v1168 = vpop.f32.mrb[0].mxu0
    %1169 = vdwg.mxu0
    %1170 = vmatprep.subr.bf16.mxu0 %v517
    %1171 = vmatpush1.bf16.msra.mxu0 %v516
    %1172 = vmatprep.subr.bf16.mxu0 %v521
    %1173 = vmatpush1.bf16.msra.mxu0 %v520
    %1174 = vmatprep.subr.bf16.mxu0 %v525
    %1175 = vmatpush1.bf16.msra.mxu0 %v524
    %1176 = vmatprep.subr.bf16.mxu0 %v529
    %1177 = vmatpush1.bf16.msra.mxu0 %v528
    %1178 = vmatprep.subr.bf16.mxu0 %v533
    %1179 = vmatpush1.bf16.msra.mxu0 %v532
    %1180 = vmatprep.subr.bf16.mxu0 %v537
    %1181 = vmatpush1.bf16.msra.mxu0 %v536
    %1182 = vmatprep.subr.bf16.mxu0 %v541
    %1183 = vmatpush1.bf16.msra.mxu0 %v540
    %1184 = vmatprep.subr.bf16.mxu0 %v545
    %1185 = vmatpush1.bf16.msra.mxu0 %v544
    %1186 = vmatprep.subr.bf16.mxu0 0
    %1187 = vmatpush1.bf16.msra.mxu0 0
    %1188 = vmatprep.subr.bf16.mxu0 0
    %1189 = vmatpush1.bf16.msra.mxu0 0
    %1190 = vmatprep.subr.bf16.mxu0 0
    %1191 = vmatpush1.bf16.msra.mxu0 0
    %1192 = vmatprep.subr.bf16.mxu0 0
    %1193 = vmatpush1.bf16.msra.mxu0 0
    %1194 = vmatprep.subr.bf16.mxu0 0
    %1195 = vmatpush1.bf16.msra.mxu0 0
    %1196 = vmatprep.subr.bf16.mxu0 0
    %1197 = vmatpush1.bf16.msra.mxu0 0
    %1198 = vmatprep.subr.bf16.mxu0 0
    %1199 = vmatpush1.bf16.msra.mxu0 0
    %1200 = vmatprep.subr.bf16.mxu0 0
    %1201 = vmatpush1.bf16.msra.mxu0 0
    %1202 = vmatprep.mubr.bf16.mxu0 0
    %1203 = vmatmul.mubr.bf16.gmra.mrb[0].mxu0 %v1083
    %v1204 = vpop.f32.mrb[0].mxu0
    %v1205 = vadd.f32 0.0, %v1204
    %v1206 = vpop.f32.mrb[0].mxu0
    %v1207 = vadd.f32 0.0, %v1206
    %v1208 = vpop.f32.mrb[0].mxu0
    %v1209 = vpop.f32.mrb[0].mxu0
    %1210 = vdwg.mxu0
    %1211 = vmatprep.subr.bf16.mxu0 %v519
    %1212 = vmatpush1.bf16.msra.mxu0 %v518
    %1213 = vmatprep.subr.bf16.mxu0 %v523
    %1214 = vmatpush1.bf16.msra.mxu0 %v522
    %1215 = vmatprep.subr.bf16.mxu0 %v527
    %1216 = vmatpush1.bf16.msra.mxu0 %v526
    %1217 = vmatprep.subr.bf16.mxu0 %v531
    %1218 = vmatpush1.bf16.msra.mxu0 %v530
    %1219 = vmatprep.subr.bf16.mxu0 %v535
    %1220 = vmatpush1.bf16.msra.mxu0 %v534
    %1221 = vmatprep.subr.bf16.mxu0 %v539
    %1222 = vmatpush1.bf16.msra.mxu0 %v538
    %1223 = vmatprep.subr.bf16.mxu0 %v543
    %1224 = vmatpush1.bf16.msra.mxu0 %v542
    %1225 = vmatprep.subr.bf16.mxu0 %v547
    %1226 = vmatpush1.bf16.msra.mxu0 %v546
    %1227 = vmatprep.subr.bf16.mxu0 0
    %1228 = vmatpush1.bf16.msra.mxu0 0
    %1229 = vmatprep.subr.bf16.mxu0 0
    %1230 = vmatpush1.bf16.msra.mxu0 0
    %1231 = vmatprep.subr.bf16.mxu0 0
    %1232 = vmatpush1.bf16.msra.mxu0 0
    %1233 = vmatprep.subr.bf16.mxu0 0
    %1234 = vmatpush1.bf16.msra.mxu0 0
    %1235 = vmatprep.subr.bf16.mxu0 0
    %1236 = vmatpush1.bf16.msra.mxu0 0
    %1237 = vmatprep.subr.bf16.mxu0 0
    %1238 = vmatpush1.bf16.msra.mxu0 0
    %1239 = vmatprep.subr.bf16.mxu0 0
    %1240 = vmatpush1.bf16.msra.mxu0 0
    %1241 = vmatprep.subr.bf16.mxu0 0
    %1242 = vmatpush1.bf16.msra.mxu0 0
    %1243 = vmatprep.mubr.bf16.mxu0 0
    %1244 = vmatmul.mubr.bf16.gmra.mrb[0].mxu0 %v1083
    %v1245 = vpop.f32.mrb[0].mxu0
    %v1246 = vadd.f32 0.0, %v1245
    %v1247 = vpop.f32.mrb[0].mxu0
    %v1248 = vadd.f32 0.0, %v1247
    %v1249 = vpop.f32.mrb[0].mxu0
    %v1250 = vpop.f32.mrb[0].mxu0
    %1251 = vdwg.mxu0
    %v1252 = vadd.f32 %v1123, %v1205
    %v1253 = vadd.f32 %v1125, %v1207
    %v1254 = vadd.f32 %v1164, %v1246
    %v1255 = vadd.f32 %v1166, %v1248
    %v1256 = vxor.u32 %v1252, 2147483648
    %v1257 = vmul.f32 %v1256, 1.442695
    %v1258 = vpow.pop %v1257
    %v1259 = vadd.f32 %v1258, 1.0
    %v1260 = vrcp.pop %v1259
    %v1261 = vmul.f32 1.0, %v1260
    %v1262 = vxor.u32 %v1253, 2147483648
    %v1263 = vmul.f32 %v1262, 1.442695
    %v1264 = vpow.pop %v1263
    %v1265 = vadd.f32 %v1264, 1.0
    %v1266 = vrcp.pop %v1265
    %v1267 = vmul.f32 1.0, %v1266
    %v1268 = vtanh.pop %v1254
    %v1269 = vxor.u32 %v1255, 2147483648
    %v1270 = vmul.f32 %v1269, 1.442695
    %v1271 = vpow.pop %v1270
    %v1272 = vadd.f32 %v1271, 1.0
    %v1273 = vrcp.pop %v1272
    %v1274 = vmul.f32 1.0, %v1273
    %v1275 = vmul.f32 %v1267, %v1080
    %v1276 = vmul.f32 %v1261, %v1268
    %v1277 = vadd.f32 %v1275, %v1276
    %v1278 = vtanh.pop %v1277
    %v1279 = vmul.f32 %v1274, %v1278
    %v1280 = vpack.c.bf16 %v1279, %v1279
    %s1281 = scalar_lea.vmem [#allocation2], 12
    %1282 = vst [vmem:[%s1281] sm:$0xf] %v1280
    %s1283 = scalar_lea.vmem %s0, 16
    %v1284 = vld [vmem:[%s1283] sm:$0xf]
    %1285 = vmatprep.subr.bf16.mxu0 %v275
    %1286 = vmatpush1.bf16.msra.mxu0 %v274
    %1287 = vmatprep.subr.bf16.mxu0 %v279
    %1288 = vmatpush1.bf16.msra.mxu0 %v278
    %1289 = vmatprep.subr.bf16.mxu0 %v283
    %1290 = vmatpush1.bf16.msra.mxu0 %v282
    %1291 = vmatprep.subr.bf16.mxu0 %v287
    %1292 = vmatpush1.bf16.msra.mxu0 %v286
    %1293 = vmatprep.subr.bf16.mxu0 %v291
    %1294 = vmatpush1.bf16.msra.mxu0 %v290
    %1295 = vmatprep.subr.bf16.mxu0 %v295
    %1296 = vmatpush1.bf16.msra.mxu0 %v294
    %1297 = vmatprep.subr.bf16.mxu0 %v299
    %1298 = vmatpush1.bf16.msra.mxu0 %v298
    %1299 = vmatprep.subr.bf16.mxu0 %v303
    %1300 = vmatpush1.bf16.msra.mxu0 %v302
    %1301 = vmatprep.subr.bf16.mxu0 0
    %1302 = vmatpush1.bf16.msra.mxu0 0
    %1303 = vmatprep.subr.bf16.mxu0 0
    %1304 = vmatpush1.bf16.msra.mxu0 0
    %1305 = vmatprep.subr.bf16.mxu0 0
    %1306 = vmatpush1.bf16.msra.mxu0 0
    %1307 = vmatprep.subr.bf16.mxu0 0
    %1308 = vmatpush1.bf16.msra.mxu0 0
    %1309 = vmatprep.subr.bf16.mxu0 0
    %1310 = vmatpush1.bf16.msra.mxu0 0
    %1311 = vmatprep.subr.bf16.mxu0 0
    %1312 = vmatpush1.bf16.msra.mxu0 0
    %1313 = vmatprep.subr.bf16.mxu0 0
    %1314 = vmatpush1.bf16.msra.mxu0 0
    %1315 = vmatprep.subr.bf16.mxu0 0
    %1316 = vmatpush1.bf16.msra.mxu0 0
    %1317 = vmatprep.mubr.bf16.mxu0 0
    %1318 = vmatmul.mubr.bf16.gmra.mrb[0].mxu0 %v1284
    %v1319 = vpop.f32.mrb[0].mxu0
    %v1320 = vadd.f32 %v161, %v1319
    %v1321 = vpop.f32.mrb[0].mxu0
    %v1322 = vadd.f32 %v165, %v1321
    %v1323 = vpop.f32.mrb[0].mxu0
    %v1324 = vpop.f32.mrb[0].mxu0
    %1325 = vdwg.mxu0
    %1326 = vmatprep.subr.bf16.mxu0 %v277
    %1327 = vmatpush1.bf16.msra.mxu0 %v276
    %1328 = vmatprep.subr.bf16.mxu0 %v281
    %1329 = vmatpush1.bf16.msra.mxu0 %v280
    %1330 = vmatprep.subr.bf16.mxu0 %v285
    %1331 = vmatpush1.bf16.msra.mxu0 %v284
    %1332 = vmatprep.subr.bf16.mxu0 %v289
    %1333 = vmatpush1.bf16.msra.mxu0 %v288
    %1334 = vmatprep.subr.bf16.mxu0 %v293
    %1335 = vmatpush1.bf16.msra.mxu0 %v292
    %1336 = vmatprep.subr.bf16.mxu0 %v297
    %1337 = vmatpush1.bf16.msra.mxu0 %v296
    %1338 = vmatprep.subr.bf16.mxu0 %v301
    %1339 = vmatpush1.bf16.msra.mxu0 %v300
    %1340 = vmatprep.subr.bf16.mxu0 %v305
    %1341 = vmatpush1.bf16.msra.mxu0 %v304
    %1342 = vmatprep.subr.bf16.mxu0 0
    %1343 = vmatpush1.bf16.msra.mxu0 0
    %1344 = vmatprep.subr.bf16.mxu0 0
    %1345 = vmatpush1.bf16.msra.mxu0 0
    %1346 = vmatprep.subr.bf16.mxu0 0
    %1347 = vmatpush1.bf16.msra.mxu0 0
    %1348 = vmatprep.subr.bf16.mxu0 0
    %1349 = vmatpush1.bf16.msra.mxu0 0
    %1350 = vmatprep.subr.bf16.mxu0 0
    %1351 = vmatpush1.bf16.msra.mxu0 0
    %1352 = vmatprep.subr.bf16.mxu0 0
    %1353 = vmatpush1.bf16.msra.mxu0 0
    %1354 = vmatprep.subr.bf16.mxu0 0
    %1355 = vmatpush1.bf16.msra.mxu0 0
    %1356 = vmatprep.subr.bf16.mxu0 0
    %1357 = vmatpush1.bf16.msra.mxu0 0
    %1358 = vmatprep.mubr.bf16.mxu0 0
    %1359 = vmatmul.mubr.bf16.gmra.mrb[0].mxu0 %v1284
    %v1360 = vpop.f32.mrb[0].mxu0
    %v1361 = vadd.f32 %v169, %v1360
    %v1362 = vpop.f32.mrb[0].mxu0
    %v1363 = vadd.f32 %v173, %v1362
    %v1364 = vpop.f32.mrb[0].mxu0
    %v1365 = vpop.f32.mrb[0].mxu0
    %1366 = vdwg.mxu0
    %1367 = vmatprep.subr.bf16.mxu0 %v517
    %1368 = vmatpush1.bf16.msra.mxu0 %v516
    %1369 = vmatprep.subr.bf16.mxu0 %v521
    %1370 = vmatpush1.bf16.msra.mxu0 %v520
    %1371 = vmatprep.subr.bf16.mxu0 %v525
    %1372 = vmatpush1.bf16.msra.mxu0 %v524
    %1373 = vmatprep.subr.bf16.mxu0 %v529
    %1374 = vmatpush1.bf16.msra.mxu0 %v528
    %1375 = vmatprep.subr.bf16.mxu0 %v533
    %1376 = vmatpush1.bf16.msra.mxu0 %v532
    %1377 = vmatprep.subr.bf16.mxu0 %v537
    %1378 = vmatpush1.bf16.msra.mxu0 %v536
    %1379 = vmatprep.subr.bf16.mxu0 %v541
    %1380 = vmatpush1.bf16.msra.mxu0 %v540
    %1381 = vmatprep.subr.bf16.mxu0 %v545
    %1382 = vmatpush1.bf16.msra.mxu0 %v544
    %1383 = vmatprep.subr.bf16.mxu0 0
    %1384 = vmatpush1.bf16.msra.mxu0 0
    %1385 = vmatprep.subr.bf16.mxu0 0
    %1386 = vmatpush1.bf16.msra.mxu0 0
    %1387 = vmatprep.subr.bf16.mxu0 0
    %1388 = vmatpush1.bf16.msra.mxu0 0
    %1389 = vmatprep.subr.bf16.mxu0 0
    %1390 = vmatpush1.bf16.msra.mxu0 0
    %1391 = vmatprep.subr.bf16.mxu0 0
    %1392 = vmatpush1.bf16.msra.mxu0 0
    %1393 = vmatprep.subr.bf16.mxu0 0
    %1394 = vmatpush1.bf16.msra.mxu0 0
    %1395 = vmatprep.subr.bf16.mxu0 0
    %1396 = vmatpush1.bf16.msra.mxu0 0
    %1397 = vmatprep.subr.bf16.mxu0 0
    %1398 = vmatpush1.bf16.msra.mxu0 0
    %1399 = vmatprep.mubr.bf16.mxu0 0
    %1400 = vmatmul.mubr.bf16.gmra.mrb[0].mxu0 %v1280
    %v1401 = vpop.f32.mrb[0].mxu0
    %v1402 = vadd.f32 0.0, %v1401
    %v1403 = vpop.f32.mrb[0].mxu0
    %v1404 = vadd.f32 0.0, %v1403
    %v1405 = vpop.f32.mrb[0].mxu0
    %v1406 = vpop.f32.mrb[0].mxu0
    %1407 = vdwg.mxu0
    %1408 = vmatprep.subr.bf16.mxu0 %v519
    %1409 = vmatpush1.bf16.msra.mxu0 %v518
    %1410 = vmatprep.subr.bf16.mxu0 %v523
    %1411 = vmatpush1.bf16.msra.mxu0 %v522
    %1412 = vmatprep.subr.bf16.mxu0 %v527
    %1413 = vmatpush1.bf16.msra.mxu0 %v526
    %1414 = vmatprep.subr.bf16.mxu0 %v531
    %1415 = vmatpush1.bf16.msra.mxu0 %v530
    %1416 = vmatprep.subr.bf16.mxu0 %v535
    %1417 = vmatpush1.bf16.msra.mxu0 %v534
    %1418 = vmatprep.subr.bf16.mxu0 %v539
    %1419 = vmatpush1.bf16.msra.mxu0 %v538
    %1420 = vmatprep.subr.bf16.mxu0 %v543
    %1421 = vmatpush1.bf16.msra.mxu0 %v542
    %1422 = vmatprep.subr.bf16.mxu0 %v547
    %1423 = vmatpush1.bf16.msra.mxu0 %v546
    %1424 = vmatprep.subr.bf16.mxu0 0
    %1425 = vmatpush1.bf16.msra.mxu0 0
    %1426 = vmatprep.subr.bf16.mxu0 0
    %1427 = vmatpush1.bf16.msra.mxu0 0
    %1428 = vmatprep.subr.bf16.mxu0 0
    %1429 = vmatpush1.bf16.msra.mxu0 0
    %1430 = vmatprep.subr.bf16.mxu0 0
    %1431 = vmatpush1.bf16.msra.mxu0 0
    %1432 = vmatprep.subr.bf16.mxu0 0
    %1433 = vmatpush1.bf16.msra.mxu0 0
    %1434 = vmatprep.subr.bf16.mxu0 0
    %1435 = vmatpush1.bf16.msra.mxu0 0
    %1436 = vmatprep.subr.bf16.mxu0 0
    %1437 = vmatpush1.bf16.msra.mxu0 0
    %1438 = vmatprep.subr.bf16.mxu0 0
    %1439 = vmatpush1.bf16.msra.mxu0 0
    %1440 = vmatprep.mubr.bf16.mxu0 0
    %1441 = vmatmul.mubr.bf16.gmra.mrb[0].mxu0 %v1280
    %v1442 = vpop.f32.mrb[0].mxu0
    %v1443 = vadd.f32 0.0, %v1442
    %v1444 = vpop.f32.mrb[0].mxu0
    %v1445 = vadd.f32 0.0, %v1444
    %v1446 = vpop.f32.mrb[0].mxu0
    %v1447 = vpop.f32.mrb[0].mxu0
    %1448 = vdwg.mxu0
    %v1449 = vadd.f32 %v1320, %v1402
    %v1450 = vadd.f32 %v1322, %v1404
    %v1451 = vadd.f32 %v1361, %v1443
    %v1452 = vadd.f32 %v1363, %v1445
    %v1453 = vxor.u32 %v1449, 2147483648
    %v1454 = vmul.f32 %v1453, 1.442695
    %v1455 = vpow.pop %v1454
    %v1456 = vadd.f32 %v1455, 1.0
    %v1457 = vrcp.pop %v1456
    %v1458 = vmul.f32 1.0, %v1457
    %v1459 = vxor.u32 %v1450, 2147483648
    %v1460 = vmul.f32 %v1459, 1.442695
    %v1461 = vpow.pop %v1460
    %v1462 = vadd.f32 %v1461, 1.0
    %v1463 = vrcp.pop %v1462
    %v1464 = vmul.f32 1.0, %v1463
    %v1465 = vtanh.pop %v1451
    %v1466 = vxor.u32 %v1452, 2147483648
    %v1467 = vmul.f32 %v1466, 1.442695
    %v1468 = vpow.pop %v1467
    %v1469 = vadd.f32 %v1468, 1.0
    %v1470 = vrcp.pop %v1469
    %v1471 = vmul.f32 1.0, %v1470
    %v1472 = vmul.f32 %v1464, %v1277
    %v1473 = vmul.f32 %v1458, %v1465
    %v1474 = vadd.f32 %v1472, %v1473
    %v1475 = vtanh.pop %v1474
    %v1476 = vmul.f32 %v1471, %v1475
    %v1477 = vpack.c.bf16 %v1476, %v1476
    %s1478 = scalar_lea.vmem [#allocation2], 16
    %1479 = vst [vmem:[%s1478] sm:$0xf] %v1477
    %s1480 = scalar_lea.vmem %s0, 20
    %v1481 = vld [vmem:[%s1480] sm:$0xf]
    %1482 = vmatprep.subr.bf16.mxu0 %v275
    %1483 = vmatpush1.bf16.msra.mxu0 %v274
    %1484 = vmatprep.subr.bf16.mxu0 %v279
    %1485 = vmatpush1.bf16.msra.mxu0 %v278
    %1486 = vmatprep.subr.bf16.mxu0 %v283
    %1487 = vmatpush1.bf16.msra.mxu0 %v282
    %1488 = vmatprep.subr.bf16.mxu0 %v287
    %1489 = vmatpush1.bf16.msra.mxu0 %v286
    %1490 = vmatprep.subr.bf16.mxu0 %v291
    %1491 = vmatpush1.bf16.msra.mxu0 %v290
    %1492 = vmatprep.subr.bf16.mxu0 %v295
    %1493 = vmatpush1.bf16.msra.mxu0 %v294
    %1494 = vmatprep.subr.bf16.mxu0 %v299
    %1495 = vmatpush1.bf16.msra.mxu0 %v298
    %1496 = vmatprep.subr.bf16.mxu0 %v303
    %1497 = vmatpush1.bf16.msra.mxu0 %v302
    %1498 = vmatprep.subr.bf16.mxu0 0
    %1499 = vmatpush1.bf16.msra.mxu0 0
    %1500 = vmatprep.subr.bf16.mxu0 0
    %1501 = vmatpush1.bf16.msra.mxu0 0
    %1502 = vmatprep.subr.bf16.mxu0 0
    %1503 = vmatpush1.bf16.msra.mxu0 0
    %1504 = vmatprep.subr.bf16.mxu0 0
    %1505 = vmatpush1.bf16.msra.mxu0 0
    %1506 = vmatprep.subr.bf16.mxu0 0
    %1507 = vmatpush1.bf16.msra.mxu0 0
    %1508 = vmatprep.subr.bf16.mxu0 0
    %1509 = vmatpush1.bf16.msra.mxu0 0
    %1510 = vmatprep.subr.bf16.mxu0 0
    %1511 = vmatpush1.bf16.msra.mxu0 0
    %1512 = vmatprep.subr.bf16.mxu0 0
    %1513 = vmatpush1.bf16.msra.mxu0 0
    %1514 = vmatprep.mubr.bf16.mxu0 0
    %1515 = vmatmul.mubr.bf16.gmra.mrb[0].mxu0 %v1481
    %v1516 = vpop.f32.mrb[0].mxu0
    %v1517 = vadd.f32 %v161, %v1516
    %v1518 = vpop.f32.mrb[0].mxu0
    %v1519 = vadd.f32 %v165, %v1518
    %v1520 = vpop.f32.mrb[0].mxu0
    %v1521 = vpop.f32.mrb[0].mxu0
    %1522 = vdwg.mxu0
    %1523 = vmatprep.subr.bf16.mxu0 %v277
    %1524 = vmatpush1.bf16.msra.mxu0 %v276
    %1525 = vmatprep.subr.bf16.mxu0 %v281
    %1526 = vmatpush1.bf16.msra.mxu0 %v280
    %1527 = vmatprep.subr.bf16.mxu0 %v285
    %1528 = vmatpush1.bf16.msra.mxu0 %v284
    %1529 = vmatprep.subr.bf16.mxu0 %v289
    %1530 = vmatpush1.bf16.msra.mxu0 %v288
    %1531 = vmatprep.subr.bf16.mxu0 %v293
    %1532 = vmatpush1.bf16.msra.mxu0 %v292
    %1533 = vmatprep.subr.bf16.mxu0 %v297
    %1534 = vmatpush1.bf16.msra.mxu0 %v296
    %1535 = vmatprep.subr.bf16.mxu0 %v301
    %1536 = vmatpush1.bf16.msra.mxu0 %v300
    %1537 = vmatprep.subr.bf16.mxu0 %v305
    %1538 = vmatpush1.bf16.msra.mxu0 %v304
    %1539 = vmatprep.subr.bf16.mxu0 0
    %1540 = vmatpush1.bf16.msra.mxu0 0
    %1541 = vmatprep.subr.bf16.mxu0 0
    %1542 = vmatpush1.bf16.msra.mxu0 0
    %1543 = vmatprep.subr.bf16.mxu0 0
    %1544 = vmatpush1.bf16.msra.mxu0 0
    %1545 = vmatprep.subr.bf16.mxu0 0
    %1546 = vmatpush1.bf16.msra.mxu0 0
    %1547 = vmatprep.subr.bf16.mxu0 0
    %1548 = vmatpush1.bf16.msra.mxu0 0
    %1549 = vmatprep.subr.bf16.mxu0 0
    %1550 = vmatpush1.bf16.msra.mxu0 0
    %1551 = vmatprep.subr.bf16.mxu0 0
    %1552 = vmatpush1.bf16.msra.mxu0 0
    %1553 = vmatprep.subr.bf16.mxu0 0
    %1554 = vmatpush1.bf16.msra.mxu0 0
    %1555 = vmatprep.mubr.bf16.mxu0 0
    %1556 = vmatmul.mubr.bf16.gmra.mrb[0].mxu0 %v1481
    %v1557 = vpop.f32.mrb[0].mxu0
    %v1558 = vadd.f32 %v169, %v1557
    %v1559 = vpop.f32.mrb[0].mxu0
    %v1560 = vadd.f32 %v173, %v1559
    %v1561 = vpop.f32.mrb[0].mxu0
    %v1562 = vpop.f32.mrb[0].mxu0
    %1563 = vdwg.mxu0
    %1564 = vmatprep.subr.bf16.mxu0 %v517
    %1565 = vmatpush1.bf16.msra.mxu0 %v516
    %1566 = vmatprep.subr.bf16.mxu0 %v521
    %1567 = vmatpush1.bf16.msra.mxu0 %v520
    %1568 = vmatprep.subr.bf16.mxu0 %v525
    %1569 = vmatpush1.bf16.msra.mxu0 %v524
    %1570 = vmatprep.subr.bf16.mxu0 %v529
    %1571 = vmatpush1.bf16.msra.mxu0 %v528
    %1572 = vmatprep.subr.bf16.mxu0 %v533
    %1573 = vmatpush1.bf16.msra.mxu0 %v532
    %1574 = vmatprep.subr.bf16.mxu0 %v537
    %1575 = vmatpush1.bf16.msra.mxu0 %v536
    %1576 = vmatprep.subr.bf16.mxu0 %v541
    %1577 = vmatpush1.bf16.msra.mxu0 %v540
    %1578 = vmatprep.subr.bf16.mxu0 %v545
    %1579 = vmatpush1.bf16.msra.mxu0 %v544
    %1580 = vmatprep.subr.bf16.mxu0 0
    %1581 = vmatpush1.bf16.msra.mxu0 0
    %1582 = vmatprep.subr.bf16.mxu0 0
    %1583 = vmatpush1.bf16.msra.mxu0 0
    %1584 = vmatprep.subr.bf16.mxu0 0
    %1585 = vmatpush1.bf16.msra.mxu0 0
    %1586 = vmatprep.subr.bf16.mxu0 0
    %1587 = vmatpush1.bf16.msra.mxu0 0
    %1588 = vmatprep.subr.bf16.mxu0 0
    %1589 = vmatpush1.bf16.msra.mxu0 0
    %1590 = vmatprep.subr.bf16.mxu0 0
    %1591 = vmatpush1.bf16.msra.mxu0 0
    %1592 = vmatprep.subr.bf16.mxu0 0
    %1593 = vmatpush1.bf16.msra.mxu0 0
    %1594 = vmatprep.subr.bf16.mxu0 0
    %1595 = vmatpush1.bf16.msra.mxu0 0
    %1596 = vmatprep.mubr.bf16.mxu0 0
    %1597 = vmatmul.mubr.bf16.gmra.mrb[0].mxu0 %v1477
    %v1598 = vpop.f32.mrb[0].mxu0
    %v1599 = vadd.f32 0.0, %v1598
    %v1600 = vpop.f32.mrb[0].mxu0
    %v1601 = vadd.f32 0.0, %v1600
    %v1602 = vpop.f32.mrb[0].mxu0
    %v1603 = vpop.f32.mrb[0].mxu0
    %1604 = vdwg.mxu0
    %1605 = vmatprep.subr.bf16.mxu0 %v519
    %1606 = vmatpush1.bf16.msra.mxu0 %v518
    %1607 = vmatprep.subr.bf16.mxu0 %v523
    %1608 = vmatpush1.bf16.msra.mxu0 %v522
    %1609 = vmatprep.subr.bf16.mxu0 %v527
    %1610 = vmatpush1.bf16.msra.mxu0 %v526
    %1611 = vmatprep.subr.bf16.mxu0 %v531
    %1612 = vmatpush1.bf16.msra.mxu0 %v530
    %1613 = vmatprep.subr.bf16.mxu0 %v535
    %1614 = vmatpush1.bf16.msra.mxu0 %v534
    %1615 = vmatprep.subr.bf16.mxu0 %v539
    %1616 = vmatpush1.bf16.msra.mxu0 %v538
    %1617 = vmatprep.subr.bf16.mxu0 %v543
    %1618 = vmatpush1.bf16.msra.mxu0 %v542
    %1619 = vmatprep.subr.bf16.mxu0 %v547
    %1620 = vmatpush1.bf16.msra.mxu0 %v546
    %1621 = vmatprep.subr.bf16.mxu0 0
    %1622 = vmatpush1.bf16.msra.mxu0 0
    %1623 = vmatprep.subr.bf16.mxu0 0
    %1624 = vmatpush1.bf16.msra.mxu0 0
    %1625 = vmatprep.subr.bf16.mxu0 0
    %1626 = vmatpush1.bf16.msra.mxu0 0
    %1627 = vmatprep.subr.bf16.mxu0 0
    %1628 = vmatpush1.bf16.msra.mxu0 0
    %1629 = vmatprep.subr.bf16.mxu0 0
    %1630 = vmatpush1.bf16.msra.mxu0 0
    %1631 = vmatprep.subr.bf16.mxu0 0
    %1632 = vmatpush1.bf16.msra.mxu0 0
    %1633 = vmatprep.subr.bf16.mxu0 0
    %1634 = vmatpush1.bf16.msra.mxu0 0
    %1635 = vmatprep.subr.bf16.mxu0 0
    %1636 = vmatpush1.bf16.msra.mxu0 0
    %1637 = vmatprep.mubr.bf16.mxu0 0
    %1638 = vmatmul.mubr.bf16.gmra.mrb[0].mxu0 %v1477
    %v1639 = vpop.f32.mrb[0].mxu0
    %v1640 = vadd.f32 0.0, %v1639
    %v1641 = vpop.f32.mrb[0].mxu0
    %v1642 = vadd.f32 0.0, %v1641
    %v1643 = vpop.f32.mrb[0].mxu0
    %v1644 = vpop.f32.mrb[0].mxu0
    %1645 = vdwg.mxu0
    %v1646 = vadd.f32 %v1517, %v1599
    %v1647 = vadd.f32 %v1519, %v1601
    %v1648 = vadd.f32 %v1558, %v1640
    %v1649 = vadd.f32 %v1560, %v1642
    %v1650 = vxor.u32 %v1646, 2147483648
    %v1651 = vmul.f32 %v1650, 1.442695
    %v1652 = vpow.pop %v1651
    %v1653 = vadd.f32 %v1652, 1.0
    %v1654 = vrcp.pop %v1653
    %v1655 = vmul.f32 1.0, %v1654
    %v1656 = vxor.u32 %v1647, 2147483648
    %v1657 = vmul.f32 %v1656, 1.442695
    %v1658 = vpow.pop %v1657
    %v1659 = vadd.f32 %v1658, 1.0
    %v1660 = vrcp.pop %v1659
    %v1661 = vmul.f32 1.0, %v1660
    %v1662 = vtanh.pop %v1648
    %v1663 = vxor.u32 %v1649, 2147483648
    %v1664 = vmul.f32 %v1663, 1.442695
    %v1665 = vpow.pop %v1664
    %v1666 = vadd.f32 %v1665, 1.0
    %v1667 = vrcp.pop %v1666
    %v1668 = vmul.f32 1.0, %v1667
    %v1669 = vmul.f32 %v1661, %v1474
    %v1670 = vmul.f32 %v1655, %v1662
    %v1671 = vadd.f32 %v1669, %v1670
    %v1672 = vtanh.pop %v1671
    %v1673 = vmul.f32 %v1668, %v1672
    %v1674 = vpack.c.bf16 %v1673, %v1673
    %s1675 = scalar_lea.vmem [#allocation2], 20
    %1676 = vst [vmem:[%s1675] sm:$0xf] %v1674
    %s1677 = scalar_lea.vmem %s0, 24
    %v1678 = vld [vmem:[%s1677] sm:$0xf]
    %1679 = vmatprep.subr.bf16.mxu0 %v275
    %1680 = vmatpush1.bf16.msra.mxu0 %v274
    %1681 = vmatprep.subr.bf16.mxu0 %v279
    %1682 = vmatpush1.bf16.msra.mxu0 %v278
    %1683 = vmatprep.subr.bf16.mxu0 %v283
    %1684 = vmatpush1.bf16.msra.mxu0 %v282
    %1685 = vmatprep.subr.bf16.mxu0 %v287
    %1686 = vmatpush1.bf16.msra.mxu0 %v286
    %1687 = vmatprep.subr.bf16.mxu0 %v291
    %1688 = vmatpush1.bf16.msra.mxu0 %v290
    %1689 = vmatprep.subr.bf16.mxu0 %v295
    %1690 = vmatpush1.bf16.msra.mxu0 %v294
    %1691 = vmatprep.subr.bf16.mxu0 %v299
    %1692 = vmatpush1.bf16.msra.mxu0 %v298
    %1693 = vmatprep.subr.bf16.mxu0 %v303
    %1694 = vmatpush1.bf16.msra.mxu0 %v302
    %1695 = vmatprep.subr.bf16.mxu0 0
    %1696 = vmatpush1.bf16.msra.mxu0 0
    %1697 = vmatprep.subr.bf16.mxu0 0
    %1698 = vmatpush1.bf16.msra.mxu0 0
    %1699 = vmatprep.subr.bf16.mxu0 0
    %1700 = vmatpush1.bf16.msra.mxu0 0
    %1701 = vmatprep.subr.bf16.mxu0 0
    %1702 = vmatpush1.bf16.msra.mxu0 0
    %1703 = vmatprep.subr.bf16.mxu0 0
    %1704 = vmatpush1.bf16.msra.mxu0 0
    %1705 = vmatprep.subr.bf16.mxu0 0
    %1706 = vmatpush1.bf16.msra.mxu0 0
    %1707 = vmatprep.subr.bf16.mxu0 0
    %1708 = vmatpush1.bf16.msra.mxu0 0
    %1709 = vmatprep.subr.bf16.mxu0 0
    %1710 = vmatpush1.bf16.msra.mxu0 0
    %1711 = vmatprep.mubr.bf16.mxu0 0
    %1712 = vmatmul.mubr.bf16.gmra.mrb[0].mxu0 %v1678
    %v1713 = vpop.f32.mrb[0].mxu0
    %v1714 = vadd.f32 %v161, %v1713
    %v1715 = vpop.f32.mrb[0].mxu0
    %v1716 = vadd.f32 %v165, %v1715
    %v1717 = vpop.f32.mrb[0].mxu0
    %v1718 = vpop.f32.mrb[0].mxu0
    %1719 = vdwg.mxu0
    %1720 = vmatprep.subr.bf16.mxu0 %v277
    %1721 = vmatpush1.bf16.msra.mxu0 %v276
    %1722 = vmatprep.subr.bf16.mxu0 %v281
    %1723 = vmatpush1.bf16.msra.mxu0 %v280
    %1724 = vmatprep.subr.bf16.mxu0 %v285
    %1725 = vmatpush1.bf16.msra.mxu0 %v284
    %1726 = vmatprep.subr.bf16.mxu0 %v289
    %1727 = vmatpush1.bf16.msra.mxu0 %v288
    %1728 = vmatprep.subr.bf16.mxu0 %v293
    %1729 = vmatpush1.bf16.msra.mxu0 %v292
    %1730 = vmatprep.subr.bf16.mxu0 %v297
    %1731 = vmatpush1.bf16.msra.mxu0 %v296
    %1732 = vmatprep.subr.bf16.mxu0 %v301
    %1733 = vmatpush1.bf16.msra.mxu0 %v300
    %1734 = vmatprep.subr.bf16.mxu0 %v305
    %1735 = vmatpush1.bf16.msra.mxu0 %v304
    %1736 = vmatprep.subr.bf16.mxu0 0
    %1737 = vmatpush1.bf16.msra.mxu0 0
    %1738 = vmatprep.subr.bf16.mxu0 0
    %1739 = vmatpush1.bf16.msra.mxu0 0
    %1740 = vmatprep.subr.bf16.mxu0 0
    %1741 = vmatpush1.bf16.msra.mxu0 0
    %1742 = vmatprep.subr.bf16.mxu0 0
    %1743 = vmatpush1.bf16.msra.mxu0 0
    %1744 = vmatprep.subr.bf16.mxu0 0
    %1745 = vmatpush1.bf16.msra.mxu0 0
    %1746 = vmatprep.subr.bf16.mxu0 0
    %1747 = vmatpush1.bf16.msra.mxu0 0
    %1748 = vmatprep.subr.bf16.mxu0 0
    %1749 = vmatpush1.bf16.msra.mxu0 0
    %1750 = vmatprep.subr.bf16.mxu0 0
    %1751 = vmatpush1.bf16.msra.mxu0 0
    %1752 = vmatprep.mubr.bf16.mxu0 0
    %1753 = vmatmul.mubr.bf16.gmra.mrb[0].mxu0 %v1678
    %v1754 = vpop.f32.mrb[0].mxu0
    %v1755 = vadd.f32 %v169, %v1754
    %v1756 = vpop.f32.mrb[0].mxu0
    %v1757 = vadd.f32 %v173, %v1756
    %v1758 = vpop.f32.mrb[0].mxu0
    %v1759 = vpop.f32.mrb[0].mxu0
    %1760 = vdwg.mxu0
    %1761 = vmatprep.subr.bf16.mxu0 %v517
    %1762 = vmatpush1.bf16.msra.mxu0 %v516
    %1763 = vmatprep.subr.bf16.mxu0 %v521
    %1764 = vmatpush1.bf16.msra.mxu0 %v520
    %1765 = vmatprep.subr.bf16.mxu0 %v525
    %1766 = vmatpush1.bf16.msra.mxu0 %v524
    %1767 = vmatprep.subr.bf16.mxu0 %v529
    %1768 = vmatpush1.bf16.msra.mxu0 %v528
    %1769 = vmatprep.subr.bf16.mxu0 %v533
    %1770 = vmatpush1.bf16.msra.mxu0 %v532
    %1771 = vmatprep.subr.bf16.mxu0 %v537
    %1772 = vmatpush1.bf16.msra.mxu0 %v536
    %1773 = vmatprep.subr.bf16.mxu0 %v541
    %1774 = vmatpush1.bf16.msra.mxu0 %v540
    %1775 = vmatprep.subr.bf16.mxu0 %v545
    %1776 = vmatpush1.bf16.msra.mxu0 %v544
    %1777 = vmatprep.subr.bf16.mxu0 0
    %1778 = vmatpush1.bf16.msra.mxu0 0
    %1779 = vmatprep.subr.bf16.mxu0 0
    %1780 = vmatpush1.bf16.msra.mxu0 0
    %1781 = vmatprep.subr.bf16.mxu0 0
    %1782 = vmatpush1.bf16.msra.mxu0 0
    %1783 = vmatprep.subr.bf16.mxu0 0
    %1784 = vmatpush1.bf16.msra.mxu0 0
    %1785 = vmatprep.subr.bf16.mxu0 0
    %1786 = vmatpush1.bf16.msra.mxu0 0
    %1787 = vmatprep.subr.bf16.mxu0 0
    %1788 = vmatpush1.bf16.msra.mxu0 0
    %1789 = vmatprep.subr.bf16.mxu0 0
    %1790 = vmatpush1.bf16.msra.mxu0 0
    %1791 = vmatprep.subr.bf16.mxu0 0
    %1792 = vmatpush1.bf16.msra.mxu0 0
    %1793 = vmatprep.mubr.bf16.mxu0 0
    %1794 = vmatmul.mubr.bf16.gmra.mrb[0].mxu0 %v1674
    %v1795 = vpop.f32.mrb[0].mxu0
    %v1796 = vadd.f32 0.0, %v1795
    %v1797 = vpop.f32.mrb[0].mxu0
    %v1798 = vadd.f32 0.0, %v1797
    %v1799 = vpop.f32.mrb[0].mxu0
    %v1800 = vpop.f32.mrb[0].mxu0
    %1801 = vdwg.mxu0
    %1802 = vmatprep.subr.bf16.mxu0 %v519
    %1803 = vmatpush1.bf16.msra.mxu0 %v518
    %1804 = vmatprep.subr.bf16.mxu0 %v523
    %1805 = vmatpush1.bf16.msra.mxu0 %v522
    %1806 = vmatprep.subr.bf16.mxu0 %v527
    %1807 = vmatpush1.bf16.msra.mxu0 %v526
    %1808 = vmatprep.subr.bf16.mxu0 %v531
    %1809 = vmatpush1.bf16.msra.mxu0 %v530
    %1810 = vmatprep.subr.bf16.mxu0 %v535
    %1811 = vmatpush1.bf16.msra.mxu0 %v534
    %1812 = vmatprep.subr.bf16.mxu0 %v539
    %1813 = vmatpush1.bf16.msra.mxu0 %v538
    %1814 = vmatprep.subr.bf16.mxu0 %v543
    %1815 = vmatpush1.bf16.msra.mxu0 %v542
    %1816 = vmatprep.subr.bf16.mxu0 %v547
    %1817 = vmatpush1.bf16.msra.mxu0 %v546
    %1818 = vmatprep.subr.bf16.mxu0 0
    %1819 = vmatpush1.bf16.msra.mxu0 0
    %1820 = vmatprep.subr.bf16.mxu0 0
    %1821 = vmatpush1.bf16.msra.mxu0 0
    %1822 = vmatprep.subr.bf16.mxu0 0
    %1823 = vmatpush1.bf16.msra.mxu0 0
    %1824 = vmatprep.subr.bf16.mxu0 0
    %1825 = vmatpush1.bf16.msra.mxu0 0
    %1826 = vmatprep.subr.bf16.mxu0 0
    %1827 = vmatpush1.bf16.msra.mxu0 0
    %1828 = vmatprep.subr.bf16.mxu0 0
    %1829 = vmatpush1.bf16.msra.mxu0 0
    %1830 = vmatprep.subr.bf16.mxu0 0
    %1831 = vmatpush1.bf16.msra.mxu0 0
    %1832 = vmatprep.subr.bf16.mxu0 0
    %1833 = vmatpush1.bf16.msra.mxu0 0
    %1834 = vmatprep.mubr.bf16.mxu0 0
    %1835 = vmatmul.mubr.bf16.gmra.mrb[0].mxu0 %v1674
    %v1836 = vpop.f32.mrb[0].mxu0
    %v1837 = vadd.f32 0.0, %v1836
    %v1838 = vpop.f32.mrb[0].mxu0
    %v1839 = vadd.f32 0.0, %v1838
    %v1840 = vpop.f32.mrb[0].mxu0
    %v1841 = vpop.f32.mrb[0].mxu0
    %1842 = vdwg.mxu0
    %v1843 = vadd.f32 %v1714, %v1796
    %v1844 = vadd.f32 %v1716, %v1798
    %v1845 = vadd.f32 %v1755, %v1837
    %v1846 = vadd.f32 %v1757, %v1839
    %v1847 = vxor.u32 %v1843, 2147483648
    %v1848 = vmul.f32 %v1847, 1.442695
    %v1849 = vpow.pop %v1848
    %v1850 = vadd.f32 %v1849, 1.0
    %v1851 = vrcp.pop %v1850
    %v1852 = vmul.f32 1.0, %v1851
    %v1853 = vxor.u32 %v1844, 2147483648
    %v1854 = vmul.f32 %v1853, 1.442695
    %v1855 = vpow.pop %v1854
    %v1856 = vadd.f32 %v1855, 1.0
    %v1857 = vrcp.pop %v1856
    %v1858 = vmul.f32 1.0, %v1857
    %v1859 = vtanh.pop %v1845
    %v1860 = vxor.u32 %v1846, 2147483648
    %v1861 = vmul.f32 %v1860, 1.442695
    %v1862 = vpow.pop %v1861
    %v1863 = vadd.f32 %v1862, 1.0
    %v1864 = vrcp.pop %v1863
    %v1865 = vmul.f32 1.0, %v1864
    %v1866 = vmul.f32 %v1858, %v1671
    %v1867 = vmul.f32 %v1852, %v1859
    %v1868 = vadd.f32 %v1866, %v1867
    %v1869 = vtanh.pop %v1868
    %v1870 = vmul.f32 %v1865, %v1869
    %v1871 = vpack.c.bf16 %v1870, %v1870
    %s1872 = scalar_lea.vmem [#allocation2], 24
    %1873 = vst [vmem:[%s1872] sm:$0xf] %v1871
    %s1874 = scalar_lea.vmem %s0, 28
    %v1875 = vld [vmem:[%s1874] sm:$0xf]
    %1876 = vmatprep.subr.bf16.mxu0 %v275
    %1877 = vmatpush1.bf16.msra.mxu0 %v274
    %1878 = vmatprep.subr.bf16.mxu0 %v279
    %1879 = vmatpush1.bf16.msra.mxu0 %v278
    %1880 = vmatprep.subr.bf16.mxu0 %v283
    %1881 = vmatpush1.bf16.msra.mxu0 %v282
    %1882 = vmatprep.subr.bf16.mxu0 %v287
    %1883 = vmatpush1.bf16.msra.mxu0 %v286
    %1884 = vmatprep.subr.bf16.mxu0 %v291
    %1885 = vmatpush1.bf16.msra.mxu0 %v290
    %1886 = vmatprep.subr.bf16.mxu0 %v295
    %1887 = vmatpush1.bf16.msra.mxu0 %v294
    %1888 = vmatprep.subr.bf16.mxu0 %v299
    %1889 = vmatpush1.bf16.msra.mxu0 %v298
    %1890 = vmatprep.subr.bf16.mxu0 %v303
    %1891 = vmatpush1.bf16.msra.mxu0 %v302
    %1892 = vmatprep.subr.bf16.mxu0 0
    %1893 = vmatpush1.bf16.msra.mxu0 0
    %1894 = vmatprep.subr.bf16.mxu0 0
    %1895 = vmatpush1.bf16.msra.mxu0 0
    %1896 = vmatprep.subr.bf16.mxu0 0
    %1897 = vmatpush1.bf16.msra.mxu0 0
    %1898 = vmatprep.subr.bf16.mxu0 0
    %1899 = vmatpush1.bf16.msra.mxu0 0
    %1900 = vmatprep.subr.bf16.mxu0 0
    %1901 = vmatpush1.bf16.msra.mxu0 0
    %1902 = vmatprep.subr.bf16.mxu0 0
    %1903 = vmatpush1.bf16.msra.mxu0 0
    %1904 = vmatprep.subr.bf16.mxu0 0
    %1905 = vmatpush1.bf16.msra.mxu0 0
    %1906 = vmatprep.subr.bf16.mxu0 0
    %1907 = vmatpush1.bf16.msra.mxu0 0
    %1908 = vmatprep.mubr.bf16.mxu0 0
    %1909 = vmatmul.mubr.bf16.gmra.mrb[0].mxu0 %v1875
    %v1910 = vpop.f32.mrb[0].mxu0
    %v1911 = vadd.f32 %v161, %v1910
    %v1912 = vpop.f32.mrb[0].mxu0
    %v1913 = vadd.f32 %v165, %v1912
    %v1914 = vpop.f32.mrb[0].mxu0
    %v1915 = vpop.f32.mrb[0].mxu0
    %1916 = vdwg.mxu0
    %1917 = vmatprep.subr.bf16.mxu0 %v277
    %1918 = vmatpush1.bf16.msra.mxu0 %v276
    %1919 = vmatprep.subr.bf16.mxu0 %v281
    %1920 = vmatpush1.bf16.msra.mxu0 %v280
    %1921 = vmatprep.subr.bf16.mxu0 %v285
    %1922 = vmatpush1.bf16.msra.mxu0 %v284
    %1923 = vmatprep.subr.bf16.mxu0 %v289
    %1924 = vmatpush1.bf16.msra.mxu0 %v288
    %1925 = vmatprep.subr.bf16.mxu0 %v293
    %1926 = vmatpush1.bf16.msra.mxu0 %v292
    %1927 = vmatprep.subr.bf16.mxu0 %v297
    %1928 = vmatpush1.bf16.msra.mxu0 %v296
    %1929 = vmatprep.subr.bf16.mxu0 %v301
    %1930 = vmatpush1.bf16.msra.mxu0 %v300
    %1931 = vmatprep.subr.bf16.mxu0 %v305
    %1932 = vmatpush1.bf16.msra.mxu0 %v304
    %1933 = vmatprep.subr.bf16.mxu0 0
    %1934 = vmatpush1.bf16.msra.mxu0 0
    %1935 = vmatprep.subr.bf16.mxu0 0
    %1936 = vmatpush1.bf16.msra.mxu0 0
    %1937 = vmatprep.subr.bf16.mxu0 0
    %1938 = vmatpush1.bf16.msra.mxu0 0
    %1939 = vmatprep.subr.bf16.mxu0 0
    %1940 = vmatpush1.bf16.msra.mxu0 0
    %1941 = vmatprep.subr.bf16.mxu0 0
    %1942 = vmatpush1.bf16.msra.mxu0 0
    %1943 = vmatprep.subr.bf16.mxu0 0
    %1944 = vmatpush1.bf16.msra.mxu0 0
    %1945 = vmatprep.subr.bf16.mxu0 0
    %1946 = vmatpush1.bf16.msra.mxu0 0
    %1947 = vmatprep.subr.bf16.mxu0 0
    %1948 = vmatpush1.bf16.msra.mxu0 0
    %1949 = vmatprep.mubr.bf16.mxu0 0
    %1950 = vmatmul.mubr.bf16.gmra.mrb[0].mxu0 %v1875
    %v1951 = vpop.f32.mrb[0].mxu0
    %v1952 = vadd.f32 %v169, %v1951
    %v1953 = vpop.f32.mrb[0].mxu0
    %v1954 = vadd.f32 %v173, %v1953
    %v1955 = vpop.f32.mrb[0].mxu0
    %v1956 = vpop.f32.mrb[0].mxu0
    %1957 = vdwg.mxu0
    %1958 = vmatprep.subr.bf16.mxu0 %v517
    %1959 = vmatpush1.bf16.msra.mxu0 %v516
    %1960 = vmatprep.subr.bf16.mxu0 %v521
    %1961 = vmatpush1.bf16.msra.mxu0 %v520
    %1962 = vmatprep.subr.bf16.mxu0 %v525
    %1963 = vmatpush1.bf16.msra.mxu0 %v524
    %1964 = vmatprep.subr.bf16.mxu0 %v529
    %1965 = vmatpush1.bf16.msra.mxu0 %v528
    %1966 = vmatprep.subr.bf16.mxu0 %v533
    %1967 = vmatpush1.bf16.msra.mxu0 %v532
    %1968 = vmatprep.subr.bf16.mxu0 %v537
    %1969 = vmatpush1.bf16.msra.mxu0 %v536
    %1970 = vmatprep.subr.bf16.mxu0 %v541
    %1971 = vmatpush1.bf16.msra.mxu0 %v540
    %1972 = vmatprep.subr.bf16.mxu0 %v545
    %1973 = vmatpush1.bf16.msra.mxu0 %v544
    %1974 = vmatprep.subr.bf16.mxu0 0
    %1975 = vmatpush1.bf16.msra.mxu0 0
    %1976 = vmatprep.subr.bf16.mxu0 0
    %1977 = vmatpush1.bf16.msra.mxu0 0
    %1978 = vmatprep.subr.bf16.mxu0 0
    %1979 = vmatpush1.bf16.msra.mxu0 0
    %1980 = vmatprep.subr.bf16.mxu0 0
    %1981 = vmatpush1.bf16.msra.mxu0 0
    %1982 = vmatprep.subr.bf16.mxu0 0
    %1983 = vmatpush1.bf16.msra.mxu0 0
    %1984 = vmatprep.subr.bf16.mxu0 0
    %1985 = vmatpush1.bf16.msra.mxu0 0
    %1986 = vmatprep.subr.bf16.mxu0 0
    %1987 = vmatpush1.bf16.msra.mxu0 0
    %1988 = vmatprep.subr.bf16.mxu0 0
    %1989 = vmatpush1.bf16.msra.mxu0 0
    %1990 = vmatprep.mubr.bf16.mxu0 0
    %1991 = vmatmul.mubr.bf16.gmra.mrb[0].mxu0 %v1871
    %v1992 = vpop.f32.mrb[0].mxu0
    %v1993 = vadd.f32 0.0, %v1992
    %v1994 = vpop.f32.mrb[0].mxu0
    %v1995 = vadd.f32 0.0, %v1994
    %v1996 = vpop.f32.mrb[0].mxu0
    %v1997 = vpop.f32.mrb[0].mxu0
    %1998 = vdwg.mxu0
    %1999 = vmatprep.subr.bf16.mxu0 %v519
    %2000 = vmatpush1.bf16.msra.mxu0 %v518
    %2001 = vmatprep.subr.bf16.mxu0 %v523
    %2002 = vmatpush1.bf16.msra.mxu0 %v522
    %2003 = vmatprep.subr.bf16.mxu0 %v527
    %2004 = vmatpush1.bf16.msra.mxu0 %v526
    %2005 = vmatprep.subr.bf16.mxu0 %v531
    %2006 = vmatpush1.bf16.msra.mxu0 %v530
    %2007 = vmatprep.subr.bf16.mxu0 %v535
    %2008 = vmatpush1.bf16.msra.mxu0 %v534
    %2009 = vmatprep.subr.bf16.mxu0 %v539
    %2010 = vmatpush1.bf16.msra.mxu0 %v538
    %2011 = vmatprep.subr.bf16.mxu0 %v543
    %2012 = vmatpush1.bf16.msra.mxu0 %v542
    %2013 = vmatprep.subr.bf16.mxu0 %v547
    %2014 = vmatpush1.bf16.msra.mxu0 %v546
    %2015 = vmatprep.subr.bf16.mxu0 0
    %2016 = vmatpush1.bf16.msra.mxu0 0
    %2017 = vmatprep.subr.bf16.mxu0 0
    %2018 = vmatpush1.bf16.msra.mxu0 0
    %2019 = vmatprep.subr.bf16.mxu0 0
    %2020 = vmatpush1.bf16.msra.mxu0 0
    %2021 = vmatprep.subr.bf16.mxu0 0
    %2022 = vmatpush1.bf16.msra.mxu0 0
    %2023 = vmatprep.subr.bf16.mxu0 0
    %2024 = vmatpush1.bf16.msra.mxu0 0
    %2025 = vmatprep.subr.bf16.mxu0 0
    %2026 = vmatpush1.bf16.msra.mxu0 0
    %2027 = vmatprep.subr.bf16.mxu0 0
    %2028 = vmatpush1.bf16.msra.mxu0 0
    %2029 = vmatprep.subr.bf16.mxu0 0
    %2030 = vmatpush1.bf16.msra.mxu0 0
    %2031 = vmatprep.mubr.bf16.mxu0 0
    %2032 = vmatmul.mubr.bf16.gmra.mrb[0].mxu0 %v1871
    %v2033 = vpop.f32.mrb[0].mxu0
    %v2034 = vadd.f32 0.0, %v2033
    %v2035 = vpop.f32.mrb[0].mxu0
    %v2036 = vadd.f32 0.0, %v2035
    %v2037 = vpop.f32.mrb[0].mxu0
    %v2038 = vpop.f32.mrb[0].mxu0
    %2039 = vdwg.mxu0
    %v2040 = vadd.f32 %v1911, %v1993
    %v2041 = vadd.f32 %v1913, %v1995
    %v2042 = vadd.f32 %v1952, %v2034
    %v2043 = vadd.f32 %v1954, %v2036
    %v2044 = vxor.u32 %v2040, 2147483648
    %v2045 = vmul.f32 %v2044, 1.442695
    %v2046 = vpow.pop %v2045
    %v2047 = vadd.f32 %v2046, 1.0
    %v2048 = vrcp.pop %v2047
    %v2049 = vmul.f32 1.0, %v2048
    %v2050 = vxor.u32 %v2041, 2147483648
    %v2051 = vmul.f32 %v2050, 1.442695
    %v2052 = vpow.pop %v2051
    %v2053 = vadd.f32 %v2052, 1.0
    %v2054 = vrcp.pop %v2053
    %v2055 = vmul.f32 1.0, %v2054
    %v2056 = vtanh.pop %v2042
    %v2057 = vxor.u32 %v2043, 2147483648
    %v2058 = vmul.f32 %v2057, 1.442695
    %v2059 = vpow.pop %v2058
    %v2060 = vadd.f32 %v2059, 1.0
    %v2061 = vrcp.pop %v2060
    %v2062 = vmul.f32 1.0, %v2061
    %v2063 = vmul.f32 %v2055, %v1868
    %v2064 = vmul.f32 %v2049, %v2056
    %v2065 = vadd.f32 %v2063, %v2064
    %v2066 = vtanh.pop %v2065
    %v2067 = vmul.f32 %v2062, %v2066
    %v2068 = vpack.c.bf16 %v2067, %v2067
    %s2069 = scalar_lea.vmem [#allocation2], 28
    %2070 = vst [vmem:[%s2069] sm:$0xf] %v2068
    %v2071 = vunpack.c.l.bf16 %v2068
    %2072 = vst [vmem:[%s10] sm:$0xff] %v2071
    %2073 = vst [vmem:[%s11] sm:$0xff] %v2065
    %v2074 = vld [vmem:[#allocation8] sm:$0xff]
    %v2075 = vld [vmem:[#allocation8 + $0x8] sm:$0xff]
    %v2076 = vld [vmem:[#allocation8 + $0x10] sm:$0xff]
    %v2077 = vld [vmem:[#allocation8 + $0x18] sm:$0xff]
    %v2078 = vld [vmem:[#allocation8 + $0x20] sm:$0xff]
    %v2079 = vld [vmem:[#allocation8 + $0x28] sm:$0xff]
    %v2080 = vld [vmem:[#allocation8 + $0x30] sm:$0xff]
    %v2081 = vld [vmem:[#allocation8 + $0x38] sm:$0xff]
    %v2082 = vld [vmem:[#allocation8 + $0x40] sm:$0xff]
    %v2083 = vld [vmem:[#allocation8 + $0x48] sm:$0xff]
    %v2084 = vld [vmem:[#allocation8 + $0x50] sm:$0xff]
    %v2085 = vld [vmem:[#allocation8 + $0x58] sm:$0xff]
    %v2086 = vld [vmem:[#allocation8 + $0x60] sm:$0xff]
    %v2087 = vld [vmem:[#allocation8 + $0x68] sm:$0xff]
    %v2088 = vld [vmem:[#allocation8 + $0x70] sm:$0xff]
    %v2089 = vld [vmem:[#allocation8 + $0x78] sm:$0xff]
    %v2090 = vld [vmem:[#allocation8 + $0x80] sm:$0xff]
    %v2091 = vld [vmem:[#allocation8 + $0x88] sm:$0xff]
    %v2092 = vld [vmem:[#allocation8 + $0x90] sm:$0xff]
    %v2093 = vld [vmem:[#allocation8 + $0x98] sm:$0xff]
    %v2094 = vld [vmem:[#allocation8 + $0xa0] sm:$0xff]
    %v2095 = vld [vmem:[#allocation8 + $0xa8] sm:$0xff]
    %v2096 = vld [vmem:[#allocation8 + $0xb0] sm:$0xff]
    %v2097 = vld [vmem:[#allocation8 + $0xb8] sm:$0xff]
    %v2098 = vld [vmem:[#allocation8 + $0xc0] sm:$0xff]
    %v2099 = vld [vmem:[#allocation8 + $0xc8] sm:$0xff]
    %v2100 = vld [vmem:[#allocation8 + $0xd0] sm:$0xff]
    %v2101 = vld [vmem:[#allocation8 + $0xd8] sm:$0xff]
    %v2102 = vld [vmem:[#allocation8 + $0xe0] sm:$0xff]
    %v2103 = vld [vmem:[#allocation8 + $0xe8] sm:$0xff]
    %v2104 = vld [vmem:[#allocation8 + $0xf0] sm:$0xff]
    %v2105 = vld [vmem:[#allocation8 + $0xf8] sm:$0xff]
    %v2106 = vld [vmem:[#allocation9] sm:$0xff]
    %v2107 = vld [vmem:[#allocation9 + $0x8] sm:$0xff]
    %v2108 = vld [vmem:[#allocation9 + $0x10] sm:$0xff]
    %v2109 = vld [vmem:[#allocation9 + $0x18] sm:$0xff]
    %v2110 = vld [vmem:[#allocation9 + $0x20] sm:$0xff]
    %v2111 = vld [vmem:[#allocation9 + $0x28] sm:$0xff]
    %v2112 = vld [vmem:[#allocation9 + $0x30] sm:$0xff]
    %v2113 = vld [vmem:[#allocation9 + $0x38] sm:$0xff]
    %v2114 = vld [vmem:[#allocation9 + $0x40] sm:$0xff]
    %v2115 = vld [vmem:[#allocation9 + $0x48] sm:$0xff]
    %v2116 = vld [vmem:[#allocation9 + $0x50] sm:$0xff]
    %v2117 = vld [vmem:[#allocation9 + $0x58] sm:$0xff]
    %v2118 = vld [vmem:[#allocation9 + $0x60] sm:$0xff]
    %v2119 = vld [vmem:[#allocation9 + $0x68] sm:$0xff]
    %v2120 = vld [vmem:[#allocation9 + $0x70] sm:$0xff]
    %v2121 = vld [vmem:[#allocation9 + $0x78] sm:$0xff]
    %v2122 = vld [vmem:[#allocation9 + $0x80] sm:$0xff]
    %v2123 = vld [vmem:[#allocation9 + $0x88] sm:$0xff]
    %v2124 = vld [vmem:[#allocation9 + $0x90] sm:$0xff]
    %v2125 = vld [vmem:[#allocation9 + $0x98] sm:$0xff]
    %v2126 = vld [vmem:[#allocation9 + $0xa0] sm:$0xff]
    %v2127 = vld [vmem:[#allocation9 + $0xa8] sm:$0xff]
    %v2128 = vld [vmem:[#allocation9 + $0xb0] sm:$0xff]
    %v2129 = vld [vmem:[#allocation9 + $0xb8] sm:$0xff]
    %v2130 = vld [vmem:[#allocation9 + $0xc0] sm:$0xff]
    %v2131 = vld [vmem:[#allocation9 + $0xc8] sm:$0xff]
    %v2132 = vld [vmem:[#allocation9 + $0xd0] sm:$0xff]
    %v2133 = vld [vmem:[#allocation9 + $0xd8] sm:$0xff]
    %v2134 = vld [vmem:[#allocation9 + $0xe0] sm:$0xff]
    %v2135 = vld [vmem:[#allocation9 + $0xe8] sm:$0xff]
    %v2136 = vld [vmem:[#allocation9 + $0xf0] sm:$0xff]
    %v2137 = vld [vmem:[#allocation9 + $0xf8] sm:$0xff]
    %v2138 = vld [vmem:[%s6] sm:$0xf]
    %v2139 = vld [vmem:[#allocation2] sm:$0xf]
    %v2141 = vlaneseq
    %v2142 = vshrl.u32 %v2141, 7
    %v2143 = vsub.s32 0, %v2142
    %v2144 = vrot.slane %v2138, %v2143
    %v2145 = vlaneseq
    %v2146 = vshrl.u32 %v2145, 7
    %v2147 = vsub.s32 1, %v2146
    %v2148 = vrot.slane %v2138, %v2147
    %v2149 = vlaneseq
    %v2150 = vshrl.u32 %v2149, 7
    %v2151 = vsub.s32 2, %v2150
    %v2152 = vrot.slane %v2138, %v2151
    %v2153 = vlaneseq
    %v2154 = vshrl.u32 %v2153, 7
    %v2155 = vsub.s32 3, %v2154
    %v2156 = vrot.slane %v2138, %v2155
    %v2193 = vunpack.c.l.b16 %v2074
    %v2194 = vunpack.c.h.b16 %v2074
    %v2195 = vunpack.c.l.b16 %v2075
    %v2196 = vunpack.c.h.b16 %v2075
    %v2197 = vunpack.c.l.b16 %v2076
    %v2198 = vunpack.c.h.b16 %v2076
    %v2199 = vunpack.c.l.b16 %v2077
    %v2200 = vunpack.c.h.b16 %v2077
    %v2201 = vunpack.c.l.b16 %v2078
    %v2202 = vunpack.c.h.b16 %v2078
    %v2203 = vunpack.c.l.b16 %v2079
    %v2204 = vunpack.c.h.b16 %v2079
    %v2205 = vunpack.c.l.b16 %v2080
    %v2206 = vunpack.c.h.b16 %v2080
    %v2207 = vunpack.c.l.b16 %v2081
    %v2208 = vunpack.c.h.b16 %v2081
    %v2209 = vunpack.c.l.b16 %v2082
    %v2210 = vunpack.c.h.b16 %v2082
    %v2211 = vunpack.c.l.b16 %v2083
    %v2212 = vunpack.c.h.b16 %v2083
    %v2213 = vunpack.c.l.b16 %v2084
    %v2214 = vunpack.c.h.b16 %v2084
    %v2215 = vunpack.c.l.b16 %v2085
    %v2216 = vunpack.c.h.b16 %v2085
    %v2217 = vunpack.c.l.b16 %v2086
    %v2218 = vunpack.c.h.b16 %v2086
    %v2219 = vunpack.c.l.b16 %v2087
    %v2220 = vunpack.c.h.b16 %v2087
    %v2221 = vunpack.c.l.b16 %v2088
    %v2222 = vunpack.c.h.b16 %v2088
    %v2223 = vunpack.c.l.b16 %v2089
    %v2224 = vunpack.c.h.b16 %v2089
    %v2225 = vunpack.c.l.b16 %v2090
    %v2226 = vunpack.c.h.b16 %v2090
    %v2227 = vunpack.c.l.b16 %v2091
    %v2228 = vunpack.c.h.b16 %v2091
    %v2229 = vunpack.c.l.b16 %v2092
    %v2230 = vunpack.c.h.b16 %v2092
    %v2231 = vunpack.c.l.b16 %v2093
    %v2232 = vunpack.c.h.b16 %v2093
    %v2233 = vunpack.c.l.b16 %v2094
    %v2234 = vunpack.c.h.b16 %v2094
    %v2235 = vunpack.c.l.b16 %v2095
    %v2236 = vunpack.c.h.b16 %v2095
    %v2237 = vunpack.c.l.b16 %v2096
    %v2238 = vunpack.c.h.b16 %v2096
    %v2239 = vunpack.c.l.b16 %v2097
    %v2240 = vunpack.c.h.b16 %v2097
    %v2241 = vunpack.c.l.b16 %v2098
    %v2242 = vunpack.c.h.b16 %v2098
    %v2243 = vunpack.c.l.b16 %v2099
    %v2244 = vunpack.c.h.b16 %v2099
    %v2245 = vunpack.c.l.b16 %v2100
    %v2246 = vunpack.c.h.b16 %v2100
    %v2247 = vunpack.c.l.b16 %v2101
    %v2248 = vunpack.c.h.b16 %v2101
    %v2249 = vunpack.c.l.b16 %v2102
    %v2250 = vunpack.c.h.b16 %v2102
    %v2251 = vunpack.c.l.b16 %v2103
    %v2252 = vunpack.c.h.b16 %v2103
    %v2253 = vunpack.c.l.b16 %v2104
    %v2254 = vunpack.c.h.b16 %v2104
    %v2255 = vunpack.c.l.b16 %v2105
    %v2256 = vunpack.c.h.b16 %v2105
    %v2257 = vpack.c.b16 %v2197, %v2193
    %v2258 = vpack.c.b16 %v2198, %v2194
    %v2259 = vpack.c.b16 %v2199, %v2195
    %v2260 = vpack.c.b16 %v2200, %v2196
    %v2261 = vpack.c.b16 %v2205, %v2201
    %v2262 = vpack.c.b16 %v2206, %v2202
    %v2263 = vpack.c.b16 %v2207, %v2203
    %v2264 = vpack.c.b16 %v2208, %v2204
    %v2265 = vpack.c.b16 %v2213, %v2209
    %v2266 = vpack.c.b16 %v2214, %v2210
    %v2267 = vpack.c.b16 %v2215, %v2211
    %v2268 = vpack.c.b16 %v2216, %v2212
    %v2269 = vpack.c.b16 %v2221, %v2217
    %v2270 = vpack.c.b16 %v2222, %v2218
    %v2271 = vpack.c.b16 %v2223, %v2219
    %v2272 = vpack.c.b16 %v2224, %v2220
    %v2273 = vpack.c.b16 %v2229, %v2225
    %v2274 = vpack.c.b16 %v2230, %v2226
    %v2275 = vpack.c.b16 %v2231, %v2227
    %v2276 = vpack.c.b16 %v2232, %v2228
    %v2277 = vpack.c.b16 %v2237, %v2233
    %v2278 = vpack.c.b16 %v2238, %v2234
    %v2279 = vpack.c.b16 %v2239, %v2235
    %v2280 = vpack.c.b16 %v2240, %v2236
    %v2281 = vpack.c.b16 %v2245, %v2241
    %v2282 = vpack.c.b16 %v2246, %v2242
    %v2283 = vpack.c.b16 %v2247, %v2243
    %v2284 = vpack.c.b16 %v2248, %v2244
    %v2285 = vpack.c.b16 %v2253, %v2249
    %v2286 = vpack.c.b16 %v2254, %v2250
    %v2287 = vpack.c.b16 %v2255, %v2251
    %v2288 = vpack.c.b16 %v2256, %v2252
    %2321 = vmatprep.subr.bf16.mxu0 %v2258
    %2322 = vmatpush1.bf16.msra.mxu0 %v2257
    %2323 = vmatprep.subr.bf16.mxu0 %v2262
    %2324 = vmatpush1.bf16.msra.mxu0 %v2261
    %2325 = vmatprep.subr.bf16.mxu0 %v2266
    %2326 = vmatpush1.bf16.msra.mxu0 %v2265
    %2327 = vmatprep.subr.bf16.mxu0 %v2270
    %2328 = vmatpush1.bf16.msra.mxu0 %v2269
    %2329 = vmatprep.subr.bf16.mxu0 %v2274
    %2330 = vmatpush1.bf16.msra.mxu0 %v2273
    %2331 = vmatprep.subr.bf16.mxu0 %v2278
    %2332 = vmatpush1.bf16.msra.mxu0 %v2277
    %2333 = vmatprep.subr.bf16.mxu0 %v2282
    %2334 = vmatpush1.bf16.msra.mxu0 %v2281
    %2335 = vmatprep.subr.bf16.mxu0 %v2286
    %2336 = vmatpush1.bf16.msra.mxu0 %v2285
    %2337 = vmatprep.subr.bf16.mxu0 0
    %2338 = vmatpush1.bf16.msra.mxu0 0
    %2339 = vmatprep.subr.bf16.mxu0 0
    %2340 = vmatpush1.bf16.msra.mxu0 0
    %2341 = vmatprep.subr.bf16.mxu0 0
    %2342 = vmatpush1.bf16.msra.mxu0 0
    %2343 = vmatprep.subr.bf16.mxu0 0
    %2344 = vmatpush1.bf16.msra.mxu0 0
    %2345 = vmatprep.subr.bf16.mxu0 0
    %2346 = vmatpush1.bf16.msra.mxu0 0
    %2347 = vmatprep.subr.bf16.mxu0 0
    %2348 = vmatpush1.bf16.msra.mxu0 0
    %2349 = vmatprep.subr.bf16.mxu0 0
    %2350 = vmatpush1.bf16.msra.mxu0 0
    %2351 = vmatprep.subr.bf16.mxu0 0
    %2352 = vmatpush1.bf16.msra.mxu0 0
    %2353 = vmatprep.mubr.bf16.mxu0 0
    %2354 = vmatmul.mubr.bf16.gmra.mrb[0].mxu0 %v2139
    %v2355 = vpop.f32.mrb[0].mxu0
    %v2356 = vadd.f32 %v2144, %v2355
    %v2357 = vpop.f32.mrb[0].mxu0
    %v2358 = vadd.f32 %v2148, %v2357
    %v2359 = vpop.f32.mrb[0].mxu0
    %v2360 = vpop.f32.mrb[0].mxu0
    %2361 = vdwg.mxu0
    %2362 = vmatprep.subr.bf16.mxu0 %v2260
    %2363 = vmatpush1.bf16.msra.mxu0 %v2259
    %2364 = vmatprep.subr.bf16.mxu0 %v2264
    %2365 = vmatpush1.bf16.msra.mxu0 %v2263
    %2366 = vmatprep.subr.bf16.mxu0 %v2268
    %2367 = vmatpush1.bf16.msra.mxu0 %v2267
    %2368 = vmatprep.subr.bf16.mxu0 %v2272
    %2369 = vmatpush1.bf16.msra.mxu0 %v2271
    %2370 = vmatprep.subr.bf16.mxu0 %v2276
    %2371 = vmatpush1.bf16.msra.mxu0 %v2275
    %2372 = vmatprep.subr.bf16.mxu0 %v2280
    %2373 = vmatpush1.bf16.msra.mxu0 %v2279
    %2374 = vmatprep.subr.bf16.mxu0 %v2284
    %2375 = vmatpush1.bf16.msra.mxu0 %v2283
    %2376 = vmatprep.subr.bf16.mxu0 %v2288
    %2377 = vmatpush1.bf16.msra.mxu0 %v2287
    %2378 = vmatprep.subr.bf16.mxu0 0
    %2379 = vmatpush1.bf16.msra.mxu0 0
    %2380 = vmatprep.subr.bf16.mxu0 0
    %2381 = vmatpush1.bf16.msra.mxu0 0
    %2382 = vmatprep.subr.bf16.mxu0 0
    %2383 = vmatpush1.bf16.msra.mxu0 0
    %2384 = vmatprep.subr.bf16.mxu0 0
    %2385 = vmatpush1.bf16.msra.mxu0 0
    %2386 = vmatprep.subr.bf16.mxu0 0
    %2387 = vmatpush1.bf16.msra.mxu0 0
    %2388 = vmatprep.subr.bf16.mxu0 0
    %2389 = vmatpush1.bf16.msra.mxu0 0
    %2390 = vmatprep.subr.bf16.mxu0 0
    %2391 = vmatpush1.bf16.msra.mxu0 0
    %2392 = vmatprep.subr.bf16.mxu0 0
    %2393 = vmatpush1.bf16.msra.mxu0 0
    %2394 = vmatprep.mubr.bf16.mxu0 0
    %2395 = vmatmul.mubr.bf16.gmra.mrb[0].mxu0 %v2139
    %v2396 = vpop.f32.mrb[0].mxu0
    %v2397 = vadd.f32 %v2152, %v2396
    %v2398 = vpop.f32.mrb[0].mxu0
    %v2399 = vadd.f32 %v2156, %v2398
    %v2400 = vpop.f32.mrb[0].mxu0
    %v2401 = vpop.f32.mrb[0].mxu0
    %2402 = vdwg.mxu0
    %v2435 = vunpack.c.l.b16 %v2106
    %v2436 = vunpack.c.h.b16 %v2106
    %v2437 = vunpack.c.l.b16 %v2107
    %v2438 = vunpack.c.h.b16 %v2107
    %v2439 = vunpack.c.l.b16 %v2108
    %v2440 = vunpack.c.h.b16 %v2108
    %v2441 = vunpack.c.l.b16 %v2109
    %v2442 = vunpack.c.h.b16 %v2109
    %v2443 = vunpack.c.l.b16 %v2110
    %v2444 = vunpack.c.h.b16 %v2110
    %v2445 = vunpack.c.l.b16 %v2111
    %v2446 = vunpack.c.h.b16 %v2111
    %v2447 = vunpack.c.l.b16 %v2112
    %v2448 = vunpack.c.h.b16 %v2112
    %v2449 = vunpack.c.l.b16 %v2113
    %v2450 = vunpack.c.h.b16 %v2113
    %v2451 = vunpack.c.l.b16 %v2114
    %v2452 = vunpack.c.h.b16 %v2114
    %v2453 = vunpack.c.l.b16 %v2115
    %v2454 = vunpack.c.h.b16 %v2115
    %v2455 = vunpack.c.l.b16 %v2116
    %v2456 = vunpack.c.h.b16 %v2116
    %v2457 = vunpack.c.l.b16 %v2117
    %v2458 = vunpack.c.h.b16 %v2117
    %v2459 = vunpack.c.l.b16 %v2118
    %v2460 = vunpack.c.h.b16 %v2118
    %v2461 = vunpack.c.l.b16 %v2119
    %v2462 = vunpack.c.h.b16 %v2119
    %v2463 = vunpack.c.l.b16 %v2120
    %v2464 = vunpack.c.h.b16 %v2120
    %v2465 = vunpack.c.l.b16 %v2121
    %v2466 = vunpack.c.h.b16 %v2121
    %v2467 = vunpack.c.l.b16 %v2122
    %v2468 = vunpack.c.h.b16 %v2122
    %v2469 = vunpack.c.l.b16 %v2123
    %v2470 = vunpack.c.h.b16 %v2123
    %v2471 = vunpack.c.l.b16 %v2124
    %v2472 = vunpack.c.h.b16 %v2124
    %v2473 = vunpack.c.l.b16 %v2125
    %v2474 = vunpack.c.h.b16 %v2125
    %v2475 = vunpack.c.l.b16 %v2126
    %v2476 = vunpack.c.h.b16 %v2126
    %v2477 = vunpack.c.l.b16 %v2127
    %v2478 = vunpack.c.h.b16 %v2127
    %v2479 = vunpack.c.l.b16 %v2128
    %v2480 = vunpack.c.h.b16 %v2128
    %v2481 = vunpack.c.l.b16 %v2129
    %v2482 = vunpack.c.h.b16 %v2129
    %v2483 = vunpack.c.l.b16 %v2130
    %v2484 = vunpack.c.h.b16 %v2130
    %v2485 = vunpack.c.l.b16 %v2131
    %v2486 = vunpack.c.h.b16 %v2131
    %v2487 = vunpack.c.l.b16 %v2132
    %v2488 = vunpack.c.h.b16 %v2132
    %v2489 = vunpack.c.l.b16 %v2133
    %v2490 = vunpack.c.h.b16 %v2133
    %v2491 = vunpack.c.l.b16 %v2134
    %v2492 = vunpack.c.h.b16 %v2134
    %v2493 = vunpack.c.l.b16 %v2135
    %v2494 = vunpack.c.h.b16 %v2135
    %v2495 = vunpack.c.l.b16 %v2136
    %v2496 = vunpack.c.h.b16 %v2136
    %v2497 = vunpack.c.l.b16 %v2137
    %v2498 = vunpack.c.h.b16 %v2137
    %v2499 = vpack.c.b16 %v2439, %v2435
    %v2500 = vpack.c.b16 %v2440, %v2436
    %v2501 = vpack.c.b16 %v2441, %v2437
    %v2502 = vpack.c.b16 %v2442, %v2438
    %v2503 = vpack.c.b16 %v2447, %v2443
    %v2504 = vpack.c.b16 %v2448, %v2444
    %v2505 = vpack.c.b16 %v2449, %v2445
    %v2506 = vpack.c.b16 %v2450, %v2446
    %v2507 = vpack.c.b16 %v2455, %v2451
    %v2508 = vpack.c.b16 %v2456, %v2452
    %v2509 = vpack.c.b16 %v2457, %v2453
    %v2510 = vpack.c.b16 %v2458, %v2454
    %v2511 = vpack.c.b16 %v2463, %v2459
    %v2512 = vpack.c.b16 %v2464, %v2460
    %v2513 = vpack.c.b16 %v2465, %v2461
    %v2514 = vpack.c.b16 %v2466, %v2462
    %v2515 = vpack.c.b16 %v2471, %v2467
    %v2516 = vpack.c.b16 %v2472, %v2468
    %v2517 = vpack.c.b16 %v2473, %v2469
    %v2518 = vpack.c.b16 %v2474, %v2470
    %v2519 = vpack.c.b16 %v2479, %v2475
    %v2520 = vpack.c.b16 %v2480, %v2476
    %v2521 = vpack.c.b16 %v2481, %v2477
    %v2522 = vpack.c.b16 %v2482, %v2478
    %v2523 = vpack.c.b16 %v2487, %v2483
    %v2524 = vpack.c.b16 %v2488, %v2484
    %v2525 = vpack.c.b16 %v2489, %v2485
    %v2526 = vpack.c.b16 %v2490, %v2486
    %v2527 = vpack.c.b16 %v2495, %v2491
    %v2528 = vpack.c.b16 %v2496, %v2492
    %v2529 = vpack.c.b16 %v2497, %v2493
    %v2530 = vpack.c.b16 %v2498, %v2494
    %2563 = vmatprep.subr.bf16.mxu0 %v2500
    %2564 = vmatpush1.bf16.msra.mxu0 %v2499
    %2565 = vmatprep.subr.bf16.mxu0 %v2504
    %2566 = vmatpush1.bf16.msra.mxu0 %v2503
    %2567 = vmatprep.subr.bf16.mxu0 %v2508
    %2568 = vmatpush1.bf16.msra.mxu0 %v2507
    %2569 = vmatprep.subr.bf16.mxu0 %v2512
    %2570 = vmatpush1.bf16.msra.mxu0 %v2511
    %2571 = vmatprep.subr.bf16.mxu0 %v2516
    %2572 = vmatpush1.bf16.msra.mxu0 %v2515
    %2573 = vmatprep.subr.bf16.mxu0 %v2520
    %2574 = vmatpush1.bf16.msra.mxu0 %v2519
    %2575 = vmatprep.subr.bf16.mxu0 %v2524
    %2576 = vmatpush1.bf16.msra.mxu0 %v2523
    %2577 = vmatprep.subr.bf16.mxu0 %v2528
    %2578 = vmatpush1.bf16.msra.mxu0 %v2527
    %2579 = vmatprep.subr.bf16.mxu0 0
    %2580 = vmatpush1.bf16.msra.mxu0 0
    %2581 = vmatprep.subr.bf16.mxu0 0
    %2582 = vmatpush1.bf16.msra.mxu0 0
    %2583 = vmatprep.subr.bf16.mxu0 0
    %2584 = vmatpush1.bf16.msra.mxu0 0
    %2585 = vmatprep.subr.bf16.mxu0 0
    %2586 = vmatpush1.bf16.msra.mxu0 0
    %2587 = vmatprep.subr.bf16.mxu0 0
    %2588 = vmatpush1.bf16.msra.mxu0 0
    %2589 = vmatprep.subr.bf16.mxu0 0
    %2590 = vmatpush1.bf16.msra.mxu0 0
    %2591 = vmatprep.subr.bf16.mxu0 0
    %2592 = vmatpush1.bf16.msra.mxu0 0
    %2593 = vmatprep.subr.bf16.mxu0 0
    %2594 = vmatpush1.bf16.msra.mxu0 0
    %2595 = vmatprep.mubr.bf16.mxu0 0
    %2596 = vmatmul.mubr.bf16.gmra.mrb[0].mxu0 0
    %v2597 = vpop.f32.mrb[0].mxu0
    %v2598 = vadd.f32 0.0, %v2597
    %v2599 = vpop.f32.mrb[0].mxu0
    %v2600 = vadd.f32 0.0, %v2599
    %v2601 = vpop.f32.mrb[0].mxu0
    %v2602 = vpop.f32.mrb[0].mxu0
    %2603 = vdwg.mxu0
    %2604 = vmatprep.subr.bf16.mxu0 %v2502
    %2605 = vmatpush1.bf16.msra.mxu0 %v2501
    %2606 = vmatprep.subr.bf16.mxu0 %v2506
    %2607 = vmatpush1.bf16.msra.mxu0 %v2505
    %2608 = vmatprep.subr.bf16.mxu0 %v2510
    %2609 = vmatpush1.bf16.msra.mxu0 %v2509
    %2610 = vmatprep.subr.bf16.mxu0 %v2514
    %2611 = vmatpush1.bf16.msra.mxu0 %v2513
    %2612 = vmatprep.subr.bf16.mxu0 %v2518
    %2613 = vmatpush1.bf16.msra.mxu0 %v2517
    %2614 = vmatprep.subr.bf16.mxu0 %v2522
    %2615 = vmatpush1.bf16.msra.mxu0 %v2521
    %2616 = vmatprep.subr.bf16.mxu0 %v2526
    %2617 = vmatpush1.bf16.msra.mxu0 %v2525
    %2618 = vmatprep.subr.bf16.mxu0 %v2530
    %2619 = vmatpush1.bf16.msra.mxu0 %v2529
    %2620 = vmatprep.subr.bf16.mxu0 0
    %2621 = vmatpush1.bf16.msra.mxu0 0
    %2622 = vmatprep.subr.bf16.mxu0 0
    %2623 = vmatpush1.bf16.msra.mxu0 0
    %2624 = vmatprep.subr.bf16.mxu0 0
    %2625 = vmatpush1.bf16.msra.mxu0 0
    %2626 = vmatprep.subr.bf16.mxu0 0
    %2627 = vmatpush1.bf16.msra.mxu0 0
    %2628 = vmatprep.subr.bf16.mxu0 0
    %2629 = vmatpush1.bf16.msra.mxu0 0
    %2630 = vmatprep.subr.bf16.mxu0 0
    %2631 = vmatpush1.bf16.msra.mxu0 0
    %2632 = vmatprep.subr.bf16.mxu0 0
    %2633 = vmatpush1.bf16.msra.mxu0 0
    %2634 = vmatprep.subr.bf16.mxu0 0
    %2635 = vmatpush1.bf16.msra.mxu0 0
    %2636 = vmatprep.mubr.bf16.mxu0 0
    %2637 = vmatmul.mubr.bf16.gmra.mrb[0].mxu0 0
    %v2638 = vpop.f32.mrb[0].mxu0
    %v2639 = vadd.f32 0.0, %v2638
    %v2640 = vpop.f32.mrb[0].mxu0
    %v2641 = vadd.f32 0.0, %v2640
    %v2642 = vpop.f32.mrb[0].mxu0
    %v2643 = vpop.f32.mrb[0].mxu0
    %2644 = vdwg.mxu0
    %v2645 = vadd.f32 %v2356, %v2598
    %v2646 = vadd.f32 %v2358, %v2600
    %v2647 = vadd.f32 %v2397, %v2639
    %v2648 = vadd.f32 %v2399, %v2641
    %v2649 = vxor.u32 %v2645, 2147483648
    %v2650 = vmul.f32 %v2649, 1.442695
    %v2651 = vpow.pop %v2650
    %v2652 = vadd.f32 %v2651, 1.0
    %v2653 = vrcp.pop %v2652
    %v2654 = vmul.f32 1.0, %v2653
    %v2655 = vxor.u32 %v2646, 2147483648
    %v2656 = vmul.f32 %v2655, 1.442695
    %v2657 = vpow.pop %v2656
    %v2658 = vadd.f32 %v2657, 1.0
    %v2659 = vrcp.pop %v2658
    %v2660 = vmul.f32 1.0, %v2659
    %v2661 = vtanh.pop %v2647
    %v2662 = vxor.u32 %v2648, 2147483648
    %v2663 = vmul.f32 %v2662, 1.442695
    %v2664 = vpow.pop %v2663
    %v2665 = vadd.f32 %v2664, 1.0
    %v2666 = vrcp.pop %v2665
    %v2667 = vmul.f32 1.0, %v2666
    %v2668 = vmul.f32 %v2660, 0.0
    %v2669 = vmul.f32 %v2654, %v2661
    %v2670 = vadd.f32 %v2668, %v2669
    %v2671 = vtanh.pop %v2670
    %v2672 = vmul.f32 %v2667, %v2671
    %v2673 = vpack.c.bf16 %v2672, %v2672
    %2674 = vst [vmem:[#allocation3] sm:$0xf] %v2673
    %v2675 = vld [vmem:[%s887] sm:$0xf]
    %2676 = vmatprep.subr.bf16.mxu0 %v2258
    %2677 = vmatpush1.bf16.msra.mxu0 %v2257
    %2678 = vmatprep.subr.bf16.mxu0 %v2262
    %2679 = vmatpush1.bf16.msra.mxu0 %v2261
    %2680 = vmatprep.subr.bf16.mxu0 %v2266
    %2681 = vmatpush1.bf16.msra.mxu0 %v2265
    %2682 = vmatprep.subr.bf16.mxu0 %v2270
    %2683 = vmatpush1.bf16.msra.mxu0 %v2269
    %2684 = vmatprep.subr.bf16.mxu0 %v2274
    %2685 = vmatpush1.bf16.msra.mxu0 %v2273
    %2686 = vmatprep.subr.bf16.mxu0 %v2278
    %2687 = vmatpush1.bf16.msra.mxu0 %v2277
    %2688 = vmatprep.subr.bf16.mxu0 %v2282
    %2689 = vmatpush1.bf16.msra.mxu0 %v2281
    %2690 = vmatprep.subr.bf16.mxu0 %v2286
    %2691 = vmatpush1.bf16.msra.mxu0 %v2285
    %2692 = vmatprep.subr.bf16.mxu0 0
    %2693 = vmatpush1.bf16.msra.mxu0 0
    %2694 = vmatprep.subr.bf16.mxu0 0
    %2695 = vmatpush1.bf16.msra.mxu0 0
    %2696 = vmatprep.subr.bf16.mxu0 0
    %2697 = vmatpush1.bf16.msra.mxu0 0
    %2698 = vmatprep.subr.bf16.mxu0 0
    %2699 = vmatpush1.bf16.msra.mxu0 0
    %2700 = vmatprep.subr.bf16.mxu0 0
    %2701 = vmatpush1.bf16.msra.mxu0 0
    %2702 = vmatprep.subr.bf16.mxu0 0
    %2703 = vmatpush1.bf16.msra.mxu0 0
    %2704 = vmatprep.subr.bf16.mxu0 0
    %2705 = vmatpush1.bf16.msra.mxu0 0
    %2706 = vmatprep.subr.bf16.mxu0 0
    %2707 = vmatpush1.bf16.msra.mxu0 0
    %2708 = vmatprep.mubr.bf16.mxu0 0
    %2709 = vmatmul.mubr.bf16.gmra.mrb[0].mxu0 %v2675
    %v2710 = vpop.f32.mrb[0].mxu0
    %v2711 = vadd.f32 %v2144, %v2710
    %v2712 = vpop.f32.mrb[0].mxu0
    %v2713 = vadd.f32 %v2148, %v2712
    %v2714 = vpop.f32.mrb[0].mxu0
    %v2715 = vpop.f32.mrb[0].mxu0
    %2716 = vdwg.mxu0
    %2717 = vmatprep.subr.bf16.mxu0 %v2260
    %2718 = vmatpush1.bf16.msra.mxu0 %v2259
    %2719 = vmatprep.subr.bf16.mxu0 %v2264
    %2720 = vmatpush1.bf16.msra.mxu0 %v2263
    %2721 = vmatprep.subr.bf16.mxu0 %v2268
    %2722 = vmatpush1.bf16.msra.mxu0 %v2267
    %2723 = vmatprep.subr.bf16.mxu0 %v2272
    %2724 = vmatpush1.bf16.msra.mxu0 %v2271
    %2725 = vmatprep.subr.bf16.mxu0 %v2276
    %2726 = vmatpush1.bf16.msra.mxu0 %v2275
    %2727 = vmatprep.subr.bf16.mxu0 %v2280
    %2728 = vmatpush1.bf16.msra.mxu0 %v2279
    %2729 = vmatprep.subr.bf16.mxu0 %v2284
    %2730 = vmatpush1.bf16.msra.mxu0 %v2283
    %2731 = vmatprep.subr.bf16.mxu0 %v2288
    %2732 = vmatpush1.bf16.msra.mxu0 %v2287
    %2733 = vmatprep.subr.bf16.mxu0 0
    %2734 = vmatpush1.bf16.msra.mxu0 0
    %2735 = vmatprep.subr.bf16.mxu0 0
    %2736 = vmatpush1.bf16.msra.mxu0 0
    %2737 = vmatprep.subr.bf16.mxu0 0
    %2738 = vmatpush1.bf16.msra.mxu0 0
    %2739 = vmatprep.subr.bf16.mxu0 0
    %2740 = vmatpush1.bf16.msra.mxu0 0
    %2741 = vmatprep.subr.bf16.mxu0 0
    %2742 = vmatpush1.bf16.msra.mxu0 0
    %2743 = vmatprep.subr.bf16.mxu0 0
    %2744 = vmatpush1.bf16.msra.mxu0 0
    %2745 = vmatprep.subr.bf16.mxu0 0
    %2746 = vmatpush1.bf16.msra.mxu0 0
    %2747 = vmatprep.subr.bf16.mxu0 0
    %2748 = vmatpush1.bf16.msra.mxu0 0
    %2749 = vmatprep.mubr.bf16.mxu0 0
    %2750 = vmatmul.mubr.bf16.gmra.mrb[0].mxu0 %v2675
    %v2751 = vpop.f32.mrb[0].mxu0
    %v2752 = vadd.f32 %v2152, %v2751
    %v2753 = vpop.f32.mrb[0].mxu0
    %v2754 = vadd.f32 %v2156, %v2753
    %v2755 = vpop.f32.mrb[0].mxu0
    %v2756 = vpop.f32.mrb[0].mxu0
    %2757 = vdwg.mxu0
    %2758 = vmatprep.subr.bf16.mxu0 %v2500
    %2759 = vmatpush1.bf16.msra.mxu0 %v2499
    %2760 = vmatprep.subr.bf16.mxu0 %v2504
    %2761 = vmatpush1.bf16.msra.mxu0 %v2503
    %2762 = vmatprep.subr.bf16.mxu0 %v2508
    %2763 = vmatpush1.bf16.msra.mxu0 %v2507
    %2764 = vmatprep.subr.bf16.mxu0 %v2512
    %2765 = vmatpush1.bf16.msra.mxu0 %v2511
    %2766 = vmatprep.subr.bf16.mxu0 %v2516
    %2767 = vmatpush1.bf16.msra.mxu0 %v2515
    %2768 = vmatprep.subr.bf16.mxu0 %v2520
    %2769 = vmatpush1.bf16.msra.mxu0 %v2519
    %2770 = vmatprep.subr.bf16.mxu0 %v2524
    %2771 = vmatpush1.bf16.msra.mxu0 %v2523
    %2772 = vmatprep.subr.bf16.mxu0 %v2528
    %2773 = vmatpush1.bf16.msra.mxu0 %v2527
    %2774 = vmatprep.subr.bf16.mxu0 0
    %2775 = vmatpush1.bf16.msra.mxu0 0
    %2776 = vmatprep.subr.bf16.mxu0 0
    %2777 = vmatpush1.bf16.msra.mxu0 0
    %2778 = vmatprep.subr.bf16.mxu0 0
    %2779 = vmatpush1.bf16.msra.mxu0 0
    %2780 = vmatprep.subr.bf16.mxu0 0
    %2781 = vmatpush1.bf16.msra.mxu0 0
    %2782 = vmatprep.subr.bf16.mxu0 0
    %2783 = vmatpush1.bf16.msra.mxu0 0
    %2784 = vmatprep.subr.bf16.mxu0 0
    %2785 = vmatpush1.bf16.msra.mxu0 0
    %2786 = vmatprep.subr.bf16.mxu0 0
    %2787 = vmatpush1.bf16.msra.mxu0 0
    %2788 = vmatprep.subr.bf16.mxu0 0
    %2789 = vmatpush1.bf16.msra.mxu0 0
    %2790 = vmatprep.mubr.bf16.mxu0 0
    %2791 = vmatmul.mubr.bf16.gmra.mrb[0].mxu0 %v2673
    %v2792 = vpop.f32.mrb[0].mxu0
    %v2793 = vadd.f32 0.0, %v2792
    %v2794 = vpop.f32.mrb[0].mxu0
    %v2795 = vadd.f32 0.0, %v2794
    %v2796 = vpop.f32.mrb[0].mxu0
    %v2797 = vpop.f32.mrb[0].mxu0
    %2798 = vdwg.mxu0
    %2799 = vmatprep.subr.bf16.mxu0 %v2502
    %2800 = vmatpush1.bf16.msra.mxu0 %v2501
    %2801 = vmatprep.subr.bf16.mxu0 %v2506
    %2802 = vmatpush1.bf16.msra.mxu0 %v2505
    %2803 = vmatprep.subr.bf16.mxu0 %v2510
    %2804 = vmatpush1.bf16.msra.mxu0 %v2509
    %2805 = vmatprep.subr.bf16.mxu0 %v2514
    %2806 = vmatpush1.bf16.msra.mxu0 %v2513
    %2807 = vmatprep.subr.bf16.mxu0 %v2518
    %2808 = vmatpush1.bf16.msra.mxu0 %v2517
    %2809 = vmatprep.subr.bf16.mxu0 %v2522
    %2810 = vmatpush1.bf16.msra.mxu0 %v2521
    %2811 = vmatprep.subr.bf16.mxu0 %v2526
    %2812 = vmatpush1.bf16.msra.mxu0 %v2525
    %2813 = vmatprep.subr.bf16.mxu0 %v2530
    %2814 = vmatpush1.bf16.msra.mxu0 %v2529
    %2815 = vmatprep.subr.bf16.mxu0 0
    %2816 = vmatpush1.bf16.msra.mxu0 0
    %2817 = vmatprep.subr.bf16.mxu0 0
    %2818 = vmatpush1.bf16.msra.mxu0 0
    %2819 = vmatprep.subr.bf16.mxu0 0
    %2820 = vmatpush1.bf16.msra.mxu0 0
    %2821 = vmatprep.subr.bf16.mxu0 0
    %2822 = vmatpush1.bf16.msra.mxu0 0
    %2823 = vmatprep.subr.bf16.mxu0 0
    %2824 = vmatpush1.bf16.msra.mxu0 0
    %2825 = vmatprep.subr.bf16.mxu0 0
    %2826 = vmatpush1.bf16.msra.mxu0 0
    %2827 = vmatprep.subr.bf16.mxu0 0
    %2828 = vmatpush1.bf16.msra.mxu0 0
    %2829 = vmatprep.subr.bf16.mxu0 0
    %2830 = vmatpush1.bf16.msra.mxu0 0
    %2831 = vmatprep.mubr.bf16.mxu0 0
    %2832 = vmatmul.mubr.bf16.gmra.mrb[0].mxu0 %v2673
    %v2833 = vpop.f32.mrb[0].mxu0
    %v2834 = vadd.f32 0.0, %v2833
    %v2835 = vpop.f32.mrb[0].mxu0
    %v2836 = vadd.f32 0.0, %v2835
    %v2837 = vpop.f32.mrb[0].mxu0
    %v2838 = vpop.f32.mrb[0].mxu0
    %2839 = vdwg.mxu0
    %v2840 = vadd.f32 %v2711, %v2793
    %v2841 = vadd.f32 %v2713, %v2795
    %v2842 = vadd.f32 %v2752, %v2834
    %v2843 = vadd.f32 %v2754, %v2836
    %v2844 = vxor.u32 %v2840, 2147483648
    %v2845 = vmul.f32 %v2844, 1.442695
    %v2846 = vpow.pop %v2845
    %v2847 = vadd.f32 %v2846, 1.0
    %v2848 = vrcp.pop %v2847
    %v2849 = vmul.f32 1.0, %v2848
    %v2850 = vxor.u32 %v2841, 2147483648
    %v2851 = vmul.f32 %v2850, 1.442695
    %v2852 = vpow.pop %v2851
    %v2853 = vadd.f32 %v2852, 1.0
    %v2854 = vrcp.pop %v2853
    %v2855 = vmul.f32 1.0, %v2854
    %v2856 = vtanh.pop %v2842
    %v2857 = vxor.u32 %v2843, 2147483648
    %v2858 = vmul.f32 %v2857, 1.442695
    %v2859 = vpow.pop %v2858
    %v2860 = vadd.f32 %v2859, 1.0
    %v2861 = vrcp.pop %v2860
    %v2862 = vmul.f32 1.0, %v2861
    %v2863 = vmul.f32 %v2855, %v2670
    %v2864 = vmul.f32 %v2849, %v2856
    %v2865 = vadd.f32 %v2863, %v2864
    %v2866 = vtanh.pop %v2865
    %v2867 = vmul.f32 %v2862, %v2866
    %v2868 = vpack.c.bf16 %v2867, %v2867
    %s2869 = scalar_lea.vmem [#allocation3], 4
    %2870 = vst [vmem:[%s2869] sm:$0xf] %v2868
    %v2871 = vld [vmem:[%s1084] sm:$0xf]
    %2872 = vmatprep.subr.bf16.mxu0 %v2258
    %2873 = vmatpush1.bf16.msra.mxu0 %v2257
    %2874 = vmatprep.subr.bf16.mxu0 %v2262
    %2875 = vmatpush1.bf16.msra.mxu0 %v2261
    %2876 = vmatprep.subr.bf16.mxu0 %v2266
    %2877 = vmatpush1.bf16.msra.mxu0 %v2265
    %2878 = vmatprep.subr.bf16.mxu0 %v2270
    %2879 = vmatpush1.bf16.msra.mxu0 %v2269
    %2880 = vmatprep.subr.bf16.mxu0 %v2274
    %2881 = vmatpush1.bf16.msra.mxu0 %v2273
    %2882 = vmatprep.subr.bf16.mxu0 %v2278
    %2883 = vmatpush1.bf16.msra.mxu0 %v2277
    %2884 = vmatprep.subr.bf16.mxu0 %v2282
    %2885 = vmatpush1.bf16.msra.mxu0 %v2281
    %2886 = vmatprep.subr.bf16.mxu0 %v2286
    %2887 = vmatpush1.bf16.msra.mxu0 %v2285
    %2888 = vmatprep.subr.bf16.mxu0 0
    %2889 = vmatpush1.bf16.msra.mxu0 0
    %2890 = vmatprep.subr.bf16.mxu0 0
    %2891 = vmatpush1.bf16.msra.mxu0 0
    %2892 = vmatprep.subr.bf16.mxu0 0
    %2893 = vmatpush1.bf16.msra.mxu0 0
    %2894 = vmatprep.subr.bf16.mxu0 0
    %2895 = vmatpush1.bf16.msra.mxu0 0
    %2896 = vmatprep.subr.bf16.mxu0 0
    %2897 = vmatpush1.bf16.msra.mxu0 0
    %2898 = vmatprep.subr.bf16.mxu0 0
    %2899 = vmatpush1.bf16.msra.mxu0 0
    %2900 = vmatprep.subr.bf16.mxu0 0
    %2901 = vmatpush1.bf16.msra.mxu0 0
    %2902 = vmatprep.subr.bf16.mxu0 0
    %2903 = vmatpush1.bf16.msra.mxu0 0
    %2904 = vmatprep.mubr.bf16.mxu0 0
    %2905 = vmatmul.mubr.bf16.gmra.mrb[0].mxu0 %v2871
    %v2906 = vpop.f32.mrb[0].mxu0
    %v2907 = vadd.f32 %v2144, %v2906
    %v2908 = vpop.f32.mrb[0].mxu0
    %v2909 = vadd.f32 %v2148, %v2908
    %v2910 = vpop.f32.mrb[0].mxu0
    %v2911 = vpop.f32.mrb[0].mxu0
    %2912 = vdwg.mxu0
    %2913 = vmatprep.subr.bf16.mxu0 %v2260
    %2914 = vmatpush1.bf16.msra.mxu0 %v2259
    %2915 = vmatprep.subr.bf16.mxu0 %v2264
    %2916 = vmatpush1.bf16.msra.mxu0 %v2263
    %2917 = vmatprep.subr.bf16.mxu0 %v2268
    %2918 = vmatpush1.bf16.msra.mxu0 %v2267
    %2919 = vmatprep.subr.bf16.mxu0 %v2272
    %2920 = vmatpush1.bf16.msra.mxu0 %v2271
    %2921 = vmatprep.subr.bf16.mxu0 %v2276
    %2922 = vmatpush1.bf16.msra.mxu0 %v2275
    %2923 = vmatprep.subr.bf16.mxu0 %v2280
    %2924 = vmatpush1.bf16.msra.mxu0 %v2279
    %2925 = vmatprep.subr.bf16.mxu0 %v2284
    %2926 = vmatpush1.bf16.msra.mxu0 %v2283
    %2927 = vmatprep.subr.bf16.mxu0 %v2288
    %2928 = vmatpush1.bf16.msra.mxu0 %v2287
    %2929 = vmatprep.subr.bf16.mxu0 0
    %2930 = vmatpush1.bf16.msra.mxu0 0
    %2931 = vmatprep.subr.bf16.mxu0 0
    %2932 = vmatpush1.bf16.msra.mxu0 0
    %2933 = vmatprep.subr.bf16.mxu0 0
    %2934 = vmatpush1.bf16.msra.mxu0 0
    %2935 = vmatprep.subr.bf16.mxu0 0
    %2936 = vmatpush1.bf16.msra.mxu0 0
    %2937 = vmatprep.subr.bf16.mxu0 0
    %2938 = vmatpush1.bf16.msra.mxu0 0
    %2939 = vmatprep.subr.bf16.mxu0 0
    %2940 = vmatpush1.bf16.msra.mxu0 0
    %2941 = vmatprep.subr.bf16.mxu0 0
    %2942 = vmatpush1.bf16.msra.mxu0 0
    %2943 = vmatprep.subr.bf16.mxu0 0
    %2944 = vmatpush1.bf16.msra.mxu0 0
    %2945 = vmatprep.mubr.bf16.mxu0 0
    %2946 = vmatmul.mubr.bf16.gmra.mrb[0].mxu0 %v2871
    %v2947 = vpop.f32.mrb[0].mxu0
    %v2948 = vadd.f32 %v2152, %v2947
    %v2949 = vpop.f32.mrb[0].mxu0
    %v2950 = vadd.f32 %v2156, %v2949
    %v2951 = vpop.f32.mrb[0].mxu0
    %v2952 = vpop.f32.mrb[0].mxu0
    %2953 = vdwg.mxu0
    %2954 = vmatprep.subr.bf16.mxu0 %v2500
    %2955 = vmatpush1.bf16.msra.mxu0 %v2499
    %2956 = vmatprep.subr.bf16.mxu0 %v2504
    %2957 = vmatpush1.bf16.msra.mxu0 %v2503
    %2958 = vmatprep.subr.bf16.mxu0 %v2508
    %2959 = vmatpush1.bf16.msra.mxu0 %v2507
    %2960 = vmatprep.subr.bf16.mxu0 %v2512
    %2961 = vmatpush1.bf16.msra.mxu0 %v2511
    %2962 = vmatprep.subr.bf16.mxu0 %v2516
    %2963 = vmatpush1.bf16.msra.mxu0 %v2515
    %2964 = vmatprep.subr.bf16.mxu0 %v2520
    %2965 = vmatpush1.bf16.msra.mxu0 %v2519
    %2966 = vmatprep.subr.bf16.mxu0 %v2524
    %2967 = vmatpush1.bf16.msra.mxu0 %v2523
    %2968 = vmatprep.subr.bf16.mxu0 %v2528
    %2969 = vmatpush1.bf16.msra.mxu0 %v2527
    %2970 = vmatprep.subr.bf16.mxu0 0
    %2971 = vmatpush1.bf16.msra.mxu0 0
    %2972 = vmatprep.subr.bf16.mxu0 0
    %2973 = vmatpush1.bf16.msra.mxu0 0
    %2974 = vmatprep.subr.bf16.mxu0 0
    %2975 = vmatpush1.bf16.msra.mxu0 0
    %2976 = vmatprep.subr.bf16.mxu0 0
    %2977 = vmatpush1.bf16.msra.mxu0 0
    %2978 = vmatprep.subr.bf16.mxu0 0
    %2979 = vmatpush1.bf16.msra.mxu0 0
    %2980 = vmatprep.subr.bf16.mxu0 0
    %2981 = vmatpush1.bf16.msra.mxu0 0
    %2982 = vmatprep.subr.bf16.mxu0 0
    %2983 = vmatpush1.bf16.msra.mxu0 0
    %2984 = vmatprep.subr.bf16.mxu0 0
    %2985 = vmatpush1.bf16.msra.mxu0 0
    %2986 = vmatprep.mubr.bf16.mxu0 0
    %2987 = vmatmul.mubr.bf16.gmra.mrb[0].mxu0 %v2868
    %v2988 = vpop.f32.mrb[0].mxu0
    %v2989 = vadd.f32 0.0, %v2988
    %v2990 = vpop.f32.mrb[0].mxu0
    %v2991 = vadd.f32 0.0, %v2990
    %v2992 = vpop.f32.mrb[0].mxu0
    %v2993 = vpop.f32.mrb[0].mxu0
    %2994 = vdwg.mxu0
    %2995 = vmatprep.subr.bf16.mxu0 %v2502
    %2996 = vmatpush1.bf16.msra.mxu0 %v2501
    %2997 = vmatprep.subr.bf16.mxu0 %v2506
    %2998 = vmatpush1.bf16.msra.mxu0 %v2505
    %2999 = vmatprep.subr.bf16.mxu0 %v2510
    %3000 = vmatpush1.bf16.msra.mxu0 %v2509
    %3001 = vmatprep.subr.bf16.mxu0 %v2514
    %3002 = vmatpush1.bf16.msra.mxu0 %v2513
    %3003 = vmatprep.subr.bf16.mxu0 %v2518
    %3004 = vmatpush1.bf16.msra.mxu0 %v2517
    %3005 = vmatprep.subr.bf16.mxu0 %v2522
    %3006 = vmatpush1.bf16.msra.mxu0 %v2521
    %3007 = vmatprep.subr.bf16.mxu0 %v2526
    %3008 = vmatpush1.bf16.msra.mxu0 %v2525
    %3009 = vmatprep.subr.bf16.mxu0 %v2530
    %3010 = vmatpush1.bf16.msra.mxu0 %v2529
    %3011 = vmatprep.subr.bf16.mxu0 0
    %3012 = vmatpush1.bf16.msra.mxu0 0
    %3013 = vmatprep.subr.bf16.mxu0 0
    %3014 = vmatpush1.bf16.msra.mxu0 0
    %3015 = vmatprep.subr.bf16.mxu0 0
    %3016 = vmatpush1.bf16.msra.mxu0 0
    %3017 = vmatprep.subr.bf16.mxu0 0
    %3018 = vmatpush1.bf16.msra.mxu0 0
    %3019 = vmatprep.subr.bf16.mxu0 0
    %3020 = vmatpush1.bf16.msra.mxu0 0
    %3021 = vmatprep.subr.bf16.mxu0 0
    %3022 = vmatpush1.bf16.msra.mxu0 0
    %3023 = vmatprep.subr.bf16.mxu0 0
    %3024 = vmatpush1.bf16.msra.mxu0 0
    %3025 = vmatprep.subr.bf16.mxu0 0
    %3026 = vmatpush1.bf16.msra.mxu0 0
    %3027 = vmatprep.mubr.bf16.mxu0 0
    %3028 = vmatmul.mubr.bf16.gmra.mrb[0].mxu0 %v2868
    %v3029 = vpop.f32.mrb[0].mxu0
    %v3030 = vadd.f32 0.0, %v3029
    %v3031 = vpop.f32.mrb[0].mxu0
    %v3032 = vadd.f32 0.0, %v3031
    %v3033 = vpop.f32.mrb[0].mxu0
    %v3034 = vpop.f32.mrb[0].mxu0
    %3035 = vdwg.mxu0
    %v3036 = vadd.f32 %v2907, %v2989
    %v3037 = vadd.f32 %v2909, %v2991
    %v3038 = vadd.f32 %v2948, %v3030
    %v3039 = vadd.f32 %v2950, %v3032
    %v3040 = vxor.u32 %v3036, 2147483648
    %v3041 = vmul.f32 %v3040, 1.442695
    %v3042 = vpow.pop %v3041
    %v3043 = vadd.f32 %v3042, 1.0
    %v3044 = vrcp.pop %v3043
    %v3045 = vmul.f32 1.0, %v3044
    %v3046 = vxor.u32 %v3037, 2147483648
    %v3047 = vmul.f32 %v3046, 1.442695
    %v3048 = vpow.pop %v3047
    %v3049 = vadd.f32 %v3048, 1.0
    %v3050 = vrcp.pop %v3049
    %v3051 = vmul.f32 1.0, %v3050
    %v3052 = vtanh.pop %v3038
    %v3053 = vxor.u32 %v3039, 2147483648
    %v3054 = vmul.f32 %v3053, 1.442695
    %v3055 = vpow.pop %v3054
    %v3056 = vadd.f32 %v3055, 1.0
    %v3057 = vrcp.pop %v3056
    %v3058 = vmul.f32 1.0, %v3057
    %v3059 = vmul.f32 %v3051, %v2865
    %v3060 = vmul.f32 %v3045, %v3052
    %v3061 = vadd.f32 %v3059, %v3060
    %v3062 = vtanh.pop %v3061
    %v3063 = vmul.f32 %v3058, %v3062
    %v3064 = vpack.c.bf16 %v3063, %v3063
    %s3065 = scalar_lea.vmem [#allocation3], 8
    %3066 = vst [vmem:[%s3065] sm:$0xf] %v3064
    %v3067 = vld [vmem:[%s1281] sm:$0xf]
    %3068 = vmatprep.subr.bf16.mxu0 %v2258
    %3069 = vmatpush1.bf16.msra.mxu0 %v2257
    %3070 = vmatprep.subr.bf16.mxu0 %v2262
    %3071 = vmatpush1.bf16.msra.mxu0 %v2261
    %3072 = vmatprep.subr.bf16.mxu0 %v2266
    %3073 = vmatpush1.bf16.msra.mxu0 %v2265
    %3074 = vmatprep.subr.bf16.mxu0 %v2270
    %3075 = vmatpush1.bf16.msra.mxu0 %v2269
    %3076 = vmatprep.subr.bf16.mxu0 %v2274
    %3077 = vmatpush1.bf16.msra.mxu0 %v2273
    %3078 = vmatprep.subr.bf16.mxu0 %v2278
    %3079 = vmatpush1.bf16.msra.mxu0 %v2277
    %3080 = vmatprep.subr.bf16.mxu0 %v2282
    %3081 = vmatpush1.bf16.msra.mxu0 %v2281
    %3082 = vmatprep.subr.bf16.mxu0 %v2286
    %3083 = vmatpush1.bf16.msra.mxu0 %v2285
    %3084 = vmatprep.subr.bf16.mxu0 0
    %3085 = vmatpush1.bf16.msra.mxu0 0
    %3086 = vmatprep.subr.bf16.mxu0 0
    %3087 = vmatpush1.bf16.msra.mxu0 0
    %3088 = vmatprep.subr.bf16.mxu0 0
    %3089 = vmatpush1.bf16.msra.mxu0 0
    %3090 = vmatprep.subr.bf16.mxu0 0
    %3091 = vmatpush1.bf16.msra.mxu0 0
    %3092 = vmatprep.subr.bf16.mxu0 0
    %3093 = vmatpush1.bf16.msra.mxu0 0
    %3094 = vmatprep.subr.bf16.mxu0 0
    %3095 = vmatpush1.bf16.msra.mxu0 0
    %3096 = vmatprep.subr.bf16.mxu0 0
    %3097 = vmatpush1.bf16.msra.mxu0 0
    %3098 = vmatprep.subr.bf16.mxu0 0
    %3099 = vmatpush1.bf16.msra.mxu0 0
    %3100 = vmatprep.mubr.bf16.mxu0 0
    %3101 = vmatmul.mubr.bf16.gmra.mrb[0].mxu0 %v3067
    %v3102 = vpop.f32.mrb[0].mxu0
    %v3103 = vadd.f32 %v2144, %v3102
    %v3104 = vpop.f32.mrb[0].mxu0
    %v3105 = vadd.f32 %v2148, %v3104
    %v3106 = vpop.f32.mrb[0].mxu0
    %v3107 = vpop.f32.mrb[0].mxu0
    %3108 = vdwg.mxu0
    %3109 = vmatprep.subr.bf16.mxu0 %v2260
    %3110 = vmatpush1.bf16.msra.mxu0 %v2259
    %3111 = vmatprep.subr.bf16.mxu0 %v2264
    %3112 = vmatpush1.bf16.msra.mxu0 %v2263
    %3113 = vmatprep.subr.bf16.mxu0 %v2268
    %3114 = vmatpush1.bf16.msra.mxu0 %v2267
    %3115 = vmatprep.subr.bf16.mxu0 %v2272
    %3116 = vmatpush1.bf16.msra.mxu0 %v2271
    %3117 = vmatprep.subr.bf16.mxu0 %v2276
    %3118 = vmatpush1.bf16.msra.mxu0 %v2275
    %3119 = vmatprep.subr.bf16.mxu0 %v2280
    %3120 = vmatpush1.bf16.msra.mxu0 %v2279
    %3121 = vmatprep.subr.bf16.mxu0 %v2284
    %3122 = vmatpush1.bf16.msra.mxu0 %v2283
    %3123 = vmatprep.subr.bf16.mxu0 %v2288
    %3124 = vmatpush1.bf16.msra.mxu0 %v2287
    %3125 = vmatprep.subr.bf16.mxu0 0
    %3126 = vmatpush1.bf16.msra.mxu0 0
    %3127 = vmatprep.subr.bf16.mxu0 0
    %3128 = vmatpush1.bf16.msra.mxu0 0
    %3129 = vmatprep.subr.bf16.mxu0 0
    %3130 = vmatpush1.bf16.msra.mxu0 0
    %3131 = vmatprep.subr.bf16.mxu0 0
    %3132 = vmatpush1.bf16.msra.mxu0 0
    %3133 = vmatprep.subr.bf16.mxu0 0
    %3134 = vmatpush1.bf16.msra.mxu0 0
    %3135 = vmatprep.subr.bf16.mxu0 0
    %3136 = vmatpush1.bf16.msra.mxu0 0
    %3137 = vmatprep.subr.bf16.mxu0 0
    %3138 = vmatpush1.bf16.msra.mxu0 0
    %3139 = vmatprep.subr.bf16.mxu0 0
    %3140 = vmatpush1.bf16.msra.mxu0 0
    %3141 = vmatprep.mubr.bf16.mxu0 0
    %3142 = vmatmul.mubr.bf16.gmra.mrb[0].mxu0 %v3067
    %v3143 = vpop.f32.mrb[0].mxu0
    %v3144 = vadd.f32 %v2152, %v3143
    %v3145 = vpop.f32.mrb[0].mxu0
    %v3146 = vadd.f32 %v2156, %v3145
    %v3147 = vpop.f32.mrb[0].mxu0
    %v3148 = vpop.f32.mrb[0].mxu0
    %3149 = vdwg.mxu0
    %3150 = vmatprep.subr.bf16.mxu0 %v2500
    %3151 = vmatpush1.bf16.msra.mxu0 %v2499
    %3152 = vmatprep.subr.bf16.mxu0 %v2504
    %3153 = vmatpush1.bf16.msra.mxu0 %v2503
    %3154 = vmatprep.subr.bf16.mxu0 %v2508
    %3155 = vmatpush1.bf16.msra.mxu0 %v2507
    %3156 = vmatprep.subr.bf16.mxu0 %v2512
    %3157 = vmatpush1.bf16.msra.mxu0 %v2511
    %3158 = vmatprep.subr.bf16.mxu0 %v2516
    %3159 = vmatpush1.bf16.msra.mxu0 %v2515
    %3160 = vmatprep.subr.bf16.mxu0 %v2520
    %3161 = vmatpush1.bf16.msra.mxu0 %v2519
    %3162 = vmatprep.subr.bf16.mxu0 %v2524
    %3163 = vmatpush1.bf16.msra.mxu0 %v2523
    %3164 = vmatprep.subr.bf16.mxu0 %v2528
    %3165 = vmatpush1.bf16.msra.mxu0 %v2527
    %3166 = vmatprep.subr.bf16.mxu0 0
    %3167 = vmatpush1.bf16.msra.mxu0 0
    %3168 = vmatprep.subr.bf16.mxu0 0
    %3169 = vmatpush1.bf16.msra.mxu0 0
    %3170 = vmatprep.subr.bf16.mxu0 0
    %3171 = vmatpush1.bf16.msra.mxu0 0
    %3172 = vmatprep.subr.bf16.mxu0 0
    %3173 = vmatpush1.bf16.msra.mxu0 0
    %3174 = vmatprep.subr.bf16.mxu0 0
    %3175 = vmatpush1.bf16.msra.mxu0 0
    %3176 = vmatprep.subr.bf16.mxu0 0
    %3177 = vmatpush1.bf16.msra.mxu0 0
    %3178 = vmatprep.subr.bf16.mxu0 0
    %3179 = vmatpush1.bf16.msra.mxu0 0
    %3180 = vmatprep.subr.bf16.mxu0 0
    %3181 = vmatpush1.bf16.msra.mxu0 0
    %3182 = vmatprep.mubr.bf16.mxu0 0
    %3183 = vmatmul.mubr.bf16.gmra.mrb[0].mxu0 %v3064
    %v3184 = vpop.f32.mrb[0].mxu0
    %v3185 = vadd.f32 0.0, %v3184
    %v3186 = vpop.f32.mrb[0].mxu0
    %v3187 = vadd.f32 0.0, %v3186
    %v3188 = vpop.f32.mrb[0].mxu0
    %v3189 = vpop.f32.mrb[0].mxu0
    %3190 = vdwg.mxu0
    %3191 = vmatprep.subr.bf16.mxu0 %v2502
    %3192 = vmatpush1.bf16.msra.mxu0 %v2501
    %3193 = vmatprep.subr.bf16.mxu0 %v2506
    %3194 = vmatpush1.bf16.msra.mxu0 %v2505
    %3195 = vmatprep.subr.bf16.mxu0 %v2510
    %3196 = vmatpush1.bf16.msra.mxu0 %v2509
    %3197 = vmatprep.subr.bf16.mxu0 %v2514
    %3198 = vmatpush1.bf16.msra.mxu0 %v2513
    %3199 = vmatprep.subr.bf16.mxu0 %v2518
    %3200 = vmatpush1.bf16.msra.mxu0 %v2517
    %3201 = vmatprep.subr.bf16.mxu0 %v2522
    %3202 = vmatpush1.bf16.msra.mxu0 %v2521
    %3203 = vmatprep.subr.bf16.mxu0 %v2526
    %3204 = vmatpush1.bf16.msra.mxu0 %v2525
    %3205 = vmatprep.subr.bf16.mxu0 %v2530
    %3206 = vmatpush1.bf16.msra.mxu0 %v2529
    %3207 = vmatprep.subr.bf16.mxu0 0
    %3208 = vmatpush1.bf16.msra.mxu0 0
    %3209 = vmatprep.subr.bf16.mxu0 0
    %3210 = vmatpush1.bf16.msra.mxu0 0
    %3211 = vmatprep.subr.bf16.mxu0 0
    %3212 = vmatpush1.bf16.msra.mxu0 0
    %3213 = vmatprep.subr.bf16.mxu0 0
    %3214 = vmatpush1.bf16.msra.mxu0 0
    %3215 = vmatprep.subr.bf16.mxu0 0
    %3216 = vmatpush1.bf16.msra.mxu0 0
    %3217 = vmatprep.subr.bf16.mxu0 0
    %3218 = vmatpush1.bf16.msra.mxu0 0
    %3219 = vmatprep.subr.bf16.mxu0 0
    %3220 = vmatpush1.bf16.msra.mxu0 0
    %3221 = vmatprep.subr.bf16.mxu0 0
    %3222 = vmatpush1.bf16.msra.mxu0 0
    %3223 = vmatprep.mubr.bf16.mxu0 0
    %3224 = vmatmul.mubr.bf16.gmra.mrb[0].mxu0 %v3064
    %v3225 = vpop.f32.mrb[0].mxu0
    %v3226 = vadd.f32 0.0, %v3225
    %v3227 = vpop.f32.mrb[0].mxu0
    %v3228 = vadd.f32 0.0, %v3227
    %v3229 = vpop.f32.mrb[0].mxu0
    %v3230 = vpop.f32.mrb[0].mxu0
    %3231 = vdwg.mxu0
    %v3232 = vadd.f32 %v3103, %v3185
    %v3233 = vadd.f32 %v3105, %v3187
    %v3234 = vadd.f32 %v3144, %v3226
    %v3235 = vadd.f32 %v3146, %v3228
    %v3236 = vxor.u32 %v3232, 2147483648
    %v3237 = vmul.f32 %v3236, 1.442695
    %v3238 = vpow.pop %v3237
    %v3239 = vadd.f32 %v3238, 1.0
    %v3240 = vrcp.pop %v3239
    %v3241 = vmul.f32 1.0, %v3240
    %v3242 = vxor.u32 %v3233, 2147483648
    %v3243 = vmul.f32 %v3242, 1.442695
    %v3244 = vpow.pop %v3243
    %v3245 = vadd.f32 %v3244, 1.0
    %v3246 = vrcp.pop %v3245
    %v3247 = vmul.f32 1.0, %v3246
    %v3248 = vtanh.pop %v3234
    %v3249 = vxor.u32 %v3235, 2147483648
    %v3250 = vmul.f32 %v3249, 1.442695
    %v3251 = vpow.pop %v3250
    %v3252 = vadd.f32 %v3251, 1.0
    %v3253 = vrcp.pop %v3252
    %v3254 = vmul.f32 1.0, %v3253
    %v3255 = vmul.f32 %v3247, %v3061
    %v3256 = vmul.f32 %v3241, %v3248
    %v3257 = vadd.f32 %v3255, %v3256
    %v3258 = vtanh.pop %v3257
    %v3259 = vmul.f32 %v3254, %v3258
    %v3260 = vpack.c.bf16 %v3259, %v3259
    %s3261 = scalar_lea.vmem [#allocation3], 12
    %3262 = vst [vmem:[%s3261] sm:$0xf] %v3260
    %v3263 = vld [vmem:[%s1478] sm:$0xf]
    %3264 = vmatprep.subr.bf16.mxu0 %v2258
    %3265 = vmatpush1.bf16.msra.mxu0 %v2257
    %3266 = vmatprep.subr.bf16.mxu0 %v2262
    %3267 = vmatpush1.bf16.msra.mxu0 %v2261
    %3268 = vmatprep.subr.bf16.mxu0 %v2266
    %3269 = vmatpush1.bf16.msra.mxu0 %v2265
    %3270 = vmatprep.subr.bf16.mxu0 %v2270
    %3271 = vmatpush1.bf16.msra.mxu0 %v2269
    %3272 = vmatprep.subr.bf16.mxu0 %v2274
    %3273 = vmatpush1.bf16.msra.mxu0 %v2273
    %3274 = vmatprep.subr.bf16.mxu0 %v2278
    %3275 = vmatpush1.bf16.msra.mxu0 %v2277
    %3276 = vmatprep.subr.bf16.mxu0 %v2282
    %3277 = vmatpush1.bf16.msra.mxu0 %v2281
    %3278 = vmatprep.subr.bf16.mxu0 %v2286
    %3279 = vmatpush1.bf16.msra.mxu0 %v2285
    %3280 = vmatprep.subr.bf16.mxu0 0
    %3281 = vmatpush1.bf16.msra.mxu0 0
    %3282 = vmatprep.subr.bf16.mxu0 0
    %3283 = vmatpush1.bf16.msra.mxu0 0
    %3284 = vmatprep.subr.bf16.mxu0 0
    %3285 = vmatpush1.bf16.msra.mxu0 0
    %3286 = vmatprep.subr.bf16.mxu0 0
    %3287 = vmatpush1.bf16.msra.mxu0 0
    %3288 = vmatprep.subr.bf16.mxu0 0
    %3289 = vmatpush1.bf16.msra.mxu0 0
    %3290 = vmatprep.subr.bf16.mxu0 0
    %3291 = vmatpush1.bf16.msra.mxu0 0
    %3292 = vmatprep.subr.bf16.mxu0 0
    %3293 = vmatpush1.bf16.msra.mxu0 0
    %3294 = vmatprep.subr.bf16.mxu0 0
    %3295 = vmatpush1.bf16.msra.mxu0 0
    %3296 = vmatprep.mubr.bf16.mxu0 0
    %3297 = vmatmul.mubr.bf16.gmra.mrb[0].mxu0 %v3263
    %v3298 = vpop.f32.mrb[0].mxu0
    %v3299 = vadd.f32 %v2144, %v3298
    %v3300 = vpop.f32.mrb[0].mxu0
    %v3301 = vadd.f32 %v2148, %v3300
    %v3302 = vpop.f32.mrb[0].mxu0
    %v3303 = vpop.f32.mrb[0].mxu0
    %3304 = vdwg.mxu0
    %3305 = vmatprep.subr.bf16.mxu0 %v2260
    %3306 = vmatpush1.bf16.msra.mxu0 %v2259
    %3307 = vmatprep.subr.bf16.mxu0 %v2264
    %3308 = vmatpush1.bf16.msra.mxu0 %v2263
    %3309 = vmatprep.subr.bf16.mxu0 %v2268
    %3310 = vmatpush1.bf16.msra.mxu0 %v2267
    %3311 = vmatprep.subr.bf16.mxu0 %v2272
    %3312 = vmatpush1.bf16.msra.mxu0 %v2271
    %3313 = vmatprep.subr.bf16.mxu0 %v2276
    %3314 = vmatpush1.bf16.msra.mxu0 %v2275
    %3315 = vmatprep.subr.bf16.mxu0 %v2280
    %3316 = vmatpush1.bf16.msra.mxu0 %v2279
    %3317 = vmatprep.subr.bf16.mxu0 %v2284
    %3318 = vmatpush1.bf16.msra.mxu0 %v2283
    %3319 = vmatprep.subr.bf16.mxu0 %v2288
    %3320 = vmatpush1.bf16.msra.mxu0 %v2287
    %3321 = vmatprep.subr.bf16.mxu0 0
    %3322 = vmatpush1.bf16.msra.mxu0 0
    %3323 = vmatprep.subr.bf16.mxu0 0
    %3324 = vmatpush1.bf16.msra.mxu0 0
    %3325 = vmatprep.subr.bf16.mxu0 0
    %3326 = vmatpush1.bf16.msra.mxu0 0
    %3327 = vmatprep.subr.bf16.mxu0 0
    %3328 = vmatpush1.bf16.msra.mxu0 0
    %3329 = vmatprep.subr.bf16.mxu0 0
    %3330 = vmatpush1.bf16.msra.mxu0 0
    %3331 = vmatprep.subr.bf16.mxu0 0
    %3332 = vmatpush1.bf16.msra.mxu0 0
    %3333 = vmatprep.subr.bf16.mxu0 0
    %3334 = vmatpush1.bf16.msra.mxu0 0
    %3335 = vmatprep.subr.bf16.mxu0 0
    %3336 = vmatpush1.bf16.msra.mxu0 0
    %3337 = vmatprep.mubr.bf16.mxu0 0
    %3338 = vmatmul.mubr.bf16.gmra.mrb[0].mxu0 %v3263
    %v3339 = vpop.f32.mrb[0].mxu0
    %v3340 = vadd.f32 %v2152, %v3339
    %v3341 = vpop.f32.mrb[0].mxu0
    %v3342 = vadd.f32 %v2156, %v3341
    %v3343 = vpop.f32.mrb[0].mxu0
    %v3344 = vpop.f32.mrb[0].mxu0
    %3345 = vdwg.mxu0
    %3346 = vmatprep.subr.bf16.mxu0 %v2500
    %3347 = vmatpush1.bf16.msra.mxu0 %v2499
    %3348 = vmatprep.subr.bf16.mxu0 %v2504
    %3349 = vmatpush1.bf16.msra.mxu0 %v2503
    %3350 = vmatprep.subr.bf16.mxu0 %v2508
    %3351 = vmatpush1.bf16.msra.mxu0 %v2507
    %3352 = vmatprep.subr.bf16.mxu0 %v2512
    %3353 = vmatpush1.bf16.msra.mxu0 %v2511
    %3354 = vmatprep.subr.bf16.mxu0 %v2516
    %3355 = vmatpush1.bf16.msra.mxu0 %v2515
    %3356 = vmatprep.subr.bf16.mxu0 %v2520
    %3357 = vmatpush1.bf16.msra.mxu0 %v2519
    %3358 = vmatprep.subr.bf16.mxu0 %v2524
    %3359 = vmatpush1.bf16.msra.mxu0 %v2523
    %3360 = vmatprep.subr.bf16.mxu0 %v2528
    %3361 = vmatpush1.bf16.msra.mxu0 %v2527
    %3362 = vmatprep.subr.bf16.mxu0 0
    %3363 = vmatpush1.bf16.msra.mxu0 0
    %3364 = vmatprep.subr.bf16.mxu0 0
    %3365 = vmatpush1.bf16.msra.mxu0 0
    %3366 = vmatprep.subr.bf16.mxu0 0
    %3367 = vmatpush1.bf16.msra.mxu0 0
    %3368 = vmatprep.subr.bf16.mxu0 0
    %3369 = vmatpush1.bf16.msra.mxu0 0
    %3370 = vmatprep.subr.bf16.mxu0 0
    %3371 = vmatpush1.bf16.msra.mxu0 0
    %3372 = vmatprep.subr.bf16.mxu0 0
    %3373 = vmatpush1.bf16.msra.mxu0 0
    %3374 = vmatprep.subr.bf16.mxu0 0
    %3375 = vmatpush1.bf16.msra.mxu0 0
    %3376 = vmatprep.subr.bf16.mxu0 0
    %3377 = vmatpush1.bf16.msra.mxu0 0
    %3378 = vmatprep.mubr.bf16.mxu0 0
    %3379 = vmatmul.mubr.bf16.gmra.mrb[0].mxu0 %v3260
    %v3380 = vpop.f32.mrb[0].mxu0
    %v3381 = vadd.f32 0.0, %v3380
    %v3382 = vpop.f32.mrb[0].mxu0
    %v3383 = vadd.f32 0.0, %v3382
    %v3384 = vpop.f32.mrb[0].mxu0
    %v3385 = vpop.f32.mrb[0].mxu0
    %3386 = vdwg.mxu0
    %3387 = vmatprep.subr.bf16.mxu0 %v2502
    %3388 = vmatpush1.bf16.msra.mxu0 %v2501
    %3389 = vmatprep.subr.bf16.mxu0 %v2506
    %3390 = vmatpush1.bf16.msra.mxu0 %v2505
    %3391 = vmatprep.subr.bf16.mxu0 %v2510
    %3392 = vmatpush1.bf16.msra.mxu0 %v2509
    %3393 = vmatprep.subr.bf16.mxu0 %v2514
    %3394 = vmatpush1.bf16.msra.mxu0 %v2513
    %3395 = vmatprep.subr.bf16.mxu0 %v2518
    %3396 = vmatpush1.bf16.msra.mxu0 %v2517
    %3397 = vmatprep.subr.bf16.mxu0 %v2522
    %3398 = vmatpush1.bf16.msra.mxu0 %v2521
    %3399 = vmatprep.subr.bf16.mxu0 %v2526
    %3400 = vmatpush1.bf16.msra.mxu0 %v2525
    %3401 = vmatprep.subr.bf16.mxu0 %v2530
    %3402 = vmatpush1.bf16.msra.mxu0 %v2529
    %3403 = vmatprep.subr.bf16.mxu0 0
    %3404 = vmatpush1.bf16.msra.mxu0 0
    %3405 = vmatprep.subr.bf16.mxu0 0
    %3406 = vmatpush1.bf16.msra.mxu0 0
    %3407 = vmatprep.subr.bf16.mxu0 0
    %3408 = vmatpush1.bf16.msra.mxu0 0
    %3409 = vmatprep.subr.bf16.mxu0 0
    %3410 = vmatpush1.bf16.msra.mxu0 0
    %3411 = vmatprep.subr.bf16.mxu0 0
    %3412 = vmatpush1.bf16.msra.mxu0 0
    %3413 = vmatprep.subr.bf16.mxu0 0
    %3414 = vmatpush1.bf16.msra.mxu0 0
    %3415 = vmatprep.subr.bf16.mxu0 0
    %3416 = vmatpush1.bf16.msra.mxu0 0
    %3417 = vmatprep.subr.bf16.mxu0 0
    %3418 = vmatpush1.bf16.msra.mxu0 0
    %3419 = vmatprep.mubr.bf16.mxu0 0
    %3420 = vmatmul.mubr.bf16.gmra.mrb[0].mxu0 %v3260
    %v3421 = vpop.f32.mrb[0].mxu0
    %v3422 = vadd.f32 0.0, %v3421
    %v3423 = vpop.f32.mrb[0].mxu0
    %v3424 = vadd.f32 0.0, %v3423
    %v3425 = vpop.f32.mrb[0].mxu0
    %v3426 = vpop.f32.mrb[0].mxu0
    %3427 = vdwg.mxu0
    %v3428 = vadd.f32 %v3299, %v3381
    %v3429 = vadd.f32 %v3301, %v3383
    %v3430 = vadd.f32 %v3340, %v3422
    %v3431 = vadd.f32 %v3342, %v3424
    %v3432 = vxor.u32 %v3428, 2147483648
    %v3433 = vmul.f32 %v3432, 1.442695
    %v3434 = vpow.pop %v3433
    %v3435 = vadd.f32 %v3434, 1.0
    %v3436 = vrcp.pop %v3435
    %v3437 = vmul.f32 1.0, %v3436
    %v3438 = vxor.u32 %v3429, 2147483648
    %v3439 = vmul.f32 %v3438, 1.442695
    %v3440 = vpow.pop %v3439
    %v3441 = vadd.f32 %v3440, 1.0
    %v3442 = vrcp.pop %v3441
    %v3443 = vmul.f32 1.0, %v3442
    %v3444 = vtanh.pop %v3430
    %v3445 = vxor.u32 %v3431, 2147483648
    %v3446 = vmul.f32 %v3445, 1.442695
    %v3447 = vpow.pop %v3446
    %v3448 = vadd.f32 %v3447, 1.0
    %v3449 = vrcp.pop %v3448
    %v3450 = vmul.f32 1.0, %v3449
    %v3451 = vmul.f32 %v3443, %v3257
    %v3452 = vmul.f32 %v3437, %v3444
    %v3453 = vadd.f32 %v3451, %v3452
    %v3454 = vtanh.pop %v3453
    %v3455 = vmul.f32 %v3450, %v3454
    %v3456 = vpack.c.bf16 %v3455, %v3455
    %s3457 = scalar_lea.vmem [#allocation3], 16
    %3458 = vst [vmem:[%s3457] sm:$0xf] %v3456
    %v3459 = vld [vmem:[%s1675] sm:$0xf]
    %3460 = vmatprep.subr.bf16.mxu0 %v2258
    %3461 = vmatpush1.bf16.msra.mxu0 %v2257
    %3462 = vmatprep.subr.bf16.mxu0 %v2262
    %3463 = vmatpush1.bf16.msra.mxu0 %v2261
    %3464 = vmatprep.subr.bf16.mxu0 %v2266
    %3465 = vmatpush1.bf16.msra.mxu0 %v2265
    %3466 = vmatprep.subr.bf16.mxu0 %v2270
    %3467 = vmatpush1.bf16.msra.mxu0 %v2269
    %3468 = vmatprep.subr.bf16.mxu0 %v2274
    %3469 = vmatpush1.bf16.msra.mxu0 %v2273
    %3470 = vmatprep.subr.bf16.mxu0 %v2278
    %3471 = vmatpush1.bf16.msra.mxu0 %v2277
    %3472 = vmatprep.subr.bf16.mxu0 %v2282
    %3473 = vmatpush1.bf16.msra.mxu0 %v2281
    %3474 = vmatprep.subr.bf16.mxu0 %v2286
    %3475 = vmatpush1.bf16.msra.mxu0 %v2285
    %3476 = vmatprep.subr.bf16.mxu0 0
    %3477 = vmatpush1.bf16.msra.mxu0 0
    %3478 = vmatprep.subr.bf16.mxu0 0
    %3479 = vmatpush1.bf16.msra.mxu0 0
    %3480 = vmatprep.subr.bf16.mxu0 0
    %3481 = vmatpush1.bf16.msra.mxu0 0
    %3482 = vmatprep.subr.bf16.mxu0 0
    %3483 = vmatpush1.bf16.msra.mxu0 0
    %3484 = vmatprep.subr.bf16.mxu0 0
    %3485 = vmatpush1.bf16.msra.mxu0 0
    %3486 = vmatprep.subr.bf16.mxu0 0
    %3487 = vmatpush1.bf16.msra.mxu0 0
    %3488 = vmatprep.subr.bf16.mxu0 0
    %3489 = vmatpush1.bf16.msra.mxu0 0
    %3490 = vmatprep.subr.bf16.mxu0 0
    %3491 = vmatpush1.bf16.msra.mxu0 0
    %3492 = vmatprep.mubr.bf16.mxu0 0
    %3493 = vmatmul.mubr.bf16.gmra.mrb[0].mxu0 %v3459
    %v3494 = vpop.f32.mrb[0].mxu0
    %v3495 = vadd.f32 %v2144, %v3494
    %v3496 = vpop.f32.mrb[0].mxu0
    %v3497 = vadd.f32 %v2148, %v3496
    %v3498 = vpop.f32.mrb[0].mxu0
    %v3499 = vpop.f32.mrb[0].mxu0
    %3500 = vdwg.mxu0
    %3501 = vmatprep.subr.bf16.mxu0 %v2260
    %3502 = vmatpush1.bf16.msra.mxu0 %v2259
    %3503 = vmatprep.subr.bf16.mxu0 %v2264
    %3504 = vmatpush1.bf16.msra.mxu0 %v2263
    %3505 = vmatprep.subr.bf16.mxu0 %v2268
    %3506 = vmatpush1.bf16.msra.mxu0 %v2267
    %3507 = vmatprep.subr.bf16.mxu0 %v2272
    %3508 = vmatpush1.bf16.msra.mxu0 %v2271
    %3509 = vmatprep.subr.bf16.mxu0 %v2276
    %3510 = vmatpush1.bf16.msra.mxu0 %v2275
    %3511 = vmatprep.subr.bf16.mxu0 %v2280
    %3512 = vmatpush1.bf16.msra.mxu0 %v2279
    %3513 = vmatprep.subr.bf16.mxu0 %v2284
    %3514 = vmatpush1.bf16.msra.mxu0 %v2283
    %3515 = vmatprep.subr.bf16.mxu0 %v2288
    %3516 = vmatpush1.bf16.msra.mxu0 %v2287
    %3517 = vmatprep.subr.bf16.mxu0 0
    %3518 = vmatpush1.bf16.msra.mxu0 0
    %3519 = vmatprep.subr.bf16.mxu0 0
    %3520 = vmatpush1.bf16.msra.mxu0 0
    %3521 = vmatprep.subr.bf16.mxu0 0
    %3522 = vmatpush1.bf16.msra.mxu0 0
    %3523 = vmatprep.subr.bf16.mxu0 0
    %3524 = vmatpush1.bf16.msra.mxu0 0
    %3525 = vmatprep.subr.bf16.mxu0 0
    %3526 = vmatpush1.bf16.msra.mxu0 0
    %3527 = vmatprep.subr.bf16.mxu0 0
    %3528 = vmatpush1.bf16.msra.mxu0 0
    %3529 = vmatprep.subr.bf16.mxu0 0
    %3530 = vmatpush1.bf16.msra.mxu0 0
    %3531 = vmatprep.subr.bf16.mxu0 0
    %3532 = vmatpush1.bf16.msra.mxu0 0
    %3533 = vmatprep.mubr.bf16.mxu0 0
    %3534 = vmatmul.mubr.bf16.gmra.mrb[0].mxu0 %v3459
    %v3535 = vpop.f32.mrb[0].mxu0
    %v3536 = vadd.f32 %v2152, %v3535
    %v3537 = vpop.f32.mrb[0].mxu0
    %v3538 = vadd.f32 %v2156, %v3537
    %v3539 = vpop.f32.mrb[0].mxu0
    %v3540 = vpop.f32.mrb[0].mxu0
    %3541 = vdwg.mxu0
    %3542 = vmatprep.subr.bf16.mxu0 %v2500
    %3543 = vmatpush1.bf16.msra.mxu0 %v2499
    %3544 = vmatprep.subr.bf16.mxu0 %v2504
    %3545 = vmatpush1.bf16.msra.mxu0 %v2503
    %3546 = vmatprep.subr.bf16.mxu0 %v2508
    %3547 = vmatpush1.bf16.msra.mxu0 %v2507
    %3548 = vmatprep.subr.bf16.mxu0 %v2512
    %3549 = vmatpush1.bf16.msra.mxu0 %v2511
    %3550 = vmatprep.subr.bf16.mxu0 %v2516
    %3551 = vmatpush1.bf16.msra.mxu0 %v2515
    %3552 = vmatprep.subr.bf16.mxu0 %v2520
    %3553 = vmatpush1.bf16.msra.mxu0 %v2519
    %3554 = vmatprep.subr.bf16.mxu0 %v2524
    %3555 = vmatpush1.bf16.msra.mxu0 %v2523
    %3556 = vmatprep.subr.bf16.mxu0 %v2528
    %3557 = vmatpush1.bf16.msra.mxu0 %v2527
    %3558 = vmatprep.subr.bf16.mxu0 0
    %3559 = vmatpush1.bf16.msra.mxu0 0
    %3560 = vmatprep.subr.bf16.mxu0 0
    %3561 = vmatpush1.bf16.msra.mxu0 0
    %3562 = vmatprep.subr.bf16.mxu0 0
    %3563 = vmatpush1.bf16.msra.mxu0 0
    %3564 = vmatprep.subr.bf16.mxu0 0
    %3565 = vmatpush1.bf16.msra.mxu0 0
    %3566 = vmatprep.subr.bf16.mxu0 0
    %3567 = vmatpush1.bf16.msra.mxu0 0
    %3568 = vmatprep.subr.bf16.mxu0 0
    %3569 = vmatpush1.bf16.msra.mxu0 0
    %3570 = vmatprep.subr.bf16.mxu0 0
    %3571 = vmatpush1.bf16.msra.mxu0 0
    %3572 = vmatprep.subr.bf16.mxu0 0
    %3573 = vmatpush1.bf16.msra.mxu0 0
    %3574 = vmatprep.mubr.bf16.mxu0 0
    %3575 = vmatmul.mubr.bf16.gmra.mrb[0].mxu0 %v3456
    %v3576 = vpop.f32.mrb[0].mxu0
    %v3577 = vadd.f32 0.0, %v3576
    %v3578 = vpop.f32.mrb[0].mxu0
    %v3579 = vadd.f32 0.0, %v3578
    %v3580 = vpop.f32.mrb[0].mxu0
    %v3581 = vpop.f32.mrb[0].mxu0
    %3582 = vdwg.mxu0
    %3583 = vmatprep.subr.bf16.mxu0 %v2502
    %3584 = vmatpush1.bf16.msra.mxu0 %v2501
    %3585 = vmatprep.subr.bf16.mxu0 %v2506
    %3586 = vmatpush1.bf16.msra.mxu0 %v2505
    %3587 = vmatprep.subr.bf16.mxu0 %v2510
    %3588 = vmatpush1.bf16.msra.mxu0 %v2509
    %3589 = vmatprep.subr.bf16.mxu0 %v2514
    %3590 = vmatpush1.bf16.msra.mxu0 %v2513
    %3591 = vmatprep.subr.bf16.mxu0 %v2518
    %3592 = vmatpush1.bf16.msra.mxu0 %v2517
    %3593 = vmatprep.subr.bf16.mxu0 %v2522
    %3594 = vmatpush1.bf16.msra.mxu0 %v2521
    %3595 = vmatprep.subr.bf16.mxu0 %v2526
    %3596 = vmatpush1.bf16.msra.mxu0 %v2525
    %3597 = vmatprep.subr.bf16.mxu0 %v2530
    %3598 = vmatpush1.bf16.msra.mxu0 %v2529
    %3599 = vmatprep.subr.bf16.mxu0 0
    %3600 = vmatpush1.bf16.msra.mxu0 0
    %3601 = vmatprep.subr.bf16.mxu0 0
    %3602 = vmatpush1.bf16.msra.mxu0 0
    %3603 = vmatprep.subr.bf16.mxu0 0
    %3604 = vmatpush1.bf16.msra.mxu0 0
    %3605 = vmatprep.subr.bf16.mxu0 0
    %3606 = vmatpush1.bf16.msra.mxu0 0
    %3607 = vmatprep.subr.bf16.mxu0 0
    %3608 = vmatpush1.bf16.msra.mxu0 0
    %3609 = vmatprep.subr.bf16.mxu0 0
    %3610 = vmatpush1.bf16.msra.mxu0 0
    %3611 = vmatprep.subr.bf16.mxu0 0
    %3612 = vmatpush1.bf16.msra.mxu0 0
    %3613 = vmatprep.subr.bf16.mxu0 0
    %3614 = vmatpush1.bf16.msra.mxu0 0
    %3615 = vmatprep.mubr.bf16.mxu0 0
    %3616 = vmatmul.mubr.bf16.gmra.mrb[0].mxu0 %v3456
    %v3617 = vpop.f32.mrb[0].mxu0
    %v3618 = vadd.f32 0.0, %v3617
    %v3619 = vpop.f32.mrb[0].mxu0
    %v3620 = vadd.f32 0.0, %v3619
    %v3621 = vpop.f32.mrb[0].mxu0
    %v3622 = vpop.f32.mrb[0].mxu0
    %3623 = vdwg.mxu0
    %v3624 = vadd.f32 %v3495, %v3577
    %v3625 = vadd.f32 %v3497, %v3579
    %v3626 = vadd.f32 %v3536, %v3618
    %v3627 = vadd.f32 %v3538, %v3620
    %v3628 = vxor.u32 %v3624, 2147483648
    %v3629 = vmul.f32 %v3628, 1.442695
    %v3630 = vpow.pop %v3629
    %v3631 = vadd.f32 %v3630, 1.0
    %v3632 = vrcp.pop %v3631
    %v3633 = vmul.f32 1.0, %v3632
    %v3634 = vxor.u32 %v3625, 2147483648
    %v3635 = vmul.f32 %v3634, 1.442695
    %v3636 = vpow.pop %v3635
    %v3637 = vadd.f32 %v3636, 1.0
    %v3638 = vrcp.pop %v3637
    %v3639 = vmul.f32 1.0, %v3638
    %v3640 = vtanh.pop %v3626
    %v3641 = vxor.u32 %v3627, 2147483648
    %v3642 = vmul.f32 %v3641, 1.442695
    %v3643 = vpow.pop %v3642
    %v3644 = vadd.f32 %v3643, 1.0
    %v3645 = vrcp.pop %v3644
    %v3646 = vmul.f32 1.0, %v3645
    %v3647 = vmul.f32 %v3639, %v3453
    %v3648 = vmul.f32 %v3633, %v3640
    %v3649 = vadd.f32 %v3647, %v3648
    %v3650 = vtanh.pop %v3649
    %v3651 = vmul.f32 %v3646, %v3650
    %v3652 = vpack.c.bf16 %v3651, %v3651
    %s3653 = scalar_lea.vmem [#allocation3], 20
    %3654 = vst [vmem:[%s3653] sm:$0xf] %v3652
    %v3655 = vld [vmem:[%s1872] sm:$0xf]
    %3656 = vmatprep.subr.bf16.mxu0 %v2258
    %3657 = vmatpush1.bf16.msra.mxu0 %v2257
    %3658 = vmatprep.subr.bf16.mxu0 %v2262
    %3659 = vmatpush1.bf16.msra.mxu0 %v2261
    %3660 = vmatprep.subr.bf16.mxu0 %v2266
    %3661 = vmatpush1.bf16.msra.mxu0 %v2265
    %3662 = vmatprep.subr.bf16.mxu0 %v2270
    %3663 = vmatpush1.bf16.msra.mxu0 %v2269
    %3664 = vmatprep.subr.bf16.mxu0 %v2274
    %3665 = vmatpush1.bf16.msra.mxu0 %v2273
    %3666 = vmatprep.subr.bf16.mxu0 %v2278
    %3667 = vmatpush1.bf16.msra.mxu0 %v2277
    %3668 = vmatprep.subr.bf16.mxu0 %v2282
    %3669 = vmatpush1.bf16.msra.mxu0 %v2281
    %3670 = vmatprep.subr.bf16.mxu0 %v2286
    %3671 = vmatpush1.bf16.msra.mxu0 %v2285
    %3672 = vmatprep.subr.bf16.mxu0 0
    %3673 = vmatpush1.bf16.msra.mxu0 0
    %3674 = vmatprep.subr.bf16.mxu0 0
    %3675 = vmatpush1.bf16.msra.mxu0 0
    %3676 = vmatprep.subr.bf16.mxu0 0
    %3677 = vmatpush1.bf16.msra.mxu0 0
    %3678 = vmatprep.subr.bf16.mxu0 0
    %3679 = vmatpush1.bf16.msra.mxu0 0
    %3680 = vmatprep.subr.bf16.mxu0 0
    %3681 = vmatpush1.bf16.msra.mxu0 0
    %3682 = vmatprep.subr.bf16.mxu0 0
    %3683 = vmatpush1.bf16.msra.mxu0 0
    %3684 = vmatprep.subr.bf16.mxu0 0
    %3685 = vmatpush1.bf16.msra.mxu0 0
    %3686 = vmatprep.subr.bf16.mxu0 0
    %3687 = vmatpush1.bf16.msra.mxu0 0
    %3688 = vmatprep.mubr.bf16.mxu0 0
    %3689 = vmatmul.mubr.bf16.gmra.mrb[0].mxu0 %v3655
    %v3690 = vpop.f32.mrb[0].mxu0
    %v3691 = vadd.f32 %v2144, %v3690
    %v3692 = vpop.f32.mrb[0].mxu0
    %v3693 = vadd.f32 %v2148, %v3692
    %v3694 = vpop.f32.mrb[0].mxu0
    %v3695 = vpop.f32.mrb[0].mxu0
    %3696 = vdwg.mxu0
    %3697 = vmatprep.subr.bf16.mxu0 %v2260
    %3698 = vmatpush1.bf16.msra.mxu0 %v2259
    %3699 = vmatprep.subr.bf16.mxu0 %v2264
    %3700 = vmatpush1.bf16.msra.mxu0 %v2263
    %3701 = vmatprep.subr.bf16.mxu0 %v2268
    %3702 = vmatpush1.bf16.msra.mxu0 %v2267
    %3703 = vmatprep.subr.bf16.mxu0 %v2272
    %3704 = vmatpush1.bf16.msra.mxu0 %v2271
    %3705 = vmatprep.subr.bf16.mxu0 %v2276
    %3706 = vmatpush1.bf16.msra.mxu0 %v2275
    %3707 = vmatprep.subr.bf16.mxu0 %v2280
    %3708 = vmatpush1.bf16.msra.mxu0 %v2279
    %3709 = vmatprep.subr.bf16.mxu0 %v2284
    %3710 = vmatpush1.bf16.msra.mxu0 %v2283
    %3711 = vmatprep.subr.bf16.mxu0 %v2288
    %3712 = vmatpush1.bf16.msra.mxu0 %v2287
    %3713 = vmatprep.subr.bf16.mxu0 0
    %3714 = vmatpush1.bf16.msra.mxu0 0
    %3715 = vmatprep.subr.bf16.mxu0 0
    %3716 = vmatpush1.bf16.msra.mxu0 0
    %3717 = vmatprep.subr.bf16.mxu0 0
    %3718 = vmatpush1.bf16.msra.mxu0 0
    %3719 = vmatprep.subr.bf16.mxu0 0
    %3720 = vmatpush1.bf16.msra.mxu0 0
    %3721 = vmatprep.subr.bf16.mxu0 0
    %3722 = vmatpush1.bf16.msra.mxu0 0
    %3723 = vmatprep.subr.bf16.mxu0 0
    %3724 = vmatpush1.bf16.msra.mxu0 0
    %3725 = vmatprep.subr.bf16.mxu0 0
    %3726 = vmatpush1.bf16.msra.mxu0 0
    %3727 = vmatprep.subr.bf16.mxu0 0
    %3728 = vmatpush1.bf16.msra.mxu0 0
    %3729 = vmatprep.mubr.bf16.mxu0 0
    %3730 = vmatmul.mubr.bf16.gmra.mrb[0].mxu0 %v3655
    %v3731 = vpop.f32.mrb[0].mxu0
    %v3732 = vadd.f32 %v2152, %v3731
    %v3733 = vpop.f32.mrb[0].mxu0
    %v3734 = vadd.f32 %v2156, %v3733
    %v3735 = vpop.f32.mrb[0].mxu0
    %v3736 = vpop.f32.mrb[0].mxu0
    %3737 = vdwg.mxu0
    %3738 = vmatprep.subr.bf16.mxu0 %v2500
    %3739 = vmatpush1.bf16.msra.mxu0 %v2499
    %3740 = vmatprep.subr.bf16.mxu0 %v2504
    %3741 = vmatpush1.bf16.msra.mxu0 %v2503
    %3742 = vmatprep.subr.bf16.mxu0 %v2508
    %3743 = vmatpush1.bf16.msra.mxu0 %v2507
    %3744 = vmatprep.subr.bf16.mxu0 %v2512
    %3745 = vmatpush1.bf16.msra.mxu0 %v2511
    %3746 = vmatprep.subr.bf16.mxu0 %v2516
    %3747 = vmatpush1.bf16.msra.mxu0 %v2515
    %3748 = vmatprep.subr.bf16.mxu0 %v2520
    %3749 = vmatpush1.bf16.msra.mxu0 %v2519
    %3750 = vmatprep.subr.bf16.mxu0 %v2524
    %3751 = vmatpush1.bf16.msra.mxu0 %v2523
    %3752 = vmatprep.subr.bf16.mxu0 %v2528
    %3753 = vmatpush1.bf16.msra.mxu0 %v2527
    %3754 = vmatprep.subr.bf16.mxu0 0
    %3755 = vmatpush1.bf16.msra.mxu0 0
    %3756 = vmatprep.subr.bf16.mxu0 0
    %3757 = vmatpush1.bf16.msra.mxu0 0
    %3758 = vmatprep.subr.bf16.mxu0 0
    %3759 = vmatpush1.bf16.msra.mxu0 0
    %3760 = vmatprep.subr.bf16.mxu0 0
    %3761 = vmatpush1.bf16.msra.mxu0 0
    %3762 = vmatprep.subr.bf16.mxu0 0
    %3763 = vmatpush1.bf16.msra.mxu0 0
    %3764 = vmatprep.subr.bf16.mxu0 0
    %3765 = vmatpush1.bf16.msra.mxu0 0
    %3766 = vmatprep.subr.bf16.mxu0 0
    %3767 = vmatpush1.bf16.msra.mxu0 0
    %3768 = vmatprep.subr.bf16.mxu0 0
    %3769 = vmatpush1.bf16.msra.mxu0 0
    %3770 = vmatprep.mubr.bf16.mxu0 0
    %3771 = vmatmul.mubr.bf16.gmra.mrb[0].mxu0 %v3652
    %v3772 = vpop.f32.mrb[0].mxu0
    %v3773 = vadd.f32 0.0, %v3772
    %v3774 = vpop.f32.mrb[0].mxu0
    %v3775 = vadd.f32 0.0, %v3774
    %v3776 = vpop.f32.mrb[0].mxu0
    %v3777 = vpop.f32.mrb[0].mxu0
    %3778 = vdwg.mxu0
    %3779 = vmatprep.subr.bf16.mxu0 %v2502
    %3780 = vmatpush1.bf16.msra.mxu0 %v2501
    %3781 = vmatprep.subr.bf16.mxu0 %v2506
    %3782 = vmatpush1.bf16.msra.mxu0 %v2505
    %3783 = vmatprep.subr.bf16.mxu0 %v2510
    %3784 = vmatpush1.bf16.msra.mxu0 %v2509
    %3785 = vmatprep.subr.bf16.mxu0 %v2514
    %3786 = vmatpush1.bf16.msra.mxu0 %v2513
    %3787 = vmatprep.subr.bf16.mxu0 %v2518
    %3788 = vmatpush1.bf16.msra.mxu0 %v2517
    %3789 = vmatprep.subr.bf16.mxu0 %v2522
    %3790 = vmatpush1.bf16.msra.mxu0 %v2521
    %3791 = vmatprep.subr.bf16.mxu0 %v2526
    %3792 = vmatpush1.bf16.msra.mxu0 %v2525
    %3793 = vmatprep.subr.bf16.mxu0 %v2530
    %3794 = vmatpush1.bf16.msra.mxu0 %v2529
    %3795 = vmatprep.subr.bf16.mxu0 0
    %3796 = vmatpush1.bf16.msra.mxu0 0
    %3797 = vmatprep.subr.bf16.mxu0 0
    %3798 = vmatpush1.bf16.msra.mxu0 0
    %3799 = vmatprep.subr.bf16.mxu0 0
    %3800 = vmatpush1.bf16.msra.mxu0 0
    %3801 = vmatprep.subr.bf16.mxu0 0
    %3802 = vmatpush1.bf16.msra.mxu0 0
    %3803 = vmatprep.subr.bf16.mxu0 0
    %3804 = vmatpush1.bf16.msra.mxu0 0
    %3805 = vmatprep.subr.bf16.mxu0 0
    %3806 = vmatpush1.bf16.msra.mxu0 0
    %3807 = vmatprep.subr.bf16.mxu0 0
    %3808 = vmatpush1.bf16.msra.mxu0 0
    %3809 = vmatprep.subr.bf16.mxu0 0
    %3810 = vmatpush1.bf16.msra.mxu0 0
    %3811 = vmatprep.mubr.bf16.mxu0 0
    %3812 = vmatmul.mubr.bf16.gmra.mrb[0].mxu0 %v3652
    %v3813 = vpop.f32.mrb[0].mxu0
    %v3814 = vadd.f32 0.0, %v3813
    %v3815 = vpop.f32.mrb[0].mxu0
    %v3816 = vadd.f32 0.0, %v3815
    %v3817 = vpop.f32.mrb[0].mxu0
    %v3818 = vpop.f32.mrb[0].mxu0
    %3819 = vdwg.mxu0
    %v3820 = vadd.f32 %v3691, %v3773
    %v3821 = vadd.f32 %v3693, %v3775
    %v3822 = vadd.f32 %v3732, %v3814
    %v3823 = vadd.f32 %v3734, %v3816
    %v3824 = vxor.u32 %v3820, 2147483648
    %v3825 = vmul.f32 %v3824, 1.442695
    %v3826 = vpow.pop %v3825
    %v3827 = vadd.f32 %v3826, 1.0
    %v3828 = vrcp.pop %v3827
    %v3829 = vmul.f32 1.0, %v3828
    %v3830 = vxor.u32 %v3821, 2147483648
    %v3831 = vmul.f32 %v3830, 1.442695
    %v3832 = vpow.pop %v3831
    %v3833 = vadd.f32 %v3832, 1.0
    %v3834 = vrcp.pop %v3833
    %v3835 = vmul.f32 1.0, %v3834
    %v3836 = vtanh.pop %v3822
    %v3837 = vxor.u32 %v3823, 2147483648
    %v3838 = vmul.f32 %v3837, 1.442695
    %v3839 = vpow.pop %v3838
    %v3840 = vadd.f32 %v3839, 1.0
    %v3841 = vrcp.pop %v3840
    %v3842 = vmul.f32 1.0, %v3841
    %v3843 = vmul.f32 %v3835, %v3649
    %v3844 = vmul.f32 %v3829, %v3836
    %v3845 = vadd.f32 %v3843, %v3844
    %v3846 = vtanh.pop %v3845
    %v3847 = vmul.f32 %v3842, %v3846
    %v3848 = vpack.c.bf16 %v3847, %v3847
    %s3849 = scalar_lea.vmem [#allocation3], 24
    %3850 = vst [vmem:[%s3849] sm:$0xf] %v3848
    %v3851 = vld [vmem:[%s2069] sm:$0xf]
    %3852 = vmatprep.subr.bf16.mxu0 %v2258
    %3853 = vmatpush1.bf16.msra.mxu0 %v2257
    %3854 = vmatprep.subr.bf16.mxu0 %v2262
    %3855 = vmatpush1.bf16.msra.mxu0 %v2261
    %3856 = vmatprep.subr.bf16.mxu0 %v2266
    %3857 = vmatpush1.bf16.msra.mxu0 %v2265
    %3858 = vmatprep.subr.bf16.mxu0 %v2270
    %3859 = vmatpush1.bf16.msra.mxu0 %v2269
    %3860 = vmatprep.subr.bf16.mxu0 %v2274
    %3861 = vmatpush1.bf16.msra.mxu0 %v2273
    %3862 = vmatprep.subr.bf16.mxu0 %v2278
    %3863 = vmatpush1.bf16.msra.mxu0 %v2277
    %3864 = vmatprep.subr.bf16.mxu0 %v2282
    %3865 = vmatpush1.bf16.msra.mxu0 %v2281
    %3866 = vmatprep.subr.bf16.mxu0 %v2286
    %3867 = vmatpush1.bf16.msra.mxu0 %v2285
    %3868 = vmatprep.subr.bf16.mxu0 0
    %3869 = vmatpush1.bf16.msra.mxu0 0
    %3870 = vmatprep.subr.bf16.mxu0 0
    %3871 = vmatpush1.bf16.msra.mxu0 0
    %3872 = vmatprep.subr.bf16.mxu0 0
    %3873 = vmatpush1.bf16.msra.mxu0 0
    %3874 = vmatprep.subr.bf16.mxu0 0
    %3875 = vmatpush1.bf16.msra.mxu0 0
    %3876 = vmatprep.subr.bf16.mxu0 0
    %3877 = vmatpush1.bf16.msra.mxu0 0
    %3878 = vmatprep.subr.bf16.mxu0 0
    %3879 = vmatpush1.bf16.msra.mxu0 0
    %3880 = vmatprep.subr.bf16.mxu0 0
    %3881 = vmatpush1.bf16.msra.mxu0 0
    %3882 = vmatprep.subr.bf16.mxu0 0
    %3883 = vmatpush1.bf16.msra.mxu0 0
    %3884 = vmatprep.mubr.bf16.mxu0 0
    %3885 = vmatmul.mubr.bf16.gmra.mrb[0].mxu0 %v3851
    %v3886 = vpop.f32.mrb[0].mxu0
    %v3887 = vadd.f32 %v2144, %v3886
    %v3888 = vpop.f32.mrb[0].mxu0
    %v3889 = vadd.f32 %v2148, %v3888
    %v3890 = vpop.f32.mrb[0].mxu0
    %v3891 = vpop.f32.mrb[0].mxu0
    %3892 = vdwg.mxu0
    %3893 = vmatprep.subr.bf16.mxu0 %v2260
    %3894 = vmatpush1.bf16.msra.mxu0 %v2259
    %3895 = vmatprep.subr.bf16.mxu0 %v2264
    %3896 = vmatpush1.bf16.msra.mxu0 %v2263
    %3897 = vmatprep.subr.bf16.mxu0 %v2268
    %3898 = vmatpush1.bf16.msra.mxu0 %v2267
    %3899 = vmatprep.subr.bf16.mxu0 %v2272
    %3900 = vmatpush1.bf16.msra.mxu0 %v2271
    %3901 = vmatprep.subr.bf16.mxu0 %v2276
    %3902 = vmatpush1.bf16.msra.mxu0 %v2275
    %3903 = vmatprep.subr.bf16.mxu0 %v2280
    %3904 = vmatpush1.bf16.msra.mxu0 %v2279
    %3905 = vmatprep.subr.bf16.mxu0 %v2284
    %3906 = vmatpush1.bf16.msra.mxu0 %v2283
    %3907 = vmatprep.subr.bf16.mxu0 %v2288
    %3908 = vmatpush1.bf16.msra.mxu0 %v2287
    %3909 = vmatprep.subr.bf16.mxu0 0
    %3910 = vmatpush1.bf16.msra.mxu0 0
    %3911 = vmatprep.subr.bf16.mxu0 0
    %3912 = vmatpush1.bf16.msra.mxu0 0
    %3913 = vmatprep.subr.bf16.mxu0 0
    %3914 = vmatpush1.bf16.msra.mxu0 0
    %3915 = vmatprep.subr.bf16.mxu0 0
    %3916 = vmatpush1.bf16.msra.mxu0 0
    %3917 = vmatprep.subr.bf16.mxu0 0
    %3918 = vmatpush1.bf16.msra.mxu0 0
    %3919 = vmatprep.subr.bf16.mxu0 0
    %3920 = vmatpush1.bf16.msra.mxu0 0
    %3921 = vmatprep.subr.bf16.mxu0 0
    %3922 = vmatpush1.bf16.msra.mxu0 0
    %3923 = vmatprep.subr.bf16.mxu0 0
    %3924 = vmatpush1.bf16.msra.mxu0 0
    %3925 = vmatprep.mubr.bf16.mxu0 0
    %3926 = vmatmul.mubr.bf16.gmra.mrb[0].mxu0 %v3851
    %v3927 = vpop.f32.mrb[0].mxu0
    %v3928 = vadd.f32 %v2152, %v3927
    %v3929 = vpop.f32.mrb[0].mxu0
    %v3930 = vadd.f32 %v2156, %v3929
    %v3931 = vpop.f32.mrb[0].mxu0
    %v3932 = vpop.f32.mrb[0].mxu0
    %3933 = vdwg.mxu0
    %3934 = vmatprep.subr.bf16.mxu0 %v2500
    %3935 = vmatpush1.bf16.msra.mxu0 %v2499
    %3936 = vmatprep.subr.bf16.mxu0 %v2504
    %3937 = vmatpush1.bf16.msra.mxu0 %v2503
    %3938 = vmatprep.subr.bf16.mxu0 %v2508
    %3939 = vmatpush1.bf16.msra.mxu0 %v2507
    %3940 = vmatprep.subr.bf16.mxu0 %v2512
    %3941 = vmatpush1.bf16.msra.mxu0 %v2511
    %3942 = vmatprep.subr.bf16.mxu0 %v2516
    %3943 = vmatpush1.bf16.msra.mxu0 %v2515
    %3944 = vmatprep.subr.bf16.mxu0 %v2520
    %3945 = vmatpush1.bf16.msra.mxu0 %v2519
    %3946 = vmatprep.subr.bf16.mxu0 %v2524
    %3947 = vmatpush1.bf16.msra.mxu0 %v2523
    %3948 = vmatprep.subr.bf16.mxu0 %v2528
    %3949 = vmatpush1.bf16.msra.mxu0 %v2527
    %3950 = vmatprep.subr.bf16.mxu0 0
    %3951 = vmatpush1.bf16.msra.mxu0 0
    %3952 = vmatprep.subr.bf16.mxu0 0
    %3953 = vmatpush1.bf16.msra.mxu0 0
    %3954 = vmatprep.subr.bf16.mxu0 0
    %3955 = vmatpush1.bf16.msra.mxu0 0
    %3956 = vmatprep.subr.bf16.mxu0 0
    %3957 = vmatpush1.bf16.msra.mxu0 0
    %3958 = vmatprep.subr.bf16.mxu0 0
    %3959 = vmatpush1.bf16.msra.mxu0 0
    %3960 = vmatprep.subr.bf16.mxu0 0
    %3961 = vmatpush1.bf16.msra.mxu0 0
    %3962 = vmatprep.subr.bf16.mxu0 0
    %3963 = vmatpush1.bf16.msra.mxu0 0
    %3964 = vmatprep.subr.bf16.mxu0 0
    %3965 = vmatpush1.bf16.msra.mxu0 0
    %3966 = vmatprep.mubr.bf16.mxu0 0
    %3967 = vmatmul.mubr.bf16.gmra.mrb[0].mxu0 %v3848
    %v3968 = vpop.f32.mrb[0].mxu0
    %v3969 = vadd.f32 0.0, %v3968
    %v3970 = vpop.f32.mrb[0].mxu0
    %v3971 = vadd.f32 0.0, %v3970
    %v3972 = vpop.f32.mrb[0].mxu0
    %v3973 = vpop.f32.mrb[0].mxu0
    %3974 = vdwg.mxu0
    %3975 = vmatprep.subr.bf16.mxu0 %v2502
    %3976 = vmatpush1.bf16.msra.mxu0 %v2501
    %3977 = vmatprep.subr.bf16.mxu0 %v2506
    %3978 = vmatpush1.bf16.msra.mxu0 %v2505
    %3979 = vmatprep.subr.bf16.mxu0 %v2510
    %3980 = vmatpush1.bf16.msra.mxu0 %v2509
    %3981 = vmatprep.subr.bf16.mxu0 %v2514
    %3982 = vmatpush1.bf16.msra.mxu0 %v2513
    %3983 = vmatprep.subr.bf16.mxu0 %v2518
    %3984 = vmatpush1.bf16.msra.mxu0 %v2517
    %3985 = vmatprep.subr.bf16.mxu0 %v2522
    %3986 = vmatpush1.bf16.msra.mxu0 %v2521
    %3987 = vmatprep.subr.bf16.mxu0 %v2526
    %3988 = vmatpush1.bf16.msra.mxu0 %v2525
    %3989 = vmatprep.subr.bf16.mxu0 %v2530
    %3990 = vmatpush1.bf16.msra.mxu0 %v2529
    %3991 = vmatprep.subr.bf16.mxu0 0
    %3992 = vmatpush1.bf16.msra.mxu0 0
    %3993 = vmatprep.subr.bf16.mxu0 0
    %3994 = vmatpush1.bf16.msra.mxu0 0
    %3995 = vmatprep.subr.bf16.mxu0 0
    %3996 = vmatpush1.bf16.msra.mxu0 0
    %3997 = vmatprep.subr.bf16.mxu0 0
    %3998 = vmatpush1.bf16.msra.mxu0 0
    %3999 = vmatprep.subr.bf16.mxu0 0
    %4000 = vmatpush1.bf16.msra.mxu0 0
    %4001 = vmatprep.subr.bf16.mxu0 0
    %4002 = vmatpush1.bf16.msra.mxu0 0
    %4003 = vmatprep.subr.bf16.mxu0 0
    %4004 = vmatpush1.bf16.msra.mxu0 0
    %4005 = vmatprep.subr.bf16.mxu0 0
    %4006 = vmatpush1.bf16.msra.mxu0 0
    %4007 = vmatprep.mubr.bf16.mxu0 0
    %4008 = vmatmul.mubr.bf16.gmra.mrb[0].mxu0 %v3848
    %v4009 = vpop.f32.mrb[0].mxu0
    %v4010 = vadd.f32 0.0, %v4009
    %v4011 = vpop.f32.mrb[0].mxu0
    %v4012 = vadd.f32 0.0, %v4011
    %v4013 = vpop.f32.mrb[0].mxu0
    %v4014 = vpop.f32.mrb[0].mxu0
    %4015 = vdwg.mxu0
    %v4016 = vadd.f32 %v3887, %v3969
    %v4017 = vadd.f32 %v3889, %v3971
    %v4018 = vadd.f32 %v3928, %v4010
    %v4019 = vadd.f32 %v3930, %v4012
    %v4020 = vxor.u32 %v4016, 2147483648
    %v4021 = vmul.f32 %v4020, 1.442695
    %v4022 = vpow.pop %v4021
    %v4023 = vadd.f32 %v4022, 1.0
    %v4024 = vrcp.pop %v4023
    %v4025 = vmul.f32 1.0, %v4024
    %v4026 = vxor.u32 %v4017, 2147483648
    %v4027 = vmul.f32 %v4026, 1.442695
    %v4028 = vpow.pop %v4027
    %v4029 = vadd.f32 %v4028, 1.0
    %v4030 = vrcp.pop %v4029
    %v4031 = vmul.f32 1.0, %v4030
    %v4032 = vtanh.pop %v4018
    %v4033 = vxor.u32 %v4019, 2147483648
    %v4034 = vmul.f32 %v4033, 1.442695
    %v4035 = vpow.pop %v4034
    %v4036 = vadd.f32 %v4035, 1.0
    %v4037 = vrcp.pop %v4036
    %v4038 = vmul.f32 1.0, %v4037
    %v4039 = vmul.f32 %v4031, %v3845
    %v4040 = vmul.f32 %v4025, %v4032
    %v4041 = vadd.f32 %v4039, %v4040
    %v4042 = vtanh.pop %v4041
    %v4043 = vmul.f32 %v4038, %v4042
    %v4044 = vpack.c.bf16 %v4043, %v4043
    %s4045 = scalar_lea.vmem [#allocation3], 28
    %4046 = vst [vmem:[%s4045] sm:$0xf] %v4044
    %v4047 = vunpack.c.l.bf16 %v4044
    %s4048 = scalar_lea.vmem %s10, 8
    %4049 = vst [vmem:[%s4048] sm:$0xff] %v4047
    %s4050 = scalar_lea.vmem %s11, 8
    %4051 = vst [vmem:[%s4050] sm:$0xff] %v4041
    %v4052 = vld [vmem:[%s7] sm:$0xf]
    %v4053 = vld [vmem:[%s7 + $0x4] sm:$0xf]
    %v4054 = vld [vmem:[%s7 + $0x8] sm:$0xf]
    %v4055 = vld [vmem:[%s7 + $0xc] sm:$0xf]
    %v4056 = vld [vmem:[%s7 + $0x10] sm:$0xf]
    %v4057 = vld [vmem:[%s7 + $0x14] sm:$0xf]
    %v4058 = vld [vmem:[%s7 + $0x18] sm:$0xf]
    %v4059 = vld [vmem:[%s7 + $0x1c] sm:$0xf]
    %v4060 = vld [vmem:[%s7 + $0x20] sm:$0xf]
    %v4061 = vld [vmem:[%s7 + $0x24] sm:$0xf]
    %v4062 = vld [vmem:[%s7 + $0x28] sm:$0xf]
    %v4063 = vld [vmem:[%s7 + $0x2c] sm:$0xf]
    %v4064 = vld [vmem:[%s7 + $0x30] sm:$0xf]
    %v4065 = vld [vmem:[%s7 + $0x34] sm:$0xf]
    %v4066 = vld [vmem:[%s7 + $0x38] sm:$0xf]
    %v4067 = vld [vmem:[%s7 + $0x3c] sm:$0xf]
    %v4068 = vld [vmem:[%s8] sm:$0x1]
    %v4070 = vlaneseq
    %v4071 = vshrl.u32 %v4070, 7
    %v4072 = vsub.s32 0, %v4071
    %v4073 = vrot.slane %v4068, %v4072
    %v4091 = vunpack.c.l.b16 %v4052
    %v4092 = vunpack.c.l.b16 %v4053
    %v4093 = vunpack.c.l.b16 %v4054
    %v4094 = vunpack.c.l.b16 %v4055
    %v4095 = vunpack.c.l.b16 %v4056
    %v4096 = vunpack.c.l.b16 %v4057
    %v4097 = vunpack.c.l.b16 %v4058
    %v4098 = vunpack.c.l.b16 %v4059
    %v4099 = vunpack.c.l.b16 %v4060
    %v4100 = vunpack.c.l.b16 %v4061
    %v4101 = vunpack.c.l.b16 %v4062
    %v4102 = vunpack.c.l.b16 %v4063
    %v4103 = vunpack.c.l.b16 %v4064
    %v4104 = vunpack.c.l.b16 %v4065
    %v4105 = vunpack.c.l.b16 %v4066
    %v4106 = vunpack.c.l.b16 %v4067
    %v4107 = vpack.c.b16 %v4092, %v4091
    %v4108 = vpack.c.b16 %v4094, %v4093
    %v4109 = vpack.c.b16 %v4096, %v4095
    %v4110 = vpack.c.b16 %v4098, %v4097
    %v4111 = vpack.c.b16 %v4100, %v4099
    %v4112 = vpack.c.b16 %v4102, %v4101
    %v4113 = vpack.c.b16 %v4104, %v4103
    %v4114 = vpack.c.b16 %v4106, %v4105
    %4123 = vmatprep.subr.bf16.mxu0 0
    %4124 = vmatpush1.bf16.msra.mxu0 %v4107
    %4125 = vmatprep.subr.bf16.mxu0 0
    %4126 = vmatpush1.bf16.msra.mxu0 %v4108
    %4127 = vmatprep.subr.bf16.mxu0 0
    %4128 = vmatpush1.bf16.msra.mxu0 %v4109
    %4129 = vmatprep.subr.bf16.mxu0 0
    %4130 = vmatpush1.bf16.msra.mxu0 %v4110
    %4131 = vmatprep.subr.bf16.mxu0 0
    %4132 = vmatpush1.bf16.msra.mxu0 %v4111
    %4133 = vmatprep.subr.bf16.mxu0 0
    %4134 = vmatpush1.bf16.msra.mxu0 %v4112
    %4135 = vmatprep.subr.bf16.mxu0 0
    %4136 = vmatpush1.bf16.msra.mxu0 %v4113
    %4137 = vmatprep.subr.bf16.mxu0 0
    %4138 = vmatpush1.bf16.msra.mxu0 %v4114
    %4139 = vmatprep.subr.bf16.mxu0 0
    %4140 = vmatpush1.bf16.msra.mxu0 0
    %4141 = vmatprep.subr.bf16.mxu0 0
    %4142 = vmatpush1.bf16.msra.mxu0 0
    %4143 = vmatprep.subr.bf16.mxu0 0
    %4144 = vmatpush1.bf16.msra.mxu0 0
    %4145 = vmatprep.subr.bf16.mxu0 0
    %4146 = vmatpush1.bf16.msra.mxu0 0
    %4147 = vmatprep.subr.bf16.mxu0 0
    %4148 = vmatpush1.bf16.msra.mxu0 0
    %4149 = vmatprep.subr.bf16.mxu0 0
    %4150 = vmatpush1.bf16.msra.mxu0 0
    %4151 = vmatprep.subr.bf16.mxu0 0
    %4152 = vmatpush1.bf16.msra.mxu0 0
    %4153 = vmatprep.subr.bf16.mxu0 0
    %4154 = vmatpush1.bf16.msra.mxu0 0
    %4155 = vmatprep.mubr.bf16.mxu0 0
    %4156 = vmatmul.mubr.bf16.gmra.mrb[0].mxu0 %v4044
    %v4157 = vpop.f32.mrb[0].mxu0
    %v4158 = vadd.f32 %v4073, %v4157
    %v4159 = vpop.f32.mrb[0].mxu0
    %v4160 = vpop.f32.mrb[0].mxu0
    %v4161 = vpop.f32.mrb[0].mxu0
    %4162 = vdwg.mxu0
    %4163 = vmax.xlane.f32.xlu0 %v4158
    %v4164 = vpop.xlane.xlu0 %4163
    %v4165 = vsub.f32 %v4158, %v4164
    %v4166 = vmul.f32 %v4165, 1.442695
    %v4167 = vpow.pop %v4166
    %4168 = vadd.xlane.f32.xlu0 %v4167
    %v4169 = vpop.xlane.xlu0 %4168
    %v4170 = vlog2.pop %v4169
    %v4171 = vmul.f32 %v4170, 0.6931472
    %v4172 = vsub.f32 %v4165, %v4171
    %4173 = vst [vmem:[%s9] sm:$0xff] %v4172
    // Predicated region
    $region54: #{rnn_forward.1} parent=1 // pred_check
      _
    $region55: #{rnn_forward.1} parent=1 // pred_check_branch
      %4175 = sbr.rel (0) target = $region57
    $region56: #{rnn_forward.1} parent=1 // pred_region
      _
    $region57: #{rnn_forward.1} parent=1 // pred_fallthru
      _
    // Predicated region
    $region58: #{rnn_forward.1} parent=1 // pred_check
      _
    $region59: #{rnn_forward.1} parent=1 // pred_check_branch
      %4177 = sbr.rel (0) target = $region61
    $region60: #{rnn_forward.1} parent=1 // pred_region
      _
    $region61: #{rnn_forward.1} parent=1 // pred_fallthru
      _
    // Predicated region
    $region62: #{rnn_forward.1} parent=1 // pred_check
      _
    $region63: #{rnn_forward.1} parent=1 // pred_check_branch
      %4179 = sbr.rel (0) target = $region65
    $region64: #{rnn_forward.1} parent=1 // pred_region
      _
    $region65: #{rnn_forward.1} parent=1 // pred_fallthru
      _
    // Predicated region
    $region66: #{rnn_forward.1} parent=1 // pred_check
      _
    $region67: #{rnn_forward.1} parent=1 // pred_check_branch
      %4181 = sbr.rel (0) target = $region69
    $region68: #{rnn_forward.1} parent=1 // pred_region
      _
    $region69: #{rnn_forward.1} parent=1 // pred_fallthru
      _
    // Predicated region
    $region70: #{rnn_forward.1} parent=1 // pred_check
      _
    $region71: #{rnn_forward.1} parent=1 // pred_check_branch
      %4183 = sbr.rel (0) target = $region73
    $region72: #{rnn_forward.1} parent=1 // pred_region
      _
    $region73: #{rnn_forward.1} parent=1 // pred_fallthru
      _
    // Predicated region
    $region74: #{rnn_forward.1} parent=1 // pred_check
      _
    $region75: #{rnn_forward.1} parent=1 // pred_check_branch
      %4185 = sbr.rel (0) target = $region77
    $region76: #{rnn_forward.1} parent=1 // pred_region
      _
    $region77: #{rnn_forward.1} parent=1 // pred_fallthru
      _
    %4186 = vsyncpa [#allocation5], 1
    %4187 = vsyncpa [#allocation7], 1
    %4188 = vsyncpa [#allocation10], 1

</llo_original>
